<compile_context>
chip_gen: v6e
topology: v6e:2x2x1
jax: 0.10.0
libtpu: 0.0.40
codegen_flags: <defaults>
</compile_context>

<pallas_src>
import numpy as np
import jax
import jax.numpy as jnp
from jax import lax
from jax.experimental import pallas as pl
from jax.experimental.pallas import tpu as pltpu

# ---- PndModel default hyper-parameters (n_rnn=1, nheads=4, d_m=32, t_dim=36, kernel=8)
N_RNN = 1          # encoder layers == decoder layers
HEADS = 4          # encoder attention heads (t_dim / heads = 9)
D_M = 32           # dim_feedforward (encoder and decoder)
T_DIM = 36         # conv out_channels == encoder d_model
KERNEL = 8         # conv1d kernel size
IN_CH = 4          # conv in_channels (fixed to 4 in the module)
D_DEC = 4          # decoder d_model (fixed to 4 in the module)
HEADS_DEC = 4      # decoder heads (head_dim = 1)
LN_EPS = 1e-5

# Small example shapes (module's seq_len=528 shrunk; Lo and T kept 8-aligned).
BATCH = 2
L_IN = 23          # encoder input length  -> L_out = 16
T_DEC = 8          # decoder target length

# ---- packed-slab layout constants
HP = 128                       # per-head lane padding (lane-aligned slices)
QW = HEADS * HP                # 512: padded width of each of Q / K / V
ENC_COLS = 3 * QW + D_M        # 1568: wqkv_pad ++ w1
ENC_ROWS = 48                  # rows 0:36 matrices, rows 40:48 vectors
W36_STRIDE = QW + D_M          # 544: wo_pad (512 rows) ++ w2 (32 rows) per layer
W36_MISC_ROWS = 116            # conv / classifier block appended after the layers

VMEM_SPEC = pl.BlockSpec(memory_space=pltpu.MemorySpace.VMEM)

try:
    _DEVICE_KIND = jax.devices()[0].device_kind.lower()
except Exception:  # pragma: no cover
    _DEVICE_KIND = ""
# Batch grid only pays off with 2 TensorCores (v7x); on v5e/v6e it is pure
# per-step overhead, so stay grid-less there.
_USE_BATCH_GRID = ("v7" in _DEVICE_KIND) or ("tpu7" in _DEVICE_KIND)


# ------------------------------ fused kernel --------------------------------
def pnd_kernel(xc_ref, nxt_ref, enc_ref, w36_ref, dec_ref, out_cls_ref, out_dec_ref):
    f32 = jnp.float32
    B = xc_ref.shape[0]            # 1 in grid mode, full batch otherwise
    Lo = xc_ref.shape[1]
    KC = xc_ref.shape[2]           # KERNEL * IN_CH
    T = nxt_ref.shape[1]
    Dd = nxt_ref.shape[2]
    D = T_DIM
    Dm = D_M

    def layernorm(v, g, b):
        mu = jnp.mean(v, axis=-1, keepdims=True)
        c = v - mu
        var = jnp.mean(c * c, axis=-1, keepdims=True)
        return c * lax.rsqrt(var + LN_EPS) * g + b

    def softmax_last(s):
        # approx reciprocal: ~1e-3 rel err vs exact softmax; use exact divide
        # if bit-level parity with PyTorch is required.
        s = s - jnp.max(s, axis=-1, keepdims=True)
        e = jnp.exp(s)
        return e * pl.reciprocal(jnp.sum(e, axis=-1, keepdims=True), approx=True)

    def dec_attention(q, k, v, Sq, Sk):
        # Decoder heads have head_dim == 1: scores are outer products.
        # Single broadcasted softmax chain over (B, Sq, Sk, H) — no per-(b,h)
        # unrolled loops.
        q3 = q.reshape(B, Sq, Dd)
        k3 = k.reshape(B, Sk, Dd)
        v3 = v.reshape(B, Sk, Dd)
        s = q3[:, :, None, :] * k3[:, None, :, :]            # (B, Sq, Sk, H)
        s = s - jnp.max(s, axis=2, keepdims=True)
        e = jnp.exp(s)
        p = e * pl.reciprocal(jnp.sum(e, axis=2, keepdims=True), approx=True)
        ctx = jnp.sum(p * v3[:, None, :, :], axis=2)          # (B, Sq, H)
        return ctx.reshape(B * Sq, Dd)

    # ----------------- Conv1d (im2col done in the wrapper) -----------------
    mrow = N_RNN * W36_STRIDE
    conv_w = w36_ref[mrow:mrow + KC, :]                       # (32, 36)
    conv_b = w36_ref[mrow + 32:mrow + 33, :]                  # (1, 36)
    cols = xc_ref[...].reshape(B * Lo, KC)
    h_flat = jnp.dot(cols, conv_w, preferred_element_type=f32) + conv_b   # (B*Lo, 36)

    # ----------------- Transformer encoder (post-norm) -----------------
    # QKV packed with 128 lanes per head (zeros beyond head_dim=9); the
    # attention scale is folded into the Q weights/bias at pack time.
    for l in range(N_RNN):
        base = l * W36_STRIDE
        wqkv = enc_ref[l, 0:D, 0:3 * QW]                      # (36, 1536)
        w1 = enc_ref[l, 0:D, 3 * QW:3 * QW + Dm]              # (36, 32)
        wo = w36_ref[base:base + QW, :]                       # (512, 36)  head-padded rows
        w2 = w36_ref[base + QW:base + W36_STRIDE, :]          # (32, 36)
        vec = enc_ref[l, 40:48, :]                            # (8, 1568)  packed vectors
        bqkv = vec[0:1, 0:3 * QW]
        bo = vec[1:2, 0:D]
        b1 = vec[2:3, 0:Dm]
        b2 = vec[3:4, 0:D]
        g1, be1 = vec[4:5, 0:D], vec[5:6, 0:D]
        g2, be2 = vec[6:7, 0:D], vec[7:8, 0:D]

        qkv = (jnp.dot(h_flat, wqkv, preferred_element_type=f32) + bqkv
               ).reshape(B, Lo, 3 * QW)
        ctx_heads = []
        for h in range(HEADS):                                 # all slices 128-aligned
            qh = qkv[:, :, h * HP:(h + 1) * HP]
            kh = qkv[:, :, QW + h * HP:QW + (h + 1) * HP]
            vh = qkv[:, :, 2 * QW + h * HP:2 * QW + (h + 1) * HP]
            s = jnp.einsum('bqd,bkd->bqk', qh, kh, preferred_element_type=f32)
            p = softmax_last(s)
            ctx_heads.append(jnp.einsum('bqk,bkd->bqd', p, vh,
                                        preferred_element_type=f32))
        ctx = jnp.concatenate(ctx_heads, axis=-1).reshape(B * Lo, QW)
        attn = jnp.dot(ctx, wo, preferred_element_type=f32) + bo
        h_flat = layernorm(h_flat + attn, g1, be1)

        ff = jnp.dot(
            jnp.maximum(jnp.dot(h_flat, w1, preferred_element_type=f32) + b1, 0.0),
            w2, preferred_element_type=f32) + b2
        h_flat = layernorm(h_flat + ff, g2, be2)

    # ----------------- classifier heads -----------------
    bc2 = w36_ref[mrow + 33:mrow + 34, 0:2]
    bc4 = w36_ref[mrow + 34:mrow + 35, 0:4]
    wc2 = w36_ref[mrow + 40:mrow + 76, 0:2]                    # (36, 2)
    wc4 = w36_ref[mrow + 80:mrow + 116, 0:4]                   # (36, 4)
    mean_rows = jnp.mean(h_flat.reshape(B, Lo, D), axis=1)     # (B, 36) == encoding.mean(0)
    out_cls_ref[...] = (jnp.dot(mean_rows, wc2, preferred_element_type=f32) + bc2
                        ).reshape(out_cls_ref.shape)
    mem_flat = jnp.dot(h_flat, wc4, preferred_element_type=f32) + bc4     # (B*Lo, 4)

    # ----------------- Transformer decoder (post-norm) -----------------
    t_flat = nxt_ref[...].reshape(B * T, Dd)
    for l in range(N_RNN):
        wblk = dec_ref[l, 0:4, :]                              # (4, 64)  all 4-row weights
        w2d = dec_ref[l, 8:40, 0:4]                            # (32, 4)
        vd = dec_ref[l, 40:56, :]                              # (16, 64) packed vectors

        # self-attention (scale folded at pack time; separate tiny projections
        # so no unaligned output slicing is needed)
        q = jnp.dot(t_flat, wblk[:, 0:4], preferred_element_type=f32) + vd[0:1, 0:4]
        k = jnp.dot(t_flat, wblk[:, 4:8], preferred_element_type=f32) + vd[1:2, 0:4]
        v = jnp.dot(t_flat, wblk[:, 8:12], preferred_element_type=f32) + vd[2:3, 0:4]
        sa = jnp.dot(dec_attention(q, k, v, T, T), wblk[:, 12:16],
                     preferred_element_type=f32) + vd[3:4, 0:4]
        t_flat = layernorm(t_flat + sa, vd[10:11, 0:4], vd[11:12, 0:4])

        # cross-attention on classifiers[1](encoding)
        qc = jnp.dot(t_flat, wblk[:, 16:20], preferred_element_type=f32) + vd[4:5, 0:4]
        kc = jnp.dot(mem_flat, wblk[:, 20:24], preferred_element_type=f32) + vd[5:6, 0:4]
        vc = jnp.dot(mem_flat, wblk[:, 24:28], preferred_element_type=f32) + vd[6:7, 0:4]
        ca = jnp.dot(dec_attention(qc, kc, vc, T, Lo), wblk[:, 28:32],
                     preferred_element_type=f32) + vd[7:8, 0:4]
        t_flat = layernorm(t_flat + ca, vd[12:13, 0:4], vd[13:14, 0:4])

        # feed-forward
        ff = jnp.dot(
            jnp.maximum(jnp.dot(t_flat, wblk[:, 32:64], preferred_element_type=f32)
                        + vd[8:9, 0:Dm], 0.0),
            w2d, preferred_element_type=f32) + vd[9:10, 0:4]
        t_flat = layernorm(t_flat + ff, vd[14:15, 0:4], vd[15:16, 0:4])

    out_dec_ref[...] = t_flat.reshape(out_dec_ref.shape)


# ------------------------------ wrapper --------------------------------------
@jax.jit
def pnd_model_forward(x, nxt, packed):
    enc_slab, w36_slab, dec_slab = packed
    B, L, _ = x.shape
    Lo = L - KERNEL + 1
    T, Dd = nxt.shape[1], nxt.shape[2]

    # im2col on the XLA side: (B, Lo, K*Cin), k-major / channel-minor columns.
    cols = jnp.concatenate([x[:, k:k + Lo, :] for k in range(KERNEL)], axis=-1)
    KC = cols.shape[-1]

    out_shape = (jax.ShapeDtypeStruct((B, 1, 2), jnp.float32),
                 jax.ShapeDtypeStruct((B, T, Dd), jnp.float32))

    if _USE_BATCH_GRID and B > 1:
        # v7x: shard the fully batch-independent work across both TensorCores.
        # TODO(synk): at production seq_len=528 / larger B, budget VMEM
        # (64 MiB on v7x) with pltpu.CompilerParams(vmem_limit_bytes=...) or
        # tile attention over Lo as well.
        call = pl.pallas_call(
            pnd_kernel,
            out_shape=out_shape,
            grid=(B,),
            in_specs=[
                pl.BlockSpec((1, Lo, KC), lambda b: (b, 0, 0)),
                pl.BlockSpec((1, T, Dd), lambda b: (b, 0, 0)),
                pl.BlockSpec(enc_slab.shape, lambda b: (0, 0, 0)),
                pl.BlockSpec(w36_slab.shape, lambda b: (0, 0)),
                pl.BlockSpec(dec_slab.shape, lambda b: (0, 0, 0)),
            ],
            out_specs=(pl.BlockSpec((1, 1, 2), lambda b: (b, 0, 0)),
                       pl.BlockSpec((1, T, Dd), lambda b: (b, 0, 0))),
            compiler_params=pltpu.CompilerParams(
                dimension_semantics=("parallel",)),
        )
    else:
        # v5e / v6e: single invocation, everything resident in VMEM.
        call = pl.pallas_call(
            pnd_kernel,
            out_shape=out_shape,
            in_specs=[VMEM_SPEC] * 5,
            out_specs=(VMEM_SPEC, VMEM_SPEC),
        )

    out_cls, out_dec = call(cols, nxt, enc_slab, w36_slab, dec_slab)
    # decoder computed batch-major inside the kernel; present as (T, B, 4)
    return out_cls.reshape(B, 2), jnp.transpose(out_dec, (1, 0, 2))


# -------------------- deterministic structured parameters -------------------
def init_params(key):
    def dense(k, shape, scale):
        return jax.random.normal(k, shape, jnp.float32) * scale

    k_conv, k_cls, k_enc, k_dec = jax.random.split(key, 4)
    params = {}
    kc = jax.random.split(k_conv, 2)
    params["conv_w"] = dense(kc[0], (KERNEL * IN_CH, T_DIM), 1.0 / np.sqrt(KERNEL * IN_CH))
    params["conv_b"] = dense(kc[1], (1, T_DIM), 0.02)
    kl = jax.random.split(k_cls, 4)
    params["wc2"] = dense(kl[0], (T_DIM, 2), 1.0 / np.sqrt(T_DIM))
    params["bc2"] = dense(kl[1], (1, 2), 0.02)
    params["wc4"] = dense(kl[2], (T_DIM, 4), 1.0 / np.sqrt(T_DIM))
    params["bc4"] = dense(kl[3], (1, 4), 0.02)

    sd = 1.0 / np.sqrt(T_DIM)
    enc_layers = []
    for ek in jax.random.split(k_enc, N_RNN):
        lk = jax.random.split(ek, 12)
        enc_layers.append(dict(
            wq=dense(lk[0], (T_DIM, T_DIM), sd), bq=dense(lk[1], (1, T_DIM), 0.02),
            wk=dense(lk[2], (T_DIM, T_DIM), sd), bk=dense(lk[3], (1, T_DIM), 0.02),
            wv=dense(lk[4], (T_DIM, T_DIM), sd), bv=dense(lk[5], (1, T_DIM), 0.02),
            wo=dense(lk[6], (T_DIM, T_DIM), sd), bo=dense(lk[7], (1, T_DIM), 0.02),
            w1=dense(lk[8], (T_DIM, D_M), sd),   b1=dense(lk[9], (1, D_M), 0.02),
            w2=dense(lk[10], (D_M, T_DIM), 1.0 / np.sqrt(D_M)),
            b2=dense(lk[11], (1, T_DIM), 0.02),
            g1=jnp.ones((1, T_DIM), jnp.float32), be1=jnp.zeros((1, T_DIM), jnp.float32),
            g2=jnp.ones((1, T_DIM), jnp.float32), be2=jnp.zeros((1, T_DIM), jnp.float32)))
    params["enc_layers"] = enc_layers

    dd = D_DEC
    sdd = 1.0 / np.sqrt(dd)
    dec_layers = []
    for dk in jax.random.split(k_dec, N_RNN):
        lk = jax.random.split(dk, 20)
        dec_layers.append(dict(
            wq_s=dense(lk[0], (dd, dd), sdd), bq_s=dense(lk[1], (1, dd), 0.02),
            wk_s=dense(lk[2], (dd, dd), sdd), bk_s=dense(lk[3], (1, dd), 0.02),
            wv_s=dense(lk[4], (dd, dd), sdd), bv_s=dense(lk[5], (1, dd), 0.02),
            wo_s=dense(lk[6], (dd, dd), sdd), bo_s=dense(lk[7], (1, dd), 0.02),
            wq_c=dense(lk[8], (dd, dd), sdd), bq_c=dense(lk[9], (1, dd), 0.02),
            wk_c=dense(lk[10], (dd, dd), sdd), bk_c=dense(lk[11], (1, dd), 0.02),
            wv_c=dense(lk[12], (dd, dd), sdd), bv_c=dense(lk[13], (1, dd), 0.02),
            wo_c=dense(lk[14], (dd, dd), sdd), bo_c=dense(lk[15], (1, dd), 0.02),
            w1=dense(lk[16], (dd, D_M), sdd), b1=dense(lk[17], (1, D_M), 0.02),
            w2=dense(lk[18], (D_M, dd), 1.0 / np.sqrt(D_M)), b2=dense(lk[19], (1, dd), 0.02),
            g1=jnp.ones((1, dd), jnp.float32), be1=jnp.zeros((1, dd), jnp.float32),
            g2=jnp.ones((1, dd), jnp.float32), be2=jnp.zeros((1, dd), jnp.float32),
            g3=jnp.ones((1, dd), jnp.float32), be3=jnp.zeros((1, dd), jnp.float32)))
    params["dec_layers"] = dec_layers
    return params


# --------------------- pack parameters for the fused kernel -----------------
def _pad_heads_cols(w, scale=1.0):
    """(R, H*hd) -> (R, H*HP): head h moved to lane offset h*HP, zeros elsewhere."""
    w = np.asarray(w, np.float32) * scale
    hd = w.shape[1] // HEADS
    out = np.zeros((w.shape[0], HEADS * HP), np.float32)
    for h in range(HEADS):
        out[:, h * HP:h * HP + hd] = w[:, h * hd:(h + 1) * hd]
    return out


def _pad_heads_rows(w):
    """(H*hd, C) -> (H*HP, C): head h rows moved to sublane offset h*HP."""
    w = np.asarray(w, np.float32)
    hd = w.shape[0] // HEADS
    out = np.zeros((HEADS * HP, w.shape[1]), np.float32)
    for h in range(HEADS):
        out[h * HP:h * HP + hd, :] = w[h * hd:(h + 1) * hd, :]
    return out


def pack_params(params):
    enc_scale = 1.0 / float(np.sqrt(T_DIM // HEADS))
    dec_scale = 1.0 / float(np.sqrt(D_DEC // HEADS_DEC))      # == 1.0, folded anyway

    # ---- encoder in-proj slab: (N_RNN, 48, 1568) ----
    enc = np.zeros((N_RNN, ENC_ROWS, ENC_COLS), np.float32)
    for l, p in enumerate(params["enc_layers"]):
        enc[l, 0:T_DIM, 0:QW] = _pad_heads_cols(p["wq"], enc_scale)   # scale folded into Q
        enc[l, 0:T_DIM, QW:2 * QW] = _pad_heads_cols(p["wk"])
        enc[l, 0:T_DIM, 2 * QW:3 * QW] = _pad_heads_cols(p["wv"])
        enc[l, 0:T_DIM, 3 * QW:3 * QW + D_M] = np.asarray(p["w1"])
        enc[l, 40, 0:QW] = _pad_heads_cols(p["bq"], enc_scale)[0]
        enc[l, 40, QW:2 * QW] = _pad_heads_cols(p["bk"])[0]
        enc[l, 40, 2 * QW:3 * QW] = _pad_heads_cols(p["bv"])[0]
        enc[l, 41, 0:T_DIM] = np.asarray(p["bo"])[0]
        enc[l, 42, 0:D_M] = np.asarray(p["b1"])[0]
        enc[l, 43, 0:T_DIM] = np.asarray(p["b2"])[0]
        enc[l, 44, 0:T_DIM] = np.asarray(p["g1"])[0]
        enc[l, 45, 0:T_DIM] = np.asarray(p["be1"])[0]
        enc[l, 46, 0:T_DIM] = np.asarray(p["g2"])[0]
        enc[l, 47, 0:T_DIM] = np.asarray(p["be2"])[0]

    # ---- 36-column slab: wo_pad/w2 per layer + conv + classifier heads ----
    w36 = np.zeros((N_RNN * W36_STRIDE + W36_MISC_ROWS, T_DIM), np.float32)
    for l, p in enumerate(params["enc_layers"]):
        base = l * W36_STRIDE
        w36[base:base + QW, :] = _pad_heads_rows(p["wo"])
        w36[base + QW:base + W36_STRIDE, :] = np.asarray(p["w2"])
    m = N_RNN * W36_STRIDE
    # TODO(synk): a real PyTorch Conv1d checkpoint stores weight as (out, in, k);
    # permute/reorder to this (k-major, channel-minor rows) x (out_ch cols) layout
    # before packing (same for nn.MultiheadAttention in_proj weights, which are
    # stored transposed).
    w36[m:m + KERNEL * IN_CH, :] = np.asarray(params["conv_w"])
    w36[m + 32, :] = np.asarray(params["conv_b"])[0]
    w36[m + 33, 0:2] = np.asarray(params["bc2"])[0]
    w36[m + 34, 0:4] = np.asarray(params["bc4"])[0]
    w36[m + 40:m + 76, 0:2] = np.asarray(params["wc2"])
    w36[m + 80:m + 116, 0:4] = np.asarray(params["wc4"])

    # ---- dense decoder slab: (N_RNN, 56, 64) ----
    dec = np.zeros((N_RNN, 56, 64), np.float32)
    for l, p in enumerate(params["dec_layers"]):
        dec[l, 0:4, 0:4] = np.asarray(p["wq_s"]) * dec_scale
        dec[l, 0:4, 4:8] = np.asarray(p["wk_s"])
        dec[l, 0:4, 8:12] = np.asarray(p["wv_s"])
        dec[l, 0:4, 12:16] = np.asarray(p["wo_s"])
        dec[l, 0:4, 16:20] = np.asarray(p["wq_c"]) * dec_scale
        dec[l, 0:4, 20:24] = np.asarray(p["wk_c"])
        dec[l, 0:4, 24:28] = np.asarray(p["wv_c"])
        dec[l, 0:4, 28:32] = np.asarray(p["wo_c"])
        dec[l, 0:4, 32:64] = np.asarray(p["w1"])
        dec[l, 8:40, 0:4] = np.asarray(p["w2"])
        dec[l, 40, 0:4] = np.asarray(p["bq_s"])[0] * dec_scale
        dec[l, 41, 0:4] = np.asarray(p["bk_s"])[0]
        dec[l, 42, 0:4] = np.asarray(p["bv_s"])[0]
        dec[l, 43, 0:4] = np.asarray(p["bo_s"])[0]
        dec[l, 44, 0:4] = np.asarray(p["bq_c"])[0] * dec_scale
        dec[l, 45, 0:4] = np.asarray(p["bk_c"])[0]
        dec[l, 46, 0:4] = np.asarray(p["bv_c"])[0]
        dec[l, 47, 0:4] = np.asarray(p["bo_c"])[0]
        dec[l, 48, 0:D_M] = np.asarray(p["b1"])[0]
        dec[l, 49, 0:4] = np.asarray(p["b2"])[0]
        dec[l, 50, 0:4] = np.asarray(p["g1"])[0]
        dec[l, 51, 0:4] = np.asarray(p["be1"])[0]
        dec[l, 52, 0:4] = np.asarray(p["g2"])[0]
        dec[l, 53, 0:4] = np.asarray(p["be2"])[0]
        dec[l, 54, 0:4] = np.asarray(p["g3"])[0]
        dec[l, 55, 0:4] = np.asarray(p["be3"])[0]

    return (jnp.asarray(enc), jnp.asarray(w36), jnp.asarray(dec))


# --------------------------- pure-JAX reference ------------------------------
def _ref_ln(v, g, b):
    mu = jnp.mean(v, axis=-1, keepdims=True)
    c = v - mu
    var = jnp.mean(c * c, axis=-1, keepdims=True)
    return c * lax.rsqrt(var + LN_EPS) * g + b


def _ref_mha(q_x, kv_x, wq, bq, wk, bk, wv, bv, wo, bo, nheads):
    Sq, B, D = q_x.shape
    Sk = kv_x.shape[0]
    hd = D // nheads
    q = (q_x.reshape(Sq * B, D) @ wq + bq).reshape(Sq, B, nheads, hd)
    k = (kv_x.reshape(Sk * B, D) @ wk + bk).reshape(Sk, B, nheads, hd)
    v = (kv_x.reshape(Sk * B, D) @ wv + bv).reshape(Sk, B, nheads, hd)
    s = jnp.einsum("ibhe,jbhe->bhij", q, k) / np.sqrt(hd)
    a = jax.nn.softmax(s, axis=-1)
    ctx = jnp.einsum("bhij,jbhe->ibhe", a, v).reshape(Sq * B, D)
    return (ctx @ wo + bo).reshape(Sq, B, D)


def _ref_enc_layer(x, p):
    y = _ref_ln(x + _ref_mha(x, x, p["wq"], p["bq"], p["wk"], p["bk"],
                             p["wv"], p["bv"], p["wo"], p["bo"], HEADS),
                p["g1"], p["be1"])
    S, B, D = y.shape
    ff = (jnp.maximum(y.reshape(S * B, D) @ p["w1"] + p["b1"], 0.0)
          @ p["w2"] + p["b2"]).reshape(S, B, D)
    return _ref_ln(y + ff, p["g2"], p["be2"])


def _ref_dec_layer(x, mem, p):
    y = _ref_ln(x + _ref_mha(x, x, p["wq_s"], p["bq_s"], p["wk_s"], p["bk_s"],
                             p["wv_s"], p["bv_s"], p["wo_s"], p["bo_s"], HEADS_DEC),
                p["g1"], p["be1"])
    y = _ref_ln(y + _ref_mha(y, mem, p["wq_c"], p["bq_c"], p["wk_c"], p["bk_c"],
                             p["wv_c"], p["bv_c"], p["wo_c"], p["bo_c"], HEADS_DEC),
                p["g2"], p["be2"])
    S, B, D = y.shape
    ff = (jnp.maximum(y.reshape(S * B, D) @ p["w1"] + p["b1"], 0.0)
          @ p["w2"] + p["b2"]).reshape(S, B, D)
    return _ref_ln(y + ff, p["g3"], p["be3"])


def reference_forward(x, nxt, params):
    B, L, _ = x.shape
    Lo = L - KERNEL + 1
    cols = jnp.concatenate([x[:, k:k + Lo, :] for k in range(KERNEL)], axis=-1)
    conv = jnp.einsum("blc,cd->bld", cols, params["conv_w"]) + params["conv_b"]
    enc = jnp.transpose(conv, (1, 0, 2))                              # (Lo, B, t_dim)
    for p in params["enc_layers"]:
        enc = _ref_enc_layer(enc, p)
    cls0 = enc.mean(axis=0) @ params["wc2"] + params["bc2"]           # (B, 2)
    mem = jnp.einsum("sbd,de->sbe", enc, params["wc4"]) + params["bc4"]  # (Lo, B, 4)
    tgt = jnp.transpose(nxt, (1, 0, 2))                               # (T, B, 4)
    for p in params["dec_layers"]:
        tgt = _ref_dec_layer(tgt, mem, p)
    return cls0, tgt


# ----------------------------------- main ------------------------------------
if __name__ == "__main__":
    key = jax.random.PRNGKey(0)
    pkey, xkey, nkey = jax.random.split(key, 3)
    params = init_params(pkey)
    packed = pack_params(params)

    x = jax.random.normal(xkey, (BATCH, L_IN, IN_CH), jnp.float32)     # `input`
    nxt = jax.random.normal(nkey, (BATCH, T_DEC, D_DEC), jnp.float32)  # `next`

    out_cls, out_dec = pnd_model_forward(x, nxt, packed)
    out_cls, out_dec = jax.block_until_ready((out_cls, out_dec))

    assert out_cls.shape == (BATCH, 2), out_cls.shape
    assert out_dec.shape == (T_DEC, BATCH, D_DEC), out_dec.shape

    ref_cls, ref_dec = reference_forward(x, nxt, params)
    np.testing.assert_allclose(np.asarray(out_cls), np.asarray(ref_cls), rtol=2e-2, atol=2e-2)
    np.testing.assert_allclose(np.asarray(out_dec), np.asarray(ref_dec), rtol=2e-2, atol=2e-2)

    print("KERNEL_OK")
</pallas_src>

<mosaic_0001>
module attributes {stable_mosaic.version = 11 : i64} {
  func.func @pnd_kernel(%arg0: memref<2x16x32xf32, #tpu.memory_space<vmem>>, %arg1: memref<2x8x4xf32, #tpu.memory_space<vmem>>, %arg2: memref<1x48x1568xf32, #tpu.memory_space<vmem>>, %arg3: memref<660x36xf32, #tpu.memory_space<vmem>>, %arg4: memref<1x56x64xf32, #tpu.memory_space<vmem>>, %arg5: memref<2x1x2xf32, #tpu.memory_space<vmem>>, %arg6: memref<2x8x4xf32, #tpu.memory_space<vmem>>) attributes {dimension_semantics = [], scalar_prefetch = 0 : i64, scratch_operands = 0 : i64, tpu.core_type = #tpu.core_type<tc>} {
    %c544 = arith.constant 544 : index
    %c0 = arith.constant 0 : index
    %0 = vector.load %arg3[%c544, %c0] : memref<660x36xf32, #tpu.memory_space<vmem>>, vector<32x36xf32>
    %c576 = arith.constant 576 : index
    %c0_0 = arith.constant 0 : index
    %1 = vector.load %arg3[%c576, %c0_0] : memref<660x36xf32, #tpu.memory_space<vmem>>, vector<1x36xf32>
    %c0_1 = arith.constant 0 : index
    %c0_2 = arith.constant 0 : index
    %c0_3 = arith.constant 0 : index
    %2 = vector.load %arg0[%c0_1, %c0_2, %c0_3] : memref<2x16x32xf32, #tpu.memory_space<vmem>>, vector<2x16x32xf32>
    %3 = vector.shape_cast %2 : vector<2x16x32xf32> to vector<32x32xf32>
    %cst = arith.constant dense<0.000000e+00> : vector<32x36xf32>
    %4 = tpu.matmul %3, %0, %cst {dimension_numbers = #tpu.dot_dimension_numbers<[1], [0], [0], [1], [0, 0, 1, 1], [], []>} : vector<32x32xf32>, vector<32x36xf32>, vector<32x36xf32> -> vector<32x36xf32>
    %5 = vector.broadcast %1 : vector<1x36xf32> to vector<32x36xf32>
    %6 = arith.addf %4, %5 : vector<32x36xf32>
    %c0_4 = arith.constant 0 : index
    %c0_5 = arith.constant 0 : index
    %c0_6 = arith.constant 0 : index
    %7 = vector.load %arg2[%c0_4, %c0_5, %c0_6] : memref<1x48x1568xf32, #tpu.memory_space<vmem>>, vector<1x36x1536xf32>
    %8 = vector.shape_cast %7 : vector<1x36x1536xf32> to vector<36x1536xf32>
    %c0_7 = arith.constant 0 : index
    %c0_8 = arith.constant 0 : index
    %c1536 = arith.constant 1536 : index
    %9 = vector.load %arg2[%c0_7, %c0_8, %c1536] : memref<1x48x1568xf32, #tpu.memory_space<vmem>>, vector<1x36x32xf32>
    %10 = vector.shape_cast %9 : vector<1x36x32xf32> to vector<36x32xf32>
    %c0_9 = arith.constant 0 : index
    %c0_10 = arith.constant 0 : index
    %11 = vector.load %arg3[%c0_9, %c0_10] : memref<660x36xf32, #tpu.memory_space<vmem>>, vector<512x36xf32>
    %c512 = arith.constant 512 : index
    %c0_11 = arith.constant 0 : index
    %12 = vector.load %arg3[%c512, %c0_11] : memref<660x36xf32, #tpu.memory_space<vmem>>, vector<32x36xf32>
    %c0_12 = arith.constant 0 : index
    %c40 = arith.constant 40 : index
    %c0_13 = arith.constant 0 : index
    %13 = vector.load %arg2[%c0_12, %c40, %c0_13] : memref<1x48x1568xf32, #tpu.memory_space<vmem>>, vector<1x8x1568xf32>
    %14 = vector.shape_cast %13 : vector<1x8x1568xf32> to vector<8x1568xf32>
    %15 = vector.extract_strided_slice %14 {offsets = [0, 0], sizes = [1, 1536], strides = [1, 1]} : vector<8x1568xf32> to vector<1x1536xf32>
    %16 = vector.extract_strided_slice %14 {offsets = [1, 0], sizes = [1, 36], strides = [1, 1]} : vector<8x1568xf32> to vector<1x36xf32>
    %17 = vector.extract_strided_slice %14 {offsets = [2, 0], sizes = [1, 32], strides = [1, 1]} : vector<8x1568xf32> to vector<1x32xf32>
    %18 = vector.extract_strided_slice %14 {offsets = [3, 0], sizes = [1, 36], strides = [1, 1]} : vector<8x1568xf32> to vector<1x36xf32>
    %19 = vector.extract_strided_slice %14 {offsets = [4, 0], sizes = [1, 36], strides = [1, 1]} : vector<8x1568xf32> to vector<1x36xf32>
    %20 = vector.extract_strided_slice %14 {offsets = [5, 0], sizes = [1, 36], strides = [1, 1]} : vector<8x1568xf32> to vector<1x36xf32>
    %21 = vector.extract_strided_slice %14 {offsets = [6, 0], sizes = [1, 36], strides = [1, 1]} : vector<8x1568xf32> to vector<1x36xf32>
    %22 = vector.extract_strided_slice %14 {offsets = [7, 0], sizes = [1, 36], strides = [1, 1]} : vector<8x1568xf32> to vector<1x36xf32>
    %cst_14 = arith.constant dense<0.000000e+00> : vector<32x1536xf32>
    %23 = tpu.matmul %6, %8, %cst_14 {dimension_numbers = #tpu.dot_dimension_numbers<[1], [0], [0], [1], [0, 0, 1, 1], [], []>} : vector<32x36xf32>, vector<36x1536xf32>, vector<32x1536xf32> -> vector<32x1536xf32>
    %24 = vector.broadcast %15 : vector<1x1536xf32> to vector<32x1536xf32>
    %25 = arith.addf %23, %24 : vector<32x1536xf32>
    %26 = vector.shape_cast %25 : vector<32x1536xf32> to vector<2x16x1536xf32>
    %27 = vector.extract_strided_slice %26 {offsets = [0, 0, 0], sizes = [2, 16, 128], strides = [1, 1, 1]} : vector<2x16x1536xf32> to vector<2x16x128xf32>
    %28 = vector.extract_strided_slice %26 {offsets = [0, 0, 512], sizes = [2, 16, 128], strides = [1, 1, 1]} : vector<2x16x1536xf32> to vector<2x16x128xf32>
    %29 = vector.extract_strided_slice %26 {offsets = [0, 0, 1024], sizes = [2, 16, 128], strides = [1, 1, 1]} : vector<2x16x1536xf32> to vector<2x16x128xf32>
    "tpu.trace_start"() <{level = 10 : i32, message = "bqd,bkd->bqk"}> : () -> ()
    %cst_15 = arith.constant dense<0.000000e+00> : vector<2x16x16xf32>
    %30 = tpu.matmul %27, %28, %cst_15 {dimension_numbers = #tpu.dot_dimension_numbers<[2], [2], [1], [1], [0, 0, 0, 1, 1, 1], [0], [0]>} : vector<2x16x128xf32>, vector<2x16x128xf32>, vector<2x16x16xf32> -> vector<2x16x16xf32>
    "tpu.trace_stop"() : () -> ()
    %cst_16 = arith.constant dense<0xFF800000> : vector<2x16xf32>
    %31 = vector.multi_reduction <maximumf>, %30, %cst_16 [2] : vector<2x16x16xf32> to vector<2x16xf32>
    %32 = vector.shape_cast %31 : vector<2x16xf32> to vector<2x16x1xf32>
    %33 = vector.broadcast %32 : vector<2x16x1xf32> to vector<2x16x16xf32>
    %34 = arith.subf %30, %33 : vector<2x16x16xf32>
    %35 = math.exp %34 : vector<2x16x16xf32>
    %cst_17 = arith.constant dense<0.000000e+00> : vector<2x16xf32>
    %36 = vector.multi_reduction <add>, %35, %cst_17 [2] : vector<2x16x16xf32> to vector<2x16xf32>
    %37 = vector.shape_cast %36 : vector<2x16xf32> to vector<2x16x1xf32>
    %38 = tpu.reciprocal %37 {approx = true} : vector<2x16x1xf32> -> vector<2x16x1xf32>
    %39 = vector.broadcast %38 : vector<2x16x1xf32> to vector<2x16x16xf32>
    %40 = arith.mulf %35, %39 : vector<2x16x16xf32>
    "tpu.trace_start"() <{level = 10 : i32, message = "bqk,bkd->bqd"}> : () -> ()
    %cst_18 = arith.constant dense<0.000000e+00> : vector<2x16x128xf32>
    %41 = tpu.matmul %40, %29, %cst_18 {dimension_numbers = #tpu.dot_dimension_numbers<[2], [1], [1], [2], [0, 0, 0, 1, 1, 2], [0], [0]>} : vector<2x16x16xf32>, vector<2x16x128xf32>, vector<2x16x128xf32> -> vector<2x16x128xf32>
    "tpu.trace_stop"() : () -> ()
    %42 = vector.extract_strided_slice %26 {offsets = [0, 0, 128], sizes = [2, 16, 128], strides = [1, 1, 1]} : vector<2x16x1536xf32> to vector<2x16x128xf32>
    %43 = vector.extract_strided_slice %26 {offsets = [0, 0, 640], sizes = [2, 16, 128], strides = [1, 1, 1]} : vector<2x16x1536xf32> to vector<2x16x128xf32>
    %44 = vector.extract_strided_slice %26 {offsets = [0, 0, 1152], sizes = [2, 16, 128], strides = [1, 1, 1]} : vector<2x16x1536xf32> to vector<2x16x128xf32>
    "tpu.trace_start"() <{level = 10 : i32, message = "bqd,bkd->bqk"}> : () -> ()
    %cst_19 = arith.constant dense<0.000000e+00> : vector<2x16x16xf32>
    %45 = tpu.matmul %42, %43, %cst_19 {dimension_numbers = #tpu.dot_dimension_numbers<[2], [2], [1], [1], [0, 0, 0, 1, 1, 1], [0], [0]>} : vector<2x16x128xf32>, vector<2x16x128xf32>, vector<2x16x16xf32> -> vector<2x16x16xf32>
    "tpu.trace_stop"() : () -> ()
    %cst_20 = arith.constant dense<0xFF800000> : vector<2x16xf32>
    %46 = vector.multi_reduction <maximumf>, %45, %cst_20 [2] : vector<2x16x16xf32> to vector<2x16xf32>
    %47 = vector.shape_cast %46 : vector<2x16xf32> to vector<2x16x1xf32>
    %48 = vector.broadcast %47 : vector<2x16x1xf32> to vector<2x16x16xf32>
    %49 = arith.subf %45, %48 : vector<2x16x16xf32>
    %50 = math.exp %49 : vector<2x16x16xf32>
    %cst_21 = arith.constant dense<0.000000e+00> : vector<2x16xf32>
    %51 = vector.multi_reduction <add>, %50, %cst_21 [2] : vector<2x16x16xf32> to vector<2x16xf32>
    %52 = vector.shape_cast %51 : vector<2x16xf32> to vector<2x16x1xf32>
    %53 = tpu.reciprocal %52 {approx = true} : vector<2x16x1xf32> -> vector<2x16x1xf32>
    %54 = vector.broadcast %53 : vector<2x16x1xf32> to vector<2x16x16xf32>
    %55 = arith.mulf %50, %54 : vector<2x16x16xf32>
    "tpu.trace_start"() <{level = 10 : i32, message = "bqk,bkd->bqd"}> : () -> ()
    %cst_22 = arith.constant dense<0.000000e+00> : vector<2x16x128xf32>
    %56 = tpu.matmul %55, %44, %cst_22 {dimension_numbers = #tpu.dot_dimension_numbers<[2], [1], [1], [2], [0, 0, 0, 1, 1, 2], [0], [0]>} : vector<2x16x16xf32>, vector<2x16x128xf32>, vector<2x16x128xf32> -> vector<2x16x128xf32>
    "tpu.trace_stop"() : () -> ()
    %57 = vector.extract_strided_slice %26 {offsets = [0, 0, 256], sizes = [2, 16, 128], strides = [1, 1, 1]} : vector<2x16x1536xf32> to vector<2x16x128xf32>
    %58 = vector.extract_strided_slice %26 {offsets = [0, 0, 768], sizes = [2, 16, 128], strides = [1, 1, 1]} : vector<2x16x1536xf32> to vector<2x16x128xf32>
    %59 = vector.extract_strided_slice %26 {offsets = [0, 0, 1280], sizes = [2, 16, 128], strides = [1, 1, 1]} : vector<2x16x1536xf32> to vector<2x16x128xf32>
    "tpu.trace_start"() <{level = 10 : i32, message = "bqd,bkd->bqk"}> : () -> ()
    %cst_23 = arith.constant dense<0.000000e+00> : vector<2x16x16xf32>
    %60 = tpu.matmul %57, %58, %cst_23 {dimension_numbers = #tpu.dot_dimension_numbers<[2], [2], [1], [1], [0, 0, 0, 1, 1, 1], [0], [0]>} : vector<2x16x128xf32>, vector<2x16x128xf32>, vector<2x16x16xf32> -> vector<2x16x16xf32>
    "tpu.trace_stop"() : () -> ()
    %cst_24 = arith.constant dense<0xFF800000> : vector<2x16xf32>
    %61 = vector.multi_reduction <maximumf>, %60, %cst_24 [2] : vector<2x16x16xf32> to vector<2x16xf32>
    %62 = vector.shape_cast %61 : vector<2x16xf32> to vector<2x16x1xf32>
    %63 = vector.broadcast %62 : vector<2x16x1xf32> to vector<2x16x16xf32>
    %64 = arith.subf %60, %63 : vector<2x16x16xf32>
    %65 = math.exp %64 : vector<2x16x16xf32>
    %cst_25 = arith.constant dense<0.000000e+00> : vector<2x16xf32>
    %66 = vector.multi_reduction <add>, %65, %cst_25 [2] : vector<2x16x16xf32> to vector<2x16xf32>
    %67 = vector.shape_cast %66 : vector<2x16xf32> to vector<2x16x1xf32>
    %68 = tpu.reciprocal %67 {approx = true} : vector<2x16x1xf32> -> vector<2x16x1xf32>
    %69 = vector.broadcast %68 : vector<2x16x1xf32> to vector<2x16x16xf32>
    %70 = arith.mulf %65, %69 : vector<2x16x16xf32>
    "tpu.trace_start"() <{level = 10 : i32, message = "bqk,bkd->bqd"}> : () -> ()
    %cst_26 = arith.constant dense<0.000000e+00> : vector<2x16x128xf32>
    %71 = tpu.matmul %70, %59, %cst_26 {dimension_numbers = #tpu.dot_dimension_numbers<[2], [1], [1], [2], [0, 0, 0, 1, 1, 2], [0], [0]>} : vector<2x16x16xf32>, vector<2x16x128xf32>, vector<2x16x128xf32> -> vector<2x16x128xf32>
    "tpu.trace_stop"() : () -> ()
    %72 = vector.extract_strided_slice %26 {offsets = [0, 0, 384], sizes = [2, 16, 128], strides = [1, 1, 1]} : vector<2x16x1536xf32> to vector<2x16x128xf32>
    %73 = vector.extract_strided_slice %26 {offsets = [0, 0, 896], sizes = [2, 16, 128], strides = [1, 1, 1]} : vector<2x16x1536xf32> to vector<2x16x128xf32>
    %74 = vector.extract_strided_slice %26 {offsets = [0, 0, 1408], sizes = [2, 16, 128], strides = [1, 1, 1]} : vector<2x16x1536xf32> to vector<2x16x128xf32>
    "tpu.trace_start"() <{level = 10 : i32, message = "bqd,bkd->bqk"}> : () -> ()
    %cst_27 = arith.constant dense<0.000000e+00> : vector<2x16x16xf32>
    %75 = tpu.matmul %72, %73, %cst_27 {dimension_numbers = #tpu.dot_dimension_numbers<[2], [2], [1], [1], [0, 0, 0, 1, 1, 1], [0], [0]>} : vector<2x16x128xf32>, vector<2x16x128xf32>, vector<2x16x16xf32> -> vector<2x16x16xf32>
    "tpu.trace_stop"() : () -> ()
    %cst_28 = arith.constant dense<0xFF800000> : vector<2x16xf32>
    %76 = vector.multi_reduction <maximumf>, %75, %cst_28 [2] : vector<2x16x16xf32> to vector<2x16xf32>
    %77 = vector.shape_cast %76 : vector<2x16xf32> to vector<2x16x1xf32>
    %78 = vector.broadcast %77 : vector<2x16x1xf32> to vector<2x16x16xf32>
    %79 = arith.subf %75, %78 : vector<2x16x16xf32>
    %80 = math.exp %79 : vector<2x16x16xf32>
    %cst_29 = arith.constant dense<0.000000e+00> : vector<2x16xf32>
    %81 = vector.multi_reduction <add>, %80, %cst_29 [2] : vector<2x16x16xf32> to vector<2x16xf32>
    %82 = vector.shape_cast %81 : vector<2x16xf32> to vector<2x16x1xf32>
    %83 = tpu.reciprocal %82 {approx = true} : vector<2x16x1xf32> -> vector<2x16x1xf32>
    %84 = vector.broadcast %83 : vector<2x16x1xf32> to vector<2x16x16xf32>
    %85 = arith.mulf %80, %84 : vector<2x16x16xf32>
    "tpu.trace_start"() <{level = 10 : i32, message = "bqk,bkd->bqd"}> : () -> ()
    %cst_30 = arith.constant dense<0.000000e+00> : vector<2x16x128xf32>
    %86 = tpu.matmul %85, %74, %cst_30 {dimension_numbers = #tpu.dot_dimension_numbers<[2], [1], [1], [2], [0, 0, 0, 1, 1, 2], [0], [0]>} : vector<2x16x16xf32>, vector<2x16x128xf32>, vector<2x16x128xf32> -> vector<2x16x128xf32>
    "tpu.trace_stop"() : () -> ()
    %87 = tpu.concatenate %41, %56, %71, %86 in 2 : vector<2x16x128xf32>, vector<2x16x128xf32>, vector<2x16x128xf32>, vector<2x16x128xf32> -> vector<2x16x512xf32>
    %88 = vector.shape_cast %87 : vector<2x16x512xf32> to vector<32x512xf32>
    %cst_31 = arith.constant dense<0.000000e+00> : vector<32x36xf32>
    %89 = tpu.matmul %88, %11, %cst_31 {dimension_numbers = #tpu.dot_dimension_numbers<[1], [0], [0], [1], [0, 0, 1, 1], [], []>} : vector<32x512xf32>, vector<512x36xf32>, vector<32x36xf32> -> vector<32x36xf32>
    %90 = vector.broadcast %16 : vector<1x36xf32> to vector<32x36xf32>
    %91 = arith.addf %89, %90 : vector<32x36xf32>
    %92 = arith.addf %6, %91 : vector<32x36xf32>
    %cst_32 = arith.constant dense<0.000000e+00> : vector<32xf32>
    %93 = vector.multi_reduction <add>, %92, %cst_32 [1] : vector<32x36xf32> to vector<32xf32>
    %94 = vector.shape_cast %93 : vector<32xf32> to vector<32x1xf32>
    %cst_33 = arith.constant 3.600000e+01 : f32
    %95 = vector.broadcast %cst_33 : f32 to vector<32x1xf32>
    %96 = arith.divf %94, %95 : vector<32x1xf32>
    %97 = vector.broadcast %96 : vector<32x1xf32> to vector<32x36xf32>
    %98 = arith.subf %92, %97 : vector<32x36xf32>
    %99 = arith.mulf %98, %98 : vector<32x36xf32>
    %cst_34 = arith.constant dense<0.000000e+00> : vector<32xf32>
    %100 = vector.multi_reduction <add>, %99, %cst_34 [1] : vector<32x36xf32> to vector<32xf32>
    %101 = vector.shape_cast %100 : vector<32xf32> to vector<32x1xf32>
    %cst_35 = arith.constant 3.600000e+01 : f32
    %102 = vector.broadcast %cst_35 : f32 to vector<32x1xf32>
    %103 = arith.divf %101, %102 : vector<32x1xf32>
    %cst_36 = arith.constant 9.99999974E-6 : f32
    %104 = vector.broadcast %cst_36 : f32 to vector<32x1xf32>
    %105 = arith.addf %103, %104 : vector<32x1xf32>
    %106 = math.rsqrt %105 : vector<32x1xf32>
    %107 = vector.broadcast %106 : vector<32x1xf32> to vector<32x36xf32>
    %108 = arith.mulf %98, %107 : vector<32x36xf32>
    %109 = vector.broadcast %19 : vector<1x36xf32> to vector<32x36xf32>
    %110 = arith.mulf %108, %109 : vector<32x36xf32>
    %111 = vector.broadcast %20 : vector<1x36xf32> to vector<32x36xf32>
    %112 = arith.addf %110, %111 : vector<32x36xf32>
    %cst_37 = arith.constant dense<0.000000e+00> : vector<32x32xf32>
    %113 = tpu.matmul %112, %10, %cst_37 {dimension_numbers = #tpu.dot_dimension_numbers<[1], [0], [0], [1], [0, 0, 1, 1], [], []>} : vector<32x36xf32>, vector<36x32xf32>, vector<32x32xf32> -> vector<32x32xf32>
    %114 = vector.broadcast %17 : vector<1x32xf32> to vector<32x32xf32>
    %115 = arith.addf %113, %114 : vector<32x32xf32>
    %cst_38 = arith.constant 0.000000e+00 : f32
    %116 = vector.broadcast %cst_38 : f32 to vector<32x32xf32>
    %117 = arith.maximumf %115, %116 : vector<32x32xf32>
    %cst_39 = arith.constant dense<0.000000e+00> : vector<32x36xf32>
    %118 = tpu.matmul %117, %12, %cst_39 {dimension_numbers = #tpu.dot_dimension_numbers<[1], [0], [0], [1], [0, 0, 1, 1], [], []>} : vector<32x32xf32>, vector<32x36xf32>, vector<32x36xf32> -> vector<32x36xf32>
    %119 = vector.broadcast %18 : vector<1x36xf32> to vector<32x36xf32>
    %120 = arith.addf %118, %119 : vector<32x36xf32>
    %121 = arith.addf %112, %120 : vector<32x36xf32>
    %cst_40 = arith.constant dense<0.000000e+00> : vector<32xf32>
    %122 = vector.multi_reduction <add>, %121, %cst_40 [1] : vector<32x36xf32> to vector<32xf32>
    %123 = vector.shape_cast %122 : vector<32xf32> to vector<32x1xf32>
    %cst_41 = arith.constant 3.600000e+01 : f32
    %124 = vector.broadcast %cst_41 : f32 to vector<32x1xf32>
    %125 = arith.divf %123, %124 : vector<32x1xf32>
    %126 = vector.broadcast %125 : vector<32x1xf32> to vector<32x36xf32>
    %127 = arith.subf %121, %126 : vector<32x36xf32>
    %128 = arith.mulf %127, %127 : vector<32x36xf32>
    %cst_42 = arith.constant dense<0.000000e+00> : vector<32xf32>
    %129 = vector.multi_reduction <add>, %128, %cst_42 [1] : vector<32x36xf32> to vector<32xf32>
    %130 = vector.shape_cast %129 : vector<32xf32> to vector<32x1xf32>
    %cst_43 = arith.constant 3.600000e+01 : f32
    %131 = vector.broadcast %cst_43 : f32 to vector<32x1xf32>
    %132 = arith.divf %130, %131 : vector<32x1xf32>
    %cst_44 = arith.constant 9.99999974E-6 : f32
    %133 = vector.broadcast %cst_44 : f32 to vector<32x1xf32>
    %134 = arith.addf %132, %133 : vector<32x1xf32>
    %135 = math.rsqrt %134 : vector<32x1xf32>
    %136 = vector.broadcast %135 : vector<32x1xf32> to vector<32x36xf32>
    %137 = arith.mulf %127, %136 : vector<32x36xf32>
    %138 = vector.broadcast %21 : vector<1x36xf32> to vector<32x36xf32>
    %139 = arith.mulf %137, %138 : vector<32x36xf32>
    %140 = vector.broadcast %22 : vector<1x36xf32> to vector<32x36xf32>
    %141 = arith.addf %139, %140 : vector<32x36xf32>
    %c577 = arith.constant 577 : index
    %c0_45 = arith.constant 0 : index
    %142 = vector.load %arg3[%c577, %c0_45] : memref<660x36xf32, #tpu.memory_space<vmem>>, vector<1x2xf32>
    %c578 = arith.constant 578 : index
    %c0_46 = arith.constant 0 : index
    %143 = vector.load %arg3[%c578, %c0_46] : memref<660x36xf32, #tpu.memory_space<vmem>>, vector<1x4xf32>
    %c584 = arith.constant 584 : index
    %c0_47 = arith.constant 0 : index
    %144 = vector.load %arg3[%c584, %c0_47] : memref<660x36xf32, #tpu.memory_space<vmem>>, vector<36x2xf32>
    %c624 = arith.constant 624 : index
    %c0_48 = arith.constant 0 : index
    %145 = vector.load %arg3[%c624, %c0_48] : memref<660x36xf32, #tpu.memory_space<vmem>>, vector<36x4xf32>
    %146 = vector.shape_cast %141 : vector<32x36xf32> to vector<2x16x36xf32>
    %cst_49 = arith.constant dense<0.000000e+00> : vector<2x36xf32>
    %147 = vector.multi_reduction <add>, %146, %cst_49 [1] : vector<2x16x36xf32> to vector<2x36xf32>
    %cst_50 = arith.constant 1.600000e+01 : f32
    %148 = vector.broadcast %cst_50 : f32 to vector<2x36xf32>
    %149 = arith.divf %147, %148 : vector<2x36xf32>
    %cst_51 = arith.constant dense<0.000000e+00> : vector<2x2xf32>
    %150 = tpu.matmul %149, %144, %cst_51 {dimension_numbers = #tpu.dot_dimension_numbers<[1], [0], [0], [1], [0, 0, 1, 1], [], []>} : vector<2x36xf32>, vector<36x2xf32>, vector<2x2xf32> -> vector<2x2xf32>
    %151 = vector.broadcast %142 : vector<1x2xf32> to vector<2x2xf32>
    %152 = arith.addf %150, %151 : vector<2x2xf32>
    %153 = vector.shape_cast %152 : vector<2x2xf32> to vector<2x1x2xf32>
    %c0_52 = arith.constant 0 : index
    %c0_53 = arith.constant 0 : index
    %c0_54 = arith.constant 0 : index
    %154 = vector.load %arg5[%c0_52, %c0_53, %c0_54] : memref<2x1x2xf32, #tpu.memory_space<vmem>>, vector<2x1x2xf32>
    tpu.vector_store %arg5[%c0_52, %c0_53, %c0_54], %153 {strides = array<i32>} : memref<2x1x2xf32, #tpu.memory_space<vmem>>, vector<2x1x2xf32>,
    %cst_55 = arith.constant dense<0.000000e+00> : vector<32x4xf32>
    %155 = tpu.matmul %141, %145, %cst_55 {dimension_numbers = #tpu.dot_dimension_numbers<[1], [0], [0], [1], [0, 0, 1, 1], [], []>} : vector<32x36xf32>, vector<36x4xf32>, vector<32x4xf32> -> vector<32x4xf32>
    %156 = vector.broadcast %143 : vector<1x4xf32> to vector<32x4xf32>
    %157 = arith.addf %155, %156 : vector<32x4xf32>
    %c0_56 = arith.constant 0 : index
    %c0_57 = arith.constant 0 : index
    %c0_58 = arith.constant 0 : index
    %158 = vector.load %arg1[%c0_56, %c0_57, %c0_58] : memref<2x8x4xf32, #tpu.memory_space<vmem>>, vector<2x8x4xf32>
    %159 = vector.shape_cast %158 : vector<2x8x4xf32> to vector<16x4xf32>
    %c0_59 = arith.constant 0 : index
    %c0_60 = arith.constant 0 : index
    %c0_61 = arith.constant 0 : index
    %160 = vector.load %arg4[%c0_59, %c0_60, %c0_61] : memref<1x56x64xf32, #tpu.memory_space<vmem>>, vector<1x4x64xf32>
    %161 = vector.shape_cast %160 : vector<1x4x64xf32> to vector<4x64xf32>
    %c0_62 = arith.constant 0 : index
    %c8 = arith.constant 8 : index
    %c0_63 = arith.constant 0 : index
    %162 = vector.load %arg4[%c0_62, %c8, %c0_63] : memref<1x56x64xf32, #tpu.memory_space<vmem>>, vector<1x32x4xf32>
    %163 = vector.shape_cast %162 : vector<1x32x4xf32> to vector<32x4xf32>
    %c0_64 = arith.constant 0 : index
    %c40_65 = arith.constant 40 : index
    %c0_66 = arith.constant 0 : index
    %164 = vector.load %arg4[%c0_64, %c40_65, %c0_66] : memref<1x56x64xf32, #tpu.memory_space<vmem>>, vector<1x16x64xf32>
    %165 = vector.shape_cast %164 : vector<1x16x64xf32> to vector<16x64xf32>
    %166 = vector.extract_strided_slice %161 {offsets = [0, 0], sizes = [4, 4], strides = [1, 1]} : vector<4x64xf32> to vector<4x4xf32>
    %cst_67 = arith.constant dense<0.000000e+00> : vector<16x4xf32>
    %167 = tpu.matmul %159, %166, %cst_67 {dimension_numbers = #tpu.dot_dimension_numbers<[1], [0], [0], [1], [0, 0, 1, 1], [], []>} : vector<16x4xf32>, vector<4x4xf32>, vector<16x4xf32> -> vector<16x4xf32>
    %168 = vector.extract_strided_slice %165 {offsets = [0, 0], sizes = [1, 4], strides = [1, 1]} : vector<16x64xf32> to vector<1x4xf32>
    %169 = vector.broadcast %168 : vector<1x4xf32> to vector<16x4xf32>
    %170 = arith.addf %167, %169 : vector<16x4xf32>
    %171 = vector.extract_strided_slice %161 {offsets = [0, 4], sizes = [4, 4], strides = [1, 1]} : vector<4x64xf32> to vector<4x4xf32>
    %cst_68 = arith.constant dense<0.000000e+00> : vector<16x4xf32>
    %172 = tpu.matmul %159, %171, %cst_68 {dimension_numbers = #tpu.dot_dimension_numbers<[1], [0], [0], [1], [0, 0, 1, 1], [], []>} : vector<16x4xf32>, vector<4x4xf32>, vector<16x4xf32> -> vector<16x4xf32>
    %173 = vector.extract_strided_slice %165 {offsets = [1, 0], sizes = [1, 4], strides = [1, 1]} : vector<16x64xf32> to vector<1x4xf32>
    %174 = vector.broadcast %173 : vector<1x4xf32> to vector<16x4xf32>
    %175 = arith.addf %172, %174 : vector<16x4xf32>
    %176 = vector.extract_strided_slice %161 {offsets = [0, 8], sizes = [4, 4], strides = [1, 1]} : vector<4x64xf32> to vector<4x4xf32>
    %cst_69 = arith.constant dense<0.000000e+00> : vector<16x4xf32>
    %177 = tpu.matmul %159, %176, %cst_69 {dimension_numbers = #tpu.dot_dimension_numbers<[1], [0], [0], [1], [0, 0, 1, 1], [], []>} : vector<16x4xf32>, vector<4x4xf32>, vector<16x4xf32> -> vector<16x4xf32>
    %178 = vector.extract_strided_slice %165 {offsets = [2, 0], sizes = [1, 4], strides = [1, 1]} : vector<16x64xf32> to vector<1x4xf32>
    %179 = vector.broadcast %178 : vector<1x4xf32> to vector<16x4xf32>
    %180 = arith.addf %177, %179 : vector<16x4xf32>
    %181 = vector.shape_cast %170 : vector<16x4xf32> to vector<2x8x4xf32>
    %182 = vector.shape_cast %175 : vector<16x4xf32> to vector<2x8x4xf32>
    %183 = vector.shape_cast %180 : vector<16x4xf32> to vector<2x8x4xf32>
    %184 = vector.shape_cast %181 : vector<2x8x4xf32> to vector<2x8x1x4xf32>
    %185 = vector.shape_cast %182 : vector<2x8x4xf32> to vector<2x1x8x4xf32>
    %186 = vector.broadcast %184 : vector<2x8x1x4xf32> to vector<2x8x8x4xf32>
    %187 = vector.broadcast %185 : vector<2x1x8x4xf32> to vector<2x8x8x4xf32>
    %188 = arith.mulf %186, %187 : vector<2x8x8x4xf32>
    %cst_70 = arith.constant dense<0xFF800000> : vector<2x8x4xf32>
    %189 = vector.multi_reduction <maximumf>, %188, %cst_70 [2] : vector<2x8x8x4xf32> to vector<2x8x4xf32>
    %190 = vector.shape_cast %189 : vector<2x8x4xf32> to vector<2x8x1x4xf32>
    %191 = vector.broadcast %190 : vector<2x8x1x4xf32> to vector<2x8x8x4xf32>
    %192 = arith.subf %188, %191 : vector<2x8x8x4xf32>
    %193 = math.exp %192 : vector<2x8x8x4xf32>
    %cst_71 = arith.constant dense<0.000000e+00> : vector<2x8x4xf32>
    %194 = vector.multi_reduction <add>, %193, %cst_71 [2] : vector<2x8x8x4xf32> to vector<2x8x4xf32>
    %195 = vector.shape_cast %194 : vector<2x8x4xf32> to vector<2x8x1x4xf32>
    %196 = tpu.reciprocal %195 {approx = true} : vector<2x8x1x4xf32> -> vector<2x8x1x4xf32>
    %197 = vector.broadcast %196 : vector<2x8x1x4xf32> to vector<2x8x8x4xf32>
    %198 = arith.mulf %193, %197 : vector<2x8x8x4xf32>
    %199 = vector.shape_cast %183 : vector<2x8x4xf32> to vector<2x1x8x4xf32>
    %200 = vector.broadcast %199 : vector<2x1x8x4xf32> to vector<2x8x8x4xf32>
    %201 = arith.mulf %198, %200 : vector<2x8x8x4xf32>
    %cst_72 = arith.constant dense<0.000000e+00> : vector<2x8x4xf32>
    %202 = vector.multi_reduction <add>, %201, %cst_72 [2] : vector<2x8x8x4xf32> to vector<2x8x4xf32>
    %203 = vector.shape_cast %202 : vector<2x8x4xf32> to vector<16x4xf32>
    %204 = vector.extract_strided_slice %161 {offsets = [0, 12], sizes = [4, 4], strides = [1, 1]} : vector<4x64xf32> to vector<4x4xf32>
    %cst_73 = arith.constant dense<0.000000e+00> : vector<16x4xf32>
    %205 = tpu.matmul %203, %204, %cst_73 {dimension_numbers = #tpu.dot_dimension_numbers<[1], [0], [0], [1], [0, 0, 1, 1], [], []>} : vector<16x4xf32>, vector<4x4xf32>, vector<16x4xf32> -> vector<16x4xf32>
    %206 = vector.extract_strided_slice %165 {offsets = [3, 0], sizes = [1, 4], strides = [1, 1]} : vector<16x64xf32> to vector<1x4xf32>
    %207 = vector.broadcast %206 : vector<1x4xf32> to vector<16x4xf32>
    %208 = arith.addf %205, %207 : vector<16x4xf32>
    %209 = arith.addf %159, %208 : vector<16x4xf32>
    %210 = vector.extract_strided_slice %165 {offsets = [10, 0], sizes = [1, 4], strides = [1, 1]} : vector<16x64xf32> to vector<1x4xf32>
    %211 = vector.extract_strided_slice %165 {offsets = [11, 0], sizes = [1, 4], strides = [1, 1]} : vector<16x64xf32> to vector<1x4xf32>
    %cst_74 = arith.constant dense<0.000000e+00> : vector<16xf32>
    %212 = vector.multi_reduction <add>, %209, %cst_74 [1] : vector<16x4xf32> to vector<16xf32>
    %213 = vector.shape_cast %212 : vector<16xf32> to vector<16x1xf32>
    %cst_75 = arith.constant 4.000000e+00 : f32
    %214 = vector.broadcast %cst_75 : f32 to vector<16x1xf32>
    %215 = arith.divf %213, %214 : vector<16x1xf32>
    %216 = vector.broadcast %215 : vector<16x1xf32> to vector<16x4xf32>
    %217 = arith.subf %209, %216 : vector<16x4xf32>
    %218 = arith.mulf %217, %217 : vector<16x4xf32>
    %cst_76 = arith.constant dense<0.000000e+00> : vector<16xf32>
    %219 = vector.multi_reduction <add>, %218, %cst_76 [1] : vector<16x4xf32> to vector<16xf32>
    %220 = vector.shape_cast %219 : vector<16xf32> to vector<16x1xf32>
    %cst_77 = arith.constant 4.000000e+00 : f32
    %221 = vector.broadcast %cst_77 : f32 to vector<16x1xf32>
    %222 = arith.divf %220, %221 : vector<16x1xf32>
    %cst_78 = arith.constant 9.99999974E-6 : f32
    %223 = vector.broadcast %cst_78 : f32 to vector<16x1xf32>
    %224 = arith.addf %222, %223 : vector<16x1xf32>
    %225 = math.rsqrt %224 : vector<16x1xf32>
    %226 = vector.broadcast %225 : vector<16x1xf32> to vector<16x4xf32>
    %227 = arith.mulf %217, %226 : vector<16x4xf32>
    %228 = vector.broadcast %210 : vector<1x4xf32> to vector<16x4xf32>
    %229 = arith.mulf %227, %228 : vector<16x4xf32>
    %230 = vector.broadcast %211 : vector<1x4xf32> to vector<16x4xf32>
    %231 = arith.addf %229, %230 : vector<16x4xf32>
    %232 = vector.extract_strided_slice %161 {offsets = [0, 16], sizes = [4, 4], strides = [1, 1]} : vector<4x64xf32> to vector<4x4xf32>
    %cst_79 = arith.constant dense<0.000000e+00> : vector<16x4xf32>
    %233 = tpu.matmul %231, %232, %cst_79 {dimension_numbers = #tpu.dot_dimension_numbers<[1], [0], [0], [1], [0, 0, 1, 1], [], []>} : vector<16x4xf32>, vector<4x4xf32>, vector<16x4xf32> -> vector<16x4xf32>
    %234 = vector.extract_strided_slice %165 {offsets = [4, 0], sizes = [1, 4], strides = [1, 1]} : vector<16x64xf32> to vector<1x4xf32>
    %235 = vector.broadcast %234 : vector<1x4xf32> to vector<16x4xf32>
    %236 = arith.addf %233, %235 : vector<16x4xf32>
    %237 = vector.extract_strided_slice %161 {offsets = [0, 20], sizes = [4, 4], strides = [1, 1]} : vector<4x64xf32> to vector<4x4xf32>
    %cst_80 = arith.constant dense<0.000000e+00> : vector<32x4xf32>
    %238 = tpu.matmul %157, %237, %cst_80 {dimension_numbers = #tpu.dot_dimension_numbers<[1], [0], [0], [1], [0, 0, 1, 1], [], []>} : vector<32x4xf32>, vector<4x4xf32>, vector<32x4xf32> -> vector<32x4xf32>
    %239 = vector.extract_strided_slice %165 {offsets = [5, 0], sizes = [1, 4], strides = [1, 1]} : vector<16x64xf32> to vector<1x4xf32>
    %240 = vector.broadcast %239 : vector<1x4xf32> to vector<32x4xf32>
    %241 = arith.addf %238, %240 : vector<32x4xf32>
    %242 = vector.extract_strided_slice %161 {offsets = [0, 24], sizes = [4, 4], strides = [1, 1]} : vector<4x64xf32> to vector<4x4xf32>
    %cst_81 = arith.constant dense<0.000000e+00> : vector<32x4xf32>
    %243 = tpu.matmul %157, %242, %cst_81 {dimension_numbers = #tpu.dot_dimension_numbers<[1], [0], [0], [1], [0, 0, 1, 1], [], []>} : vector<32x4xf32>, vector<4x4xf32>, vector<32x4xf32> -> vector<32x4xf32>
    %244 = vector.extract_strided_slice %165 {offsets = [6, 0], sizes = [1, 4], strides = [1, 1]} : vector<16x64xf32> to vector<1x4xf32>
    %245 = vector.broadcast %244 : vector<1x4xf32> to vector<32x4xf32>
    %246 = arith.addf %243, %245 : vector<32x4xf32>
    %247 = vector.shape_cast %236 : vector<16x4xf32> to vector<2x8x4xf32>
    %248 = vector.shape_cast %241 : vector<32x4xf32> to vector<2x16x4xf32>
    %249 = vector.shape_cast %246 : vector<32x4xf32> to vector<2x16x4xf32>
    %250 = vector.shape_cast %247 : vector<2x8x4xf32> to vector<2x8x1x4xf32>
    %251 = vector.shape_cast %248 : vector<2x16x4xf32> to vector<2x1x16x4xf32>
    %252 = vector.broadcast %250 : vector<2x8x1x4xf32> to vector<2x8x16x4xf32>
    %253 = vector.broadcast %251 : vector<2x1x16x4xf32> to vector<2x8x16x4xf32>
    %254 = arith.mulf %252, %253 : vector<2x8x16x4xf32>
    %cst_82 = arith.constant dense<0xFF800000> : vector<2x8x4xf32>
    %255 = vector.multi_reduction <maximumf>, %254, %cst_82 [2] : vector<2x8x16x4xf32> to vector<2x8x4xf32>
    %256 = vector.shape_cast %255 : vector<2x8x4xf32> to vector<2x8x1x4xf32>
    %257 = vector.broadcast %256 : vector<2x8x1x4xf32> to vector<2x8x16x4xf32>
    %258 = arith.subf %254, %257 : vector<2x8x16x4xf32>
    %259 = math.exp %258 : vector<2x8x16x4xf32>
    %cst_83 = arith.constant dense<0.000000e+00> : vector<2x8x4xf32>
    %260 = vector.multi_reduction <add>, %259, %cst_83 [2] : vector<2x8x16x4xf32> to vector<2x8x4xf32>
    %261 = vector.shape_cast %260 : vector<2x8x4xf32> to vector<2x8x1x4xf32>
    %262 = tpu.reciprocal %261 {approx = true} : vector<2x8x1x4xf32> -> vector<2x8x1x4xf32>
    %263 = vector.broadcast %262 : vector<2x8x1x4xf32> to vector<2x8x16x4xf32>
    %264 = arith.mulf %259, %263 : vector<2x8x16x4xf32>
    %265 = vector.shape_cast %249 : vector<2x16x4xf32> to vector<2x1x16x4xf32>
    %266 = vector.broadcast %265 : vector<2x1x16x4xf32> to vector<2x8x16x4xf32>
    %267 = arith.mulf %264, %266 : vector<2x8x16x4xf32>
    %cst_84 = arith.constant dense<0.000000e+00> : vector<2x8x4xf32>
    %268 = vector.multi_reduction <add>, %267, %cst_84 [2] : vector<2x8x16x4xf32> to vector<2x8x4xf32>
    %269 = vector.shape_cast %268 : vector<2x8x4xf32> to vector<16x4xf32>
    %270 = vector.extract_strided_slice %161 {offsets = [0, 28], sizes = [4, 4], strides = [1, 1]} : vector<4x64xf32> to vector<4x4xf32>
    %cst_85 = arith.constant dense<0.000000e+00> : vector<16x4xf32>
    %271 = tpu.matmul %269, %270, %cst_85 {dimension_numbers = #tpu.dot_dimension_numbers<[1], [0], [0], [1], [0, 0, 1, 1], [], []>} : vector<16x4xf32>, vector<4x4xf32>, vector<16x4xf32> -> vector<16x4xf32>
    %272 = vector.extract_strided_slice %165 {offsets = [7, 0], sizes = [1, 4], strides = [1, 1]} : vector<16x64xf32> to vector<1x4xf32>
    %273 = vector.broadcast %272 : vector<1x4xf32> to vector<16x4xf32>
    %274 = arith.addf %271, %273 : vector<16x4xf32>
    %275 = arith.addf %231, %274 : vector<16x4xf32>
    %276 = vector.extract_strided_slice %165 {offsets = [12, 0], sizes = [1, 4], strides = [1, 1]} : vector<16x64xf32> to vector<1x4xf32>
    %277 = vector.extract_strided_slice %165 {offsets = [13, 0], sizes = [1, 4], strides = [1, 1]} : vector<16x64xf32> to vector<1x4xf32>
    %cst_86 = arith.constant dense<0.000000e+00> : vector<16xf32>
    %278 = vector.multi_reduction <add>, %275, %cst_86 [1] : vector<16x4xf32> to vector<16xf32>
    %279 = vector.shape_cast %278 : vector<16xf32> to vector<16x1xf32>
    %cst_87 = arith.constant 4.000000e+00 : f32
    %280 = vector.broadcast %cst_87 : f32 to vector<16x1xf32>
    %281 = arith.divf %279, %280 : vector<16x1xf32>
    %282 = vector.broadcast %281 : vector<16x1xf32> to vector<16x4xf32>
    %283 = arith.subf %275, %282 : vector<16x4xf32>
    %284 = arith.mulf %283, %283 : vector<16x4xf32>
    %cst_88 = arith.constant dense<0.000000e+00> : vector<16xf32>
    %285 = vector.multi_reduction <add>, %284, %cst_88 [1] : vector<16x4xf32> to vector<16xf32>
    %286 = vector.shape_cast %285 : vector<16xf32> to vector<16x1xf32>
    %cst_89 = arith.constant 4.000000e+00 : f32
    %287 = vector.broadcast %cst_89 : f32 to vector<16x1xf32>
    %288 = arith.divf %286, %287 : vector<16x1xf32>
    %cst_90 = arith.constant 9.99999974E-6 : f32
    %289 = vector.broadcast %cst_90 : f32 to vector<16x1xf32>
    %290 = arith.addf %288, %289 : vector<16x1xf32>
    %291 = math.rsqrt %290 : vector<16x1xf32>
    %292 = vector.broadcast %291 : vector<16x1xf32> to vector<16x4xf32>
    %293 = arith.mulf %283, %292 : vector<16x4xf32>
    %294 = vector.broadcast %276 : vector<1x4xf32> to vector<16x4xf32>
    %295 = arith.mulf %293, %294 : vector<16x4xf32>
    %296 = vector.broadcast %277 : vector<1x4xf32> to vector<16x4xf32>
    %297 = arith.addf %295, %296 : vector<16x4xf32>
    %298 = vector.extract_strided_slice %161 {offsets = [0, 32], sizes = [4, 32], strides = [1, 1]} : vector<4x64xf32> to vector<4x32xf32>
    %cst_91 = arith.constant dense<0.000000e+00> : vector<16x32xf32>
    %299 = tpu.matmul %297, %298, %cst_91 {dimension_numbers = #tpu.dot_dimension_numbers<[1], [0], [0], [1], [0, 0, 1, 1], [], []>} : vector<16x4xf32>, vector<4x32xf32>, vector<16x32xf32> -> vector<16x32xf32>
    %300 = vector.extract_strided_slice %165 {offsets = [8, 0], sizes = [1, 32], strides = [1, 1]} : vector<16x64xf32> to vector<1x32xf32>
    %301 = vector.broadcast %300 : vector<1x32xf32> to vector<16x32xf32>
    %302 = arith.addf %299, %301 : vector<16x32xf32>
    %cst_92 = arith.constant 0.000000e+00 : f32
    %303 = vector.broadcast %cst_92 : f32 to vector<16x32xf32>
    %304 = arith.maximumf %302, %303 : vector<16x32xf32>
    %cst_93 = arith.constant dense<0.000000e+00> : vector<16x4xf32>
    %305 = tpu.matmul %304, %163, %cst_93 {dimension_numbers = #tpu.dot_dimension_numbers<[1], [0], [0], [1], [0, 0, 1, 1], [], []>} : vector<16x32xf32>, vector<32x4xf32>, vector<16x4xf32> -> vector<16x4xf32>
    %306 = vector.extract_strided_slice %165 {offsets = [9, 0], sizes = [1, 4], strides = [1, 1]} : vector<16x64xf32> to vector<1x4xf32>
    %307 = vector.broadcast %306 : vector<1x4xf32> to vector<16x4xf32>
    %308 = arith.addf %305, %307 : vector<16x4xf32>
    %309 = arith.addf %297, %308 : vector<16x4xf32>
    %310 = vector.extract_strided_slice %165 {offsets = [14, 0], sizes = [1, 4], strides = [1, 1]} : vector<16x64xf32> to vector<1x4xf32>
    %311 = vector.extract_strided_slice %165 {offsets = [15, 0], sizes = [1, 4], strides = [1, 1]} : vector<16x64xf32> to vector<1x4xf32>
    %cst_94 = arith.constant dense<0.000000e+00> : vector<16xf32>
    %312 = vector.multi_reduction <add>, %309, %cst_94 [1] : vector<16x4xf32> to vector<16xf32>
    %313 = vector.shape_cast %312 : vector<16xf32> to vector<16x1xf32>
    %cst_95 = arith.constant 4.000000e+00 : f32
    %314 = vector.broadcast %cst_95 : f32 to vector<16x1xf32>
    %315 = arith.divf %313, %314 : vector<16x1xf32>
    %316 = vector.broadcast %315 : vector<16x1xf32> to vector<16x4xf32>
    %317 = arith.subf %309, %316 : vector<16x4xf32>
    %318 = arith.mulf %317, %317 : vector<16x4xf32>
    %cst_96 = arith.constant dense<0.000000e+00> : vector<16xf32>
    %319 = vector.multi_reduction <add>, %318, %cst_96 [1] : vector<16x4xf32> to vector<16xf32>
    %320 = vector.shape_cast %319 : vector<16xf32> to vector<16x1xf32>
    %cst_97 = arith.constant 4.000000e+00 : f32
    %321 = vector.broadcast %cst_97 : f32 to vector<16x1xf32>
    %322 = arith.divf %320, %321 : vector<16x1xf32>
    %cst_98 = arith.constant 9.99999974E-6 : f32
    %323 = vector.broadcast %cst_98 : f32 to vector<16x1xf32>
    %324 = arith.addf %322, %323 : vector<16x1xf32>
    %325 = math.rsqrt %324 : vector<16x1xf32>
    %326 = vector.broadcast %325 : vector<16x1xf32> to vector<16x4xf32>
    %327 = arith.mulf %317, %326 : vector<16x4xf32>
    %328 = vector.broadcast %310 : vector<1x4xf32> to vector<16x4xf32>
    %329 = arith.mulf %327, %328 : vector<16x4xf32>
    %330 = vector.broadcast %311 : vector<1x4xf32> to vector<16x4xf32>
    %331 = arith.addf %329, %330 : vector<16x4xf32>
    %332 = vector.shape_cast %331 : vector<16x4xf32> to vector<2x8x4xf32>
    %c0_99 = arith.constant 0 : index
    %c0_100 = arith.constant 0 : index
    %c0_101 = arith.constant 0 : index
    %333 = vector.load %arg6[%c0_99, %c0_100, %c0_101] : memref<2x8x4xf32, #tpu.memory_space<vmem>>, vector<2x8x4xf32>
    tpu.vector_store %arg6[%c0_99, %c0_100, %c0_101], %332 {strides = array<i32>} : memref<2x8x4xf32, #tpu.memory_space<vmem>>, vector<2x8x4xf32>,
    return
  }
}

</mosaic_0001>

<llo_original>
// kernel: pnd_model_forward.1
$region0: #{pnd_model_forward.1}
  #allocation0 [shape = 'u32[]', space=smem, size = 0x4, offset = 0x4, fixed_abs, tag = 'smem constant byte address 0x4 - core index']
  #allocation1 [shape = 'u32[144,128]{1,0:T(1,128)}', space=vmem, size = 0x12000, scoped, tag = 'internal scratch']
  %s0 = inlined_call_operand.vmem [shape: f32[2,16,32], index: 0, kind: input, shape index: {}]
  %s1 = inlined_call_operand.vmem [shape: f32[2,8,4], index: 1, kind: input, shape index: {}]
  %s2 = inlined_call_operand.vmem [shape: f32[1,48,1568], index: 2, kind: input, shape index: {}]
  %s3 = inlined_call_operand.vmem [shape: f32[660,36], index: 3, kind: input, shape index: {}]
  %s4 = inlined_call_operand.vmem [shape: f32[1,56,64], index: 4, kind: input, shape index: {}]
  %s5 = inlined_call_operand.hbm [shape: f32[2,1,2], index: 5, kind: output, shape index: {0}]
  %s6 = inlined_call_operand.vmem [shape: f32[2,8,4], index: 6, kind: output, shape index: {1}]
  %7 = xla_tuple %s5, %s6
  %s8 = sld [smem:[#allocation0]]
  $region38: #{pnd_model_forward.1} parent=0
    _
  %s10 = ssub.s32 1, %s8
  %s11 = scalar_select 0, %s10, %s8
  $region1: #{pnd_model_forward.1} parent=0
    #allocation2 [shape = 'u8[1024]{0}', space=vmem, size = 0x400, scoped, tag = 'output window, operand 0, single buffered']
    #allocation3 [shape = 's32[1]{0}', space=sflag, size = 0x4, scoped, tag = 'scoped memory for pnd_model_forward.1']
    %12 = vsyncpa [#allocation3], 0
    // Predicated region
    $region2: #{pnd_model_forward.1} parent=1 // pred_check
      _
    $region3: #{pnd_model_forward.1} parent=1 // pred_check_branch
      %14 = sbr.rel (0) target = $region5
    $region4: #{pnd_model_forward.1} parent=1 // pred_region
      _
    $region5: #{pnd_model_forward.1} parent=1 // pred_fallthru
      _
    // Predicated region
    $region6: #{pnd_model_forward.1} parent=1 // pred_check
      _
    $region7: #{pnd_model_forward.1} parent=1 // pred_check_branch
      %16 = sbr.rel (0) target = $region9
    $region8: #{pnd_model_forward.1} parent=1 // pred_region
      _
    $region9: #{pnd_model_forward.1} parent=1 // pred_fallthru
      _
    // Predicated region
    $region10: #{pnd_model_forward.1} parent=1 // pred_check
      _
    $region11: #{pnd_model_forward.1} parent=1 // pred_check_branch
      %18 = sbr.rel (0) target = $region13
    $region12: #{pnd_model_forward.1} parent=1 // pred_region
      _
    $region13: #{pnd_model_forward.1} parent=1 // pred_fallthru
      _
    // Predicated region
    $region14: #{pnd_model_forward.1} parent=1 // pred_check
      _
    $region15: #{pnd_model_forward.1} parent=1 // pred_check_branch
      %20 = sbr.rel (0) target = $region17
    $region16: #{pnd_model_forward.1} parent=1 // pred_region
      _
    $region17: #{pnd_model_forward.1} parent=1 // pred_fallthru
      _
    // Predicated region
    $region18: #{pnd_model_forward.1} parent=1 // pred_check
      _
    $region19: #{pnd_model_forward.1} parent=1 // pred_check_branch
      %22 = sbr.rel (0) target = $region21
    $region20: #{pnd_model_forward.1} parent=1 // pred_region
      _
    $region21: #{pnd_model_forward.1} parent=1 // pred_fallthru
      _
    %v23 = vld [vmem:[%s3 + $0x220] sm:$0xff]
    %v24 = vld [vmem:[%s3 + $0x228] sm:$0xff]
    %v25 = vld [vmem:[%s3 + $0x230] sm:$0xff]
    %v26 = vld [vmem:[%s3 + $0x238] sm:$0xff]
    %v27 = vld [vmem:[%s3 + $0x240] sm:$0x1]
    %v28 = vld [vmem:[%s0] sm:$0xff]
    %v29 = vld [vmem:[%s0 + $0x8] sm:$0xff]
    %v30 = vld [vmem:[%s0 + $0x10] sm:$0xff]
    %v31 = vld [vmem:[%s0 + $0x18] sm:$0xff]
    %v32 = vlaneseq
    %v33 = vshrl.u32 %v32, 7
    %v34 = vsub.s32 0, %v33
    %v35 = vrot.slane %v27, %v34
    %vm36 = vcmask 261120
    %v38 = vsel %vm36, %v28, 0
    %v41 = vsel %vm36, %v29, 0
    %v44 = vsel %vm36, %v30, 0
    %v47 = vsel %vm36, %v31, 0
    %49 = vmatprep.subr.mxu0 0.0
    %50 = vmatpush1.msra.mxu0 0.0
    %51 = vmatprep.subr.mxu0 0.0
    %52 = vmatpush1.msra.mxu0 0.0
    %53 = vmatprep.subr.mxu0 0.0
    %54 = vmatpush1.msra.mxu0 0.0
    %55 = vmatprep.subr.mxu0 0.0
    %56 = vmatpush1.msra.mxu0 0.0
    %57 = vmatprep.subr.mxu0 0.0
    %58 = vmatpush1.msra.mxu0 0.0
    %59 = vmatprep.subr.mxu0 0.0
    %60 = vmatpush1.msra.mxu0 0.0
    %61 = vmatprep.subr.mxu0 0.0
    %62 = vmatpush1.msra.mxu0 0.0
    %63 = vmatprep.subr.mxu0 0.0
    %64 = vmatpush1.msra.mxu0 0.0
    %65 = vmatprep.subr.mxu0 0.0
    %66 = vmatpush1.msra.mxu0 0.0
    %67 = vmatprep.subr.mxu0 0.0
    %68 = vmatpush1.msra.mxu0 0.0
    %69 = vmatprep.subr.mxu0 0.0
    %70 = vmatpush1.msra.mxu0 0.0
    %71 = vmatprep.subr.mxu0 0.0
    %72 = vmatpush1.msra.mxu0 0.0
    %73 = vmatprep.subr.mxu0 0.0
    %74 = vmatpush1.msra.mxu0 %v26
    %75 = vmatprep.subr.mxu0 0.0
    %76 = vmatpush1.msra.mxu0 %v25
    %77 = vmatprep.subr.mxu0 0.0
    %78 = vmatpush1.msra.mxu0 %v24
    %79 = vmatprep.subr.mxu0 0.0
    %80 = vmatpush1.msra.mxu0 %v23
    %81 = vmatprep.subr.mxu0 0.0
    %82 = vmatpush2.msra.mxu0 0.0
    %83 = vmatprep.subr.mxu0 0.0
    %84 = vmatpush2.msra.mxu0 0.0
    %85 = vmatprep.subr.mxu0 0.0
    %86 = vmatpush2.msra.mxu0 0.0
    %87 = vmatprep.subr.mxu0 0.0
    %88 = vmatpush2.msra.mxu0 0.0
    %89 = vmatprep.subr.mxu0 0.0
    %90 = vmatpush2.msra.mxu0 0.0
    %91 = vmatprep.subr.mxu0 0.0
    %92 = vmatpush2.msra.mxu0 0.0
    %93 = vmatprep.subr.mxu0 0.0
    %94 = vmatpush2.msra.mxu0 0.0
    %95 = vmatprep.subr.mxu0 0.0
    %96 = vmatpush2.msra.mxu0 0.0
    %97 = vmatprep.subr.mxu0 0.0
    %98 = vmatpush2.msra.mxu0 0.0
    %99 = vmatprep.subr.mxu0 0.0
    %100 = vmatpush2.msra.mxu0 0.0
    %101 = vmatprep.subr.mxu0 0.0
    %102 = vmatpush2.msra.mxu0 0.0
    %103 = vmatprep.subr.mxu0 0.0
    %104 = vmatpush2.msra.mxu0 0.0
    %105 = vmatprep.subr.mxu0 0.0
    %106 = vmatpush2.msra.mxu0 0.0
    %107 = vmatprep.subr.mxu0 0.0
    %108 = vmatpush2.msra.mxu0 0.0
    %109 = vmatprep.subr.mxu0 0.0
    %110 = vmatpush2.msra.mxu0 0.0
    %111 = vmatprep.subr.mxu0 0.0
    %112 = vmatpush2.msra.mxu0 0.0
    %113 = vmatprep.mubr.f32.mxu0 0.0
    %114 = vmatmul.mubr.f32.gmra.mxu0 %v38
    %v115 = vpop.f32.mrf.mxu0
    %v116 = vadd.f32 %v35, %v115
    %v117 = vpop.f32.mrf.mxu0
    %118 = vmatprep.mubr.f32.mxu0 0.0
    %119 = vmatmul.mubr.f32.gmra.mxu0 %v41
    %v120 = vpop.f32.mrf.mxu0
    %v121 = vadd.f32 %v35, %v120
    %v122 = vpop.f32.mrf.mxu0
    %123 = vmatprep.mubr.f32.mxu0 0.0
    %124 = vmatmul.mubr.f32.gmra.mxu0 %v44
    %v125 = vpop.f32.mrf.mxu0
    %v126 = vadd.f32 %v35, %v125
    %v127 = vpop.f32.mrf.mxu0
    %128 = vmatprep.mubr.f32.mxu0 0.0
    %129 = vmatmul.mubr.f32.gmra.mxu0 %v47
    %v130 = vpop.f32.mrf.mxu0
    %v131 = vadd.f32 %v35, %v130
    %v132 = vpop.f32.mrf.mxu0
    %133 = vdwg.mxu0
    %v134 = vld [vmem:[%s2] sm:$0xff]
    %v135 = vld [vmem:[%s2 + $0x8] sm:$0xff]
    %v136 = vld [vmem:[%s2 + $0x10] sm:$0xff]
    %v137 = vld [vmem:[%s2 + $0x18] sm:$0xff]
    %v138 = vld [vmem:[%s2 + $0x20] sm:$0xff]
    %v139 = vld [vmem:[%s2 + $0x28] sm:$0xff]
    %v140 = vld [vmem:[%s2 + $0x30] sm:$0xff]
    %v141 = vld [vmem:[%s2 + $0x38] sm:$0xff]
    %v142 = vld [vmem:[%s2 + $0x40] sm:$0xff]
    %v143 = vld [vmem:[%s2 + $0x48] sm:$0xff]
    %v144 = vld [vmem:[%s2 + $0x50] sm:$0xff]
    %v145 = vld [vmem:[%s2 + $0x58] sm:$0xff]
    %v146 = vld [vmem:[%s2 + $0x68] sm:$0xff]
    %v147 = vld [vmem:[%s2 + $0x70] sm:$0xff]
    %v148 = vld [vmem:[%s2 + $0x78] sm:$0xff]
    %v149 = vld [vmem:[%s2 + $0x80] sm:$0xff]
    %v150 = vld [vmem:[%s2 + $0x88] sm:$0xff]
    %v151 = vld [vmem:[%s2 + $0x90] sm:$0xff]
    %v152 = vld [vmem:[%s2 + $0x98] sm:$0xff]
    %v153 = vld [vmem:[%s2 + $0xa0] sm:$0xff]
    %v154 = vld [vmem:[%s2 + $0xa8] sm:$0xff]
    %v155 = vld [vmem:[%s2 + $0xb0] sm:$0xff]
    %v156 = vld [vmem:[%s2 + $0xb8] sm:$0xff]
    %v157 = vld [vmem:[%s2 + $0xc0] sm:$0xff]
    %v158 = vld [vmem:[%s2 + $0xd0] sm:$0xff]
    %v159 = vld [vmem:[%s2 + $0xd8] sm:$0xff]
    %v160 = vld [vmem:[%s2 + $0xe0] sm:$0xff]
    %v161 = vld [vmem:[%s2 + $0xe8] sm:$0xff]
    %v162 = vld [vmem:[%s2 + $0xf0] sm:$0xff]
    %v163 = vld [vmem:[%s2 + $0xf8] sm:$0xff]
    %v164 = vld [vmem:[%s2 + $0x100] sm:$0xff]
    %v165 = vld [vmem:[%s2 + $0x108] sm:$0xff]
    %v166 = vld [vmem:[%s2 + $0x110] sm:$0xff]
    %v167 = vld [vmem:[%s2 + $0x118] sm:$0xff]
    %v168 = vld [vmem:[%s2 + $0x120] sm:$0xff]
    %v169 = vld [vmem:[%s2 + $0x128] sm:$0xff]
    %v170 = vld [vmem:[%s2 + $0x138] sm:$0xff]
    %v171 = vld [vmem:[%s2 + $0x140] sm:$0xff]
    %v172 = vld [vmem:[%s2 + $0x148] sm:$0xff]
    %v173 = vld [vmem:[%s2 + $0x150] sm:$0xff]
    %v174 = vld [vmem:[%s2 + $0x158] sm:$0xff]
    %v175 = vld [vmem:[%s2 + $0x160] sm:$0xff]
    %v176 = vld [vmem:[%s2 + $0x168] sm:$0xff]
    %v177 = vld [vmem:[%s2 + $0x170] sm:$0xff]
    %v178 = vld [vmem:[%s2 + $0x178] sm:$0xff]
    %v179 = vld [vmem:[%s2 + $0x180] sm:$0xff]
    %v180 = vld [vmem:[%s2 + $0x188] sm:$0xff]
    %v181 = vld [vmem:[%s2 + $0x190] sm:$0xff]
    %v182 = vld [vmem:[%s2 + $0x1a0] sm:$0xf]
    %v183 = vld [vmem:[%s2 + $0x1a8] sm:$0xf]
    %v184 = vld [vmem:[%s2 + $0x1b0] sm:$0xf]
    %v185 = vld [vmem:[%s2 + $0x1b8] sm:$0xf]
    %v186 = vld [vmem:[%s2 + $0x1c0] sm:$0xf]
    %v187 = vld [vmem:[%s2 + $0x1c8] sm:$0xf]
    %v188 = vld [vmem:[%s2 + $0x1d0] sm:$0xf]
    %v189 = vld [vmem:[%s2 + $0x1d8] sm:$0xf]
    %v190 = vld [vmem:[%s2 + $0x1e0] sm:$0xf]
    %v191 = vld [vmem:[%s2 + $0x1e8] sm:$0xf]
    %v192 = vld [vmem:[%s2 + $0x1f0] sm:$0xf]
    %v193 = vld [vmem:[%s2 + $0x1f8] sm:$0xf]
    %v194 = vld [vmem:[%s2 + $0x60] sm:$0xff]
    %v195 = vld [vmem:[%s2 + $0xc8] sm:$0xff]
    %v196 = vld [vmem:[%s2 + $0x130] sm:$0xff]
    %v197 = vld [vmem:[%s2 + $0x198] sm:$0xff]
    %v198 = vld [vmem:[%s2 + $0x200] sm:$0xf]
    %v199 = vld [vmem:[%s3] sm:$0xff]
    %v200 = vld [vmem:[%s3 + $0x8] sm:$0xff]
    %v201 = vld [vmem:[%s3 + $0x10] sm:$0xff]
    %v202 = vld [vmem:[%s3 + $0x18] sm:$0xff]
    %v203 = vld [vmem:[%s3 + $0x20] sm:$0xff]
    %v204 = vld [vmem:[%s3 + $0x28] sm:$0xff]
    %v205 = vld [vmem:[%s3 + $0x30] sm:$0xff]
    %v206 = vld [vmem:[%s3 + $0x38] sm:$0xff]
    %v207 = vld [vmem:[%s3 + $0x40] sm:$0xff]
    %v208 = vld [vmem:[%s3 + $0x48] sm:$0xff]
    %v209 = vld [vmem:[%s3 + $0x50] sm:$0xff]
    %v210 = vld [vmem:[%s3 + $0x58] sm:$0xff]
    %v211 = vld [vmem:[%s3 + $0x60] sm:$0xff]
    %v212 = vld [vmem:[%s3 + $0x68] sm:$0xff]
    %v213 = vld [vmem:[%s3 + $0x70] sm:$0xff]
    %v214 = vld [vmem:[%s3 + $0x78] sm:$0xff]
    %v215 = vld [vmem:[%s3 + $0x80] sm:$0xff]
    %v216 = vld [vmem:[%s3 + $0x88] sm:$0xff]
    %v217 = vld [vmem:[%s3 + $0x90] sm:$0xff]
    %v218 = vld [vmem:[%s3 + $0x98] sm:$0xff]
    %v219 = vld [vmem:[%s3 + $0xa0] sm:$0xff]
    %v220 = vld [vmem:[%s3 + $0xa8] sm:$0xff]
    %v221 = vld [vmem:[%s3 + $0xb0] sm:$0xff]
    %v222 = vld [vmem:[%s3 + $0xb8] sm:$0xff]
    %v223 = vld [vmem:[%s3 + $0xc0] sm:$0xff]
    %v224 = vld [vmem:[%s3 + $0xc8] sm:$0xff]
    %v225 = vld [vmem:[%s3 + $0xd0] sm:$0xff]
    %v226 = vld [vmem:[%s3 + $0xd8] sm:$0xff]
    %v227 = vld [vmem:[%s3 + $0xe0] sm:$0xff]
    %v228 = vld [vmem:[%s3 + $0xe8] sm:$0xff]
    %v229 = vld [vmem:[%s3 + $0xf0] sm:$0xff]
    %v230 = vld [vmem:[%s3 + $0xf8] sm:$0xff]
    %v231 = vld [vmem:[%s3 + $0x100] sm:$0xff]
    %v232 = vld [vmem:[%s3 + $0x108] sm:$0xff]
    %v233 = vld [vmem:[%s3 + $0x110] sm:$0xff]
    %v234 = vld [vmem:[%s3 + $0x118] sm:$0xff]
    %v235 = vld [vmem:[%s3 + $0x120] sm:$0xff]
    %v236 = vld [vmem:[%s3 + $0x128] sm:$0xff]
    %v237 = vld [vmem:[%s3 + $0x130] sm:$0xff]
    %v238 = vld [vmem:[%s3 + $0x138] sm:$0xff]
    %v239 = vld [vmem:[%s3 + $0x140] sm:$0xff]
    %v240 = vld [vmem:[%s3 + $0x148] sm:$0xff]
    %v241 = vld [vmem:[%s3 + $0x150] sm:$0xff]
    %v242 = vld [vmem:[%s3 + $0x158] sm:$0xff]
    %v243 = vld [vmem:[%s3 + $0x160] sm:$0xff]
    %v244 = vld [vmem:[%s3 + $0x168] sm:$0xff]
    %v245 = vld [vmem:[%s3 + $0x170] sm:$0xff]
    %v246 = vld [vmem:[%s3 + $0x178] sm:$0xff]
    %v247 = vld [vmem:[%s3 + $0x180] sm:$0xff]
    %v248 = vld [vmem:[%s3 + $0x188] sm:$0xff]
    %v249 = vld [vmem:[%s3 + $0x190] sm:$0xff]
    %v250 = vld [vmem:[%s3 + $0x198] sm:$0xff]
    %v251 = vld [vmem:[%s3 + $0x1a0] sm:$0xff]
    %v252 = vld [vmem:[%s3 + $0x1a8] sm:$0xff]
    %v253 = vld [vmem:[%s3 + $0x1b0] sm:$0xff]
    %v254 = vld [vmem:[%s3 + $0x1b8] sm:$0xff]
    %v255 = vld [vmem:[%s3 + $0x1c0] sm:$0xff]
    %v256 = vld [vmem:[%s3 + $0x1c8] sm:$0xff]
    %v257 = vld [vmem:[%s3 + $0x1d0] sm:$0xff]
    %v258 = vld [vmem:[%s3 + $0x1d8] sm:$0xff]
    %v259 = vld [vmem:[%s3 + $0x1e0] sm:$0xff]
    %v260 = vld [vmem:[%s3 + $0x1e8] sm:$0xff]
    %v261 = vld [vmem:[%s3 + $0x1f0] sm:$0xff]
    %v262 = vld [vmem:[%s3 + $0x1f8] sm:$0xff]
    %v263 = vld [vmem:[%s3 + $0x200] sm:$0xff]
    %v264 = vld [vmem:[%s3 + $0x208] sm:$0xff]
    %v265 = vld [vmem:[%s3 + $0x210] sm:$0xff]
    %v266 = vld [vmem:[%s3 + $0x218] sm:$0xff]
    %v267 = vld [vmem:[%s2 + $0x208] sm:$0xff]
    %v268 = vld [vmem:[%s2 + $0x210] sm:$0xff]
    %v269 = vld [vmem:[%s2 + $0x218] sm:$0xff]
    %v270 = vld [vmem:[%s2 + $0x220] sm:$0xff]
    %v271 = vld [vmem:[%s2 + $0x228] sm:$0xff]
    %v272 = vld [vmem:[%s2 + $0x230] sm:$0xff]
    %v273 = vld [vmem:[%s2 + $0x238] sm:$0xff]
    %v274 = vld [vmem:[%s2 + $0x240] sm:$0xff]
    %v275 = vld [vmem:[%s2 + $0x248] sm:$0xff]
    %v276 = vld [vmem:[%s2 + $0x250] sm:$0xff]
    %v277 = vld [vmem:[%s2 + $0x258] sm:$0xff]
    %v278 = vld [vmem:[%s2 + $0x260] sm:$0xff]
    %v279 = vlaneseq
    %v280 = vshrl.u32 %v279, 7
    %v281 = vsub.s32 0, %v280
    %v282 = vrot.slane %v267, %v281
    %v283 = vlaneseq
    %v284 = vshrl.u32 %v283, 7
    %v285 = vsub.s32 0, %v284
    %v286 = vrot.slane %v268, %v285
    %v287 = vlaneseq
    %v288 = vshrl.u32 %v287, 7
    %v289 = vsub.s32 0, %v288
    %v290 = vrot.slane %v269, %v289
    %v291 = vlaneseq
    %v292 = vshrl.u32 %v291, 7
    %v293 = vsub.s32 0, %v292
    %v294 = vrot.slane %v270, %v293
    %v295 = vlaneseq
    %v296 = vshrl.u32 %v295, 7
    %v297 = vsub.s32 0, %v296
    %v298 = vrot.slane %v271, %v297
    %v299 = vlaneseq
    %v300 = vshrl.u32 %v299, 7
    %v301 = vsub.s32 0, %v300
    %v302 = vrot.slane %v272, %v301
    %v303 = vlaneseq
    %v304 = vshrl.u32 %v303, 7
    %v305 = vsub.s32 0, %v304
    %v306 = vrot.slane %v273, %v305
    %v307 = vlaneseq
    %v308 = vshrl.u32 %v307, 7
    %v309 = vsub.s32 0, %v308
    %v310 = vrot.slane %v274, %v309
    %v311 = vlaneseq
    %v312 = vshrl.u32 %v311, 7
    %v313 = vsub.s32 0, %v312
    %v314 = vrot.slane %v275, %v313
    %v315 = vlaneseq
    %v316 = vshrl.u32 %v315, 7
    %v317 = vsub.s32 0, %v316
    %v318 = vrot.slane %v276, %v317
    %v319 = vlaneseq
    %v320 = vshrl.u32 %v319, 7
    %v321 = vsub.s32 0, %v320
    %v322 = vrot.slane %v277, %v321
    %v323 = vlaneseq
    %v324 = vshrl.u32 %v323, 7
    %v325 = vsub.s32 0, %v324
    %v326 = vrot.slane %v278, %v325
    %vm327 = vcmask 293888
    %v329 = vsel %vm327, %v116, 0
    %v332 = vsel %vm327, %v121, 0
    %v335 = vsel %vm327, %v126, 0
    %v338 = vsel %vm327, %v131, 0
    %vm340 = vcmask 1043456
    %v342 = vsel %vm340, %v182, 0
    %v345 = vsel %vm340, %v183, 0
    %v348 = vsel %vm340, %v184, 0
    %v351 = vsel %vm340, %v185, 0
    %v354 = vsel %vm340, %v186, 0
    %v357 = vsel %vm340, %v187, 0
    %v360 = vsel %vm340, %v188, 0
    %v363 = vsel %vm340, %v189, 0
    %v366 = vsel %vm340, %v190, 0
    %v369 = vsel %vm340, %v191, 0
    %v372 = vsel %vm340, %v192, 0
    %v375 = vsel %vm340, %v193, 0
    %377 = vmatprep.subr.mxu0 0.0
    %378 = vmatpush1.msra.mxu0 0.0
    %379 = vmatprep.subr.mxu0 0.0
    %380 = vmatpush1.msra.mxu0 0.0
    %381 = vmatprep.subr.mxu0 0.0
    %382 = vmatpush1.msra.mxu0 0.0
    %383 = vmatprep.subr.mxu0 0.0
    %384 = vmatpush1.msra.mxu0 0.0
    %385 = vmatprep.subr.mxu0 0.0
    %386 = vmatpush1.msra.mxu0 0.0
    %387 = vmatprep.subr.mxu0 0.0
    %388 = vmatpush1.msra.mxu0 0.0
    %389 = vmatprep.subr.mxu0 0.0
    %390 = vmatpush1.msra.mxu0 0.0
    %391 = vmatprep.subr.mxu0 0.0
    %392 = vmatpush1.msra.mxu0 0.0
    %393 = vmatprep.subr.mxu0 0.0
    %394 = vmatpush1.msra.mxu0 0.0
    %395 = vmatprep.subr.mxu0 0.0
    %396 = vmatpush1.msra.mxu0 0.0
    %397 = vmatprep.subr.mxu0 0.0
    %398 = vmatpush1.msra.mxu0 0.0
    %399 = vmatprep.subr.mxu0 %v345
    %400 = vmatpush1.msra.mxu0 %v342
    %401 = vmatprep.subr.mxu0 %v171
    %402 = vmatpush1.msra.mxu0 %v170
    %403 = vmatprep.subr.mxu0 %v159
    %404 = vmatpush1.msra.mxu0 %v158
    %405 = vmatprep.subr.mxu0 %v147
    %406 = vmatpush1.msra.mxu0 %v146
    %407 = vmatprep.subr.mxu0 %v135
    %408 = vmatpush1.msra.mxu0 %v134
    %409 = vmatprep.subr.mxu0 0.0
    %410 = vmatpush2.msra.mxu0 0.0
    %411 = vmatprep.subr.mxu0 0.0
    %412 = vmatpush2.msra.mxu0 0.0
    %413 = vmatprep.subr.mxu0 0.0
    %414 = vmatpush2.msra.mxu0 0.0
    %415 = vmatprep.subr.mxu0 0.0
    %416 = vmatpush2.msra.mxu0 0.0
    %417 = vmatprep.subr.mxu0 0.0
    %418 = vmatpush2.msra.mxu0 0.0
    %419 = vmatprep.subr.mxu0 0.0
    %420 = vmatpush2.msra.mxu0 0.0
    %421 = vmatprep.subr.mxu0 0.0
    %422 = vmatpush2.msra.mxu0 0.0
    %423 = vmatprep.subr.mxu0 0.0
    %424 = vmatpush2.msra.mxu0 0.0
    %425 = vmatprep.subr.mxu0 0.0
    %426 = vmatpush2.msra.mxu0 0.0
    %427 = vmatprep.subr.mxu0 0.0
    %428 = vmatpush2.msra.mxu0 0.0
    %429 = vmatprep.subr.mxu0 0.0
    %430 = vmatpush2.msra.mxu0 0.0
    %431 = vmatprep.subr.mxu0 0.0
    %432 = vmatpush2.msra.mxu0 0.0
    %433 = vmatprep.subr.mxu0 0.0
    %434 = vmatpush2.msra.mxu0 0.0
    %435 = vmatprep.subr.mxu0 0.0
    %436 = vmatpush2.msra.mxu0 0.0
    %437 = vmatprep.subr.mxu0 0.0
    %438 = vmatpush2.msra.mxu0 0.0
    %439 = vmatprep.subr.mxu0 0.0
    %440 = vmatpush2.msra.mxu0 0.0
    %441 = vmatprep.mubr.f32.mxu0 0.0
    %442 = vmatmul.mubr.f32.gmra.mxu0 %v329
    %v443 = vpop.f32.mrf.mxu0
    %v444 = vadd.f32 %v282, %v443
    %v445 = vpop.f32.mrf.mxu0
    %v446 = vadd.f32 %v286, %v445
    %447 = vmatprep.mubr.f32.mxu0 0.0
    %448 = vmatmul.mubr.f32.gmra.mxu0 %v332
    %v449 = vpop.f32.mrf.mxu0
    %v450 = vadd.f32 %v282, %v449
    %v451 = vpop.f32.mrf.mxu0
    %v452 = vadd.f32 %v286, %v451
    %453 = vmatprep.mubr.f32.mxu0 0.0
    %454 = vmatmul.mubr.f32.gmra.mxu0 %v335
    %v455 = vpop.f32.mrf.mxu0
    %v456 = vadd.f32 %v282, %v455
    %v457 = vpop.f32.mrf.mxu0
    %v458 = vadd.f32 %v286, %v457
    %459 = vmatprep.mubr.f32.mxu0 0.0
    %460 = vmatmul.mubr.f32.gmra.mxu0 %v338
    %v461 = vpop.f32.mrf.mxu0
    %v462 = vadd.f32 %v282, %v461
    %v463 = vpop.f32.mrf.mxu0
    %v464 = vadd.f32 %v286, %v463
    %465 = vdwg.mxu0
    %466 = vmatprep.subr.mxu0 0.0
    %467 = vmatpush1.msra.mxu0 0.0
    %468 = vmatprep.subr.mxu0 0.0
    %469 = vmatpush1.msra.mxu0 0.0
    %470 = vmatprep.subr.mxu0 0.0
    %471 = vmatpush1.msra.mxu0 0.0
    %472 = vmatprep.subr.mxu0 0.0
    %473 = vmatpush1.msra.mxu0 0.0
    %474 = vmatprep.subr.mxu0 0.0
    %475 = vmatpush1.msra.mxu0 0.0
    %476 = vmatprep.subr.mxu0 0.0
    %477 = vmatpush1.msra.mxu0 0.0
    %478 = vmatprep.subr.mxu0 0.0
    %479 = vmatpush1.msra.mxu0 0.0
    %480 = vmatprep.subr.mxu0 0.0
    %481 = vmatpush1.msra.mxu0 0.0
    %482 = vmatprep.subr.mxu0 0.0
    %483 = vmatpush1.msra.mxu0 0.0
    %484 = vmatprep.subr.mxu0 0.0
    %485 = vmatpush1.msra.mxu0 0.0
    %486 = vmatprep.subr.mxu0 0.0
    %487 = vmatpush1.msra.mxu0 0.0
    %488 = vmatprep.subr.mxu0 %v351
    %489 = vmatpush1.msra.mxu0 %v348
    %490 = vmatprep.subr.mxu0 %v173
    %491 = vmatpush1.msra.mxu0 %v172
    %492 = vmatprep.subr.mxu0 %v161
    %493 = vmatpush1.msra.mxu0 %v160
    %494 = vmatprep.subr.mxu0 %v149
    %495 = vmatpush1.msra.mxu0 %v148
    %496 = vmatprep.subr.mxu0 %v137
    %497 = vmatpush1.msra.mxu0 %v136
    %498 = vmatprep.subr.mxu0 0.0
    %499 = vmatpush2.msra.mxu0 0.0
    %500 = vmatprep.subr.mxu0 0.0
    %501 = vmatpush2.msra.mxu0 0.0
    %502 = vmatprep.subr.mxu0 0.0
    %503 = vmatpush2.msra.mxu0 0.0
    %504 = vmatprep.subr.mxu0 0.0
    %505 = vmatpush2.msra.mxu0 0.0
    %506 = vmatprep.subr.mxu0 0.0
    %507 = vmatpush2.msra.mxu0 0.0
    %508 = vmatprep.subr.mxu0 0.0
    %509 = vmatpush2.msra.mxu0 0.0
    %510 = vmatprep.subr.mxu0 0.0
    %511 = vmatpush2.msra.mxu0 0.0
    %512 = vmatprep.subr.mxu0 0.0
    %513 = vmatpush2.msra.mxu0 0.0
    %514 = vmatprep.subr.mxu0 0.0
    %515 = vmatpush2.msra.mxu0 0.0
    %516 = vmatprep.subr.mxu0 0.0
    %517 = vmatpush2.msra.mxu0 0.0
    %518 = vmatprep.subr.mxu0 0.0
    %519 = vmatpush2.msra.mxu0 0.0
    %520 = vmatprep.subr.mxu0 0.0
    %521 = vmatpush2.msra.mxu0 0.0
    %522 = vmatprep.subr.mxu0 0.0
    %523 = vmatpush2.msra.mxu0 0.0
    %524 = vmatprep.subr.mxu0 0.0
    %525 = vmatpush2.msra.mxu0 0.0
    %526 = vmatprep.subr.mxu0 0.0
    %527 = vmatpush2.msra.mxu0 0.0
    %528 = vmatprep.subr.mxu0 0.0
    %529 = vmatpush2.msra.mxu0 0.0
    %530 = vmatprep.mubr.f32.mxu0 0.0
    %531 = vmatmul.mubr.f32.gmra.mxu0 %v329
    %v532 = vpop.f32.mrf.mxu0
    %v533 = vadd.f32 %v290, %v532
    %v534 = vpop.f32.mrf.mxu0
    %v535 = vadd.f32 %v294, %v534
    %536 = vmatprep.mubr.f32.mxu0 0.0
    %537 = vmatmul.mubr.f32.gmra.mxu0 %v332
    %v538 = vpop.f32.mrf.mxu0
    %v539 = vadd.f32 %v290, %v538
    %v540 = vpop.f32.mrf.mxu0
    %v541 = vadd.f32 %v294, %v540
    %542 = vmatprep.mubr.f32.mxu0 0.0
    %543 = vmatmul.mubr.f32.gmra.mxu0 %v335
    %v544 = vpop.f32.mrf.mxu0
    %v545 = vadd.f32 %v290, %v544
    %v546 = vpop.f32.mrf.mxu0
    %v547 = vadd.f32 %v294, %v546
    %548 = vmatprep.mubr.f32.mxu0 0.0
    %549 = vmatmul.mubr.f32.gmra.mxu0 %v338
    %v550 = vpop.f32.mrf.mxu0
    %v551 = vadd.f32 %v290, %v550
    %v552 = vpop.f32.mrf.mxu0
    %v553 = vadd.f32 %v294, %v552
    %554 = vdwg.mxu0
    %555 = vmatprep.subr.mxu0 0.0
    %556 = vmatpush1.msra.mxu0 0.0
    %557 = vmatprep.subr.mxu0 0.0
    %558 = vmatpush1.msra.mxu0 0.0
    %559 = vmatprep.subr.mxu0 0.0
    %560 = vmatpush1.msra.mxu0 0.0
    %561 = vmatprep.subr.mxu0 0.0
    %562 = vmatpush1.msra.mxu0 0.0
    %563 = vmatprep.subr.mxu0 0.0
    %564 = vmatpush1.msra.mxu0 0.0
    %565 = vmatprep.subr.mxu0 0.0
    %566 = vmatpush1.msra.mxu0 0.0
    %567 = vmatprep.subr.mxu0 0.0
    %568 = vmatpush1.msra.mxu0 0.0
    %569 = vmatprep.subr.mxu0 0.0
    %570 = vmatpush1.msra.mxu0 0.0
    %571 = vmatprep.subr.mxu0 0.0
    %572 = vmatpush1.msra.mxu0 0.0
    %573 = vmatprep.subr.mxu0 0.0
    %574 = vmatpush1.msra.mxu0 0.0
    %575 = vmatprep.subr.mxu0 0.0
    %576 = vmatpush1.msra.mxu0 0.0
    %577 = vmatprep.subr.mxu0 %v357
    %578 = vmatpush1.msra.mxu0 %v354
    %579 = vmatprep.subr.mxu0 %v175
    %580 = vmatpush1.msra.mxu0 %v174
    %581 = vmatprep.subr.mxu0 %v163
    %582 = vmatpush1.msra.mxu0 %v162
    %583 = vmatprep.subr.mxu0 %v151
    %584 = vmatpush1.msra.mxu0 %v150
    %585 = vmatprep.subr.mxu0 %v139
    %586 = vmatpush1.msra.mxu0 %v138
    %587 = vmatprep.subr.mxu0 0.0
    %588 = vmatpush2.msra.mxu0 0.0
    %589 = vmatprep.subr.mxu0 0.0
    %590 = vmatpush2.msra.mxu0 0.0
    %591 = vmatprep.subr.mxu0 0.0
    %592 = vmatpush2.msra.mxu0 0.0
    %593 = vmatprep.subr.mxu0 0.0
    %594 = vmatpush2.msra.mxu0 0.0
    %595 = vmatprep.subr.mxu0 0.0
    %596 = vmatpush2.msra.mxu0 0.0
    %597 = vmatprep.subr.mxu0 0.0
    %598 = vmatpush2.msra.mxu0 0.0
    %599 = vmatprep.subr.mxu0 0.0
    %600 = vmatpush2.msra.mxu0 0.0
    %601 = vmatprep.subr.mxu0 0.0
    %602 = vmatpush2.msra.mxu0 0.0
    %603 = vmatprep.subr.mxu0 0.0
    %604 = vmatpush2.msra.mxu0 0.0
    %605 = vmatprep.subr.mxu0 0.0
    %606 = vmatpush2.msra.mxu0 0.0
    %607 = vmatprep.subr.mxu0 0.0
    %608 = vmatpush2.msra.mxu0 0.0
    %609 = vmatprep.subr.mxu0 0.0
    %610 = vmatpush2.msra.mxu0 0.0
    %611 = vmatprep.subr.mxu0 0.0
    %612 = vmatpush2.msra.mxu0 0.0
    %613 = vmatprep.subr.mxu0 0.0
    %614 = vmatpush2.msra.mxu0 0.0
    %615 = vmatprep.subr.mxu0 0.0
    %616 = vmatpush2.msra.mxu0 0.0
    %617 = vmatprep.subr.mxu0 0.0
    %618 = vmatpush2.msra.mxu0 0.0
    %619 = vmatprep.mubr.f32.mxu0 0.0
    %620 = vmatmul.mubr.f32.gmra.mxu0 %v329
    %v621 = vpop.f32.mrf.mxu0
    %v622 = vadd.f32 %v298, %v621
    %v623 = vpop.f32.mrf.mxu0
    %v624 = vadd.f32 %v302, %v623
    %625 = vmatprep.mubr.f32.mxu0 0.0
    %626 = vmatmul.mubr.f32.gmra.mxu0 %v332
    %v627 = vpop.f32.mrf.mxu0
    %v628 = vadd.f32 %v298, %v627
    %v629 = vpop.f32.mrf.mxu0
    %v630 = vadd.f32 %v302, %v629
    %631 = vmatprep.mubr.f32.mxu0 0.0
    %632 = vmatmul.mubr.f32.gmra.mxu0 %v335
    %v633 = vpop.f32.mrf.mxu0
    %v634 = vadd.f32 %v298, %v633
    %v635 = vpop.f32.mrf.mxu0
    %v636 = vadd.f32 %v302, %v635
    %637 = vmatprep.mubr.f32.mxu0 0.0
    %638 = vmatmul.mubr.f32.gmra.mxu0 %v338
    %v639 = vpop.f32.mrf.mxu0
    %v640 = vadd.f32 %v298, %v639
    %v641 = vpop.f32.mrf.mxu0
    %v642 = vadd.f32 %v302, %v641
    %643 = vdwg.mxu0
    %644 = vmatprep.subr.mxu0 0.0
    %645 = vmatpush1.msra.mxu0 0.0
    %646 = vmatprep.subr.mxu0 0.0
    %647 = vmatpush1.msra.mxu0 0.0
    %648 = vmatprep.subr.mxu0 0.0
    %649 = vmatpush1.msra.mxu0 0.0
    %650 = vmatprep.subr.mxu0 0.0
    %651 = vmatpush1.msra.mxu0 0.0
    %652 = vmatprep.subr.mxu0 0.0
    %653 = vmatpush1.msra.mxu0 0.0
    %654 = vmatprep.subr.mxu0 0.0
    %655 = vmatpush1.msra.mxu0 0.0
    %656 = vmatprep.subr.mxu0 0.0
    %657 = vmatpush1.msra.mxu0 0.0
    %658 = vmatprep.subr.mxu0 0.0
    %659 = vmatpush1.msra.mxu0 0.0
    %660 = vmatprep.subr.mxu0 0.0
    %661 = vmatpush1.msra.mxu0 0.0
    %662 = vmatprep.subr.mxu0 0.0
    %663 = vmatpush1.msra.mxu0 0.0
    %664 = vmatprep.subr.mxu0 0.0
    %665 = vmatpush1.msra.mxu0 0.0
    %666 = vmatprep.subr.mxu0 %v363
    %667 = vmatpush1.msra.mxu0 %v360
    %668 = vmatprep.subr.mxu0 %v177
    %669 = vmatpush1.msra.mxu0 %v176
    %670 = vmatprep.subr.mxu0 %v165
    %671 = vmatpush1.msra.mxu0 %v164
    %672 = vmatprep.subr.mxu0 %v153
    %673 = vmatpush1.msra.mxu0 %v152
    %674 = vmatprep.subr.mxu0 %v141
    %675 = vmatpush1.msra.mxu0 %v140
    %676 = vmatprep.subr.mxu0 0.0
    %677 = vmatpush2.msra.mxu0 0.0
    %678 = vmatprep.subr.mxu0 0.0
    %679 = vmatpush2.msra.mxu0 0.0
    %680 = vmatprep.subr.mxu0 0.0
    %681 = vmatpush2.msra.mxu0 0.0
    %682 = vmatprep.subr.mxu0 0.0
    %683 = vmatpush2.msra.mxu0 0.0
    %684 = vmatprep.subr.mxu0 0.0
    %685 = vmatpush2.msra.mxu0 0.0
    %686 = vmatprep.subr.mxu0 0.0
    %687 = vmatpush2.msra.mxu0 0.0
    %688 = vmatprep.subr.mxu0 0.0
    %689 = vmatpush2.msra.mxu0 0.0
    %690 = vmatprep.subr.mxu0 0.0
    %691 = vmatpush2.msra.mxu0 0.0
    %692 = vmatprep.subr.mxu0 0.0
    %693 = vmatpush2.msra.mxu0 0.0
    %694 = vmatprep.subr.mxu0 0.0
    %695 = vmatpush2.msra.mxu0 0.0
    %696 = vmatprep.subr.mxu0 0.0
    %697 = vmatpush2.msra.mxu0 0.0
    %698 = vmatprep.subr.mxu0 0.0
    %699 = vmatpush2.msra.mxu0 0.0
    %700 = vmatprep.subr.mxu0 0.0
    %701 = vmatpush2.msra.mxu0 0.0
    %702 = vmatprep.subr.mxu0 0.0
    %703 = vmatpush2.msra.mxu0 0.0
    %704 = vmatprep.subr.mxu0 0.0
    %705 = vmatpush2.msra.mxu0 0.0
    %706 = vmatprep.subr.mxu0 0.0
    %707 = vmatpush2.msra.mxu0 0.0
    %708 = vmatprep.mubr.f32.mxu0 0.0
    %709 = vmatmul.mubr.f32.gmra.mxu0 %v329
    %v710 = vpop.f32.mrf.mxu0
    %v711 = vadd.f32 %v306, %v710
    %v712 = vpop.f32.mrf.mxu0
    %v713 = vadd.f32 %v310, %v712
    %714 = vmatprep.mubr.f32.mxu0 0.0
    %715 = vmatmul.mubr.f32.gmra.mxu0 %v332
    %v716 = vpop.f32.mrf.mxu0
    %v717 = vadd.f32 %v306, %v716
    %v718 = vpop.f32.mrf.mxu0
    %v719 = vadd.f32 %v310, %v718
    %720 = vmatprep.mubr.f32.mxu0 0.0
    %721 = vmatmul.mubr.f32.gmra.mxu0 %v335
    %v722 = vpop.f32.mrf.mxu0
    %v723 = vadd.f32 %v306, %v722
    %v724 = vpop.f32.mrf.mxu0
    %v725 = vadd.f32 %v310, %v724
    %726 = vmatprep.mubr.f32.mxu0 0.0
    %727 = vmatmul.mubr.f32.gmra.mxu0 %v338
    %v728 = vpop.f32.mrf.mxu0
    %v729 = vadd.f32 %v306, %v728
    %v730 = vpop.f32.mrf.mxu0
    %v731 = vadd.f32 %v310, %v730
    %732 = vdwg.mxu0
    %733 = vmatprep.subr.mxu0 0.0
    %734 = vmatpush1.msra.mxu0 0.0
    %735 = vmatprep.subr.mxu0 0.0
    %736 = vmatpush1.msra.mxu0 0.0
    %737 = vmatprep.subr.mxu0 0.0
    %738 = vmatpush1.msra.mxu0 0.0
    %739 = vmatprep.subr.mxu0 0.0
    %740 = vmatpush1.msra.mxu0 0.0
    %741 = vmatprep.subr.mxu0 0.0
    %742 = vmatpush1.msra.mxu0 0.0
    %743 = vmatprep.subr.mxu0 0.0
    %744 = vmatpush1.msra.mxu0 0.0
    %745 = vmatprep.subr.mxu0 0.0
    %746 = vmatpush1.msra.mxu0 0.0
    %747 = vmatprep.subr.mxu0 0.0
    %748 = vmatpush1.msra.mxu0 0.0
    %749 = vmatprep.subr.mxu0 0.0
    %750 = vmatpush1.msra.mxu0 0.0
    %751 = vmatprep.subr.mxu0 0.0
    %752 = vmatpush1.msra.mxu0 0.0
    %753 = vmatprep.subr.mxu0 0.0
    %754 = vmatpush1.msra.mxu0 0.0
    %755 = vmatprep.subr.mxu0 %v369
    %756 = vmatpush1.msra.mxu0 %v366
    %757 = vmatprep.subr.mxu0 %v179
    %758 = vmatpush1.msra.mxu0 %v178
    %759 = vmatprep.subr.mxu0 %v167
    %760 = vmatpush1.msra.mxu0 %v166
    %761 = vmatprep.subr.mxu0 %v155
    %762 = vmatpush1.msra.mxu0 %v154
    %763 = vmatprep.subr.mxu0 %v143
    %764 = vmatpush1.msra.mxu0 %v142
    %765 = vmatprep.subr.mxu0 0.0
    %766 = vmatpush2.msra.mxu0 0.0
    %767 = vmatprep.subr.mxu0 0.0
    %768 = vmatpush2.msra.mxu0 0.0
    %769 = vmatprep.subr.mxu0 0.0
    %770 = vmatpush2.msra.mxu0 0.0
    %771 = vmatprep.subr.mxu0 0.0
    %772 = vmatpush2.msra.mxu0 0.0
    %773 = vmatprep.subr.mxu0 0.0
    %774 = vmatpush2.msra.mxu0 0.0
    %775 = vmatprep.subr.mxu0 0.0
    %776 = vmatpush2.msra.mxu0 0.0
    %777 = vmatprep.subr.mxu0 0.0
    %778 = vmatpush2.msra.mxu0 0.0
    %779 = vmatprep.subr.mxu0 0.0
    %780 = vmatpush2.msra.mxu0 0.0
    %781 = vmatprep.subr.mxu0 0.0
    %782 = vmatpush2.msra.mxu0 0.0
    %783 = vmatprep.subr.mxu0 0.0
    %784 = vmatpush2.msra.mxu0 0.0
    %785 = vmatprep.subr.mxu0 0.0
    %786 = vmatpush2.msra.mxu0 0.0
    %787 = vmatprep.subr.mxu0 0.0
    %788 = vmatpush2.msra.mxu0 0.0
    %789 = vmatprep.subr.mxu0 0.0
    %790 = vmatpush2.msra.mxu0 0.0
    %791 = vmatprep.subr.mxu0 0.0
    %792 = vmatpush2.msra.mxu0 0.0
    %793 = vmatprep.subr.mxu0 0.0
    %794 = vmatpush2.msra.mxu0 0.0
    %795 = vmatprep.subr.mxu0 0.0
    %796 = vmatpush2.msra.mxu0 0.0
    %797 = vmatprep.mubr.f32.mxu0 0.0
    %798 = vmatmul.mubr.f32.gmra.mxu0 %v329
    %v799 = vpop.f32.mrf.mxu0
    %v800 = vadd.f32 %v314, %v799
    %v801 = vpop.f32.mrf.mxu0
    %v802 = vadd.f32 %v318, %v801
    %803 = vmatprep.mubr.f32.mxu0 0.0
    %804 = vmatmul.mubr.f32.gmra.mxu0 %v332
    %v805 = vpop.f32.mrf.mxu0
    %v806 = vadd.f32 %v314, %v805
    %v807 = vpop.f32.mrf.mxu0
    %v808 = vadd.f32 %v318, %v807
    %809 = vmatprep.mubr.f32.mxu0 0.0
    %810 = vmatmul.mubr.f32.gmra.mxu0 %v335
    %v811 = vpop.f32.mrf.mxu0
    %v812 = vadd.f32 %v314, %v811
    %v813 = vpop.f32.mrf.mxu0
    %v814 = vadd.f32 %v318, %v813
    %815 = vmatprep.mubr.f32.mxu0 0.0
    %816 = vmatmul.mubr.f32.gmra.mxu0 %v338
    %v817 = vpop.f32.mrf.mxu0
    %v818 = vadd.f32 %v314, %v817
    %v819 = vpop.f32.mrf.mxu0
    %v820 = vadd.f32 %v318, %v819
    %821 = vdwg.mxu0
    %822 = vmatprep.subr.mxu0 0.0
    %823 = vmatpush1.msra.mxu0 0.0
    %824 = vmatprep.subr.mxu0 0.0
    %825 = vmatpush1.msra.mxu0 0.0
    %826 = vmatprep.subr.mxu0 0.0
    %827 = vmatpush1.msra.mxu0 0.0
    %828 = vmatprep.subr.mxu0 0.0
    %829 = vmatpush1.msra.mxu0 0.0
    %830 = vmatprep.subr.mxu0 0.0
    %831 = vmatpush1.msra.mxu0 0.0
    %832 = vmatprep.subr.mxu0 0.0
    %833 = vmatpush1.msra.mxu0 0.0
    %834 = vmatprep.subr.mxu0 0.0
    %835 = vmatpush1.msra.mxu0 0.0
    %836 = vmatprep.subr.mxu0 0.0
    %837 = vmatpush1.msra.mxu0 0.0
    %838 = vmatprep.subr.mxu0 0.0
    %839 = vmatpush1.msra.mxu0 0.0
    %840 = vmatprep.subr.mxu0 0.0
    %841 = vmatpush1.msra.mxu0 0.0
    %842 = vmatprep.subr.mxu0 0.0
    %843 = vmatpush1.msra.mxu0 0.0
    %844 = vmatprep.subr.mxu0 %v375
    %845 = vmatpush1.msra.mxu0 %v372
    %846 = vmatprep.subr.mxu0 %v181
    %847 = vmatpush1.msra.mxu0 %v180
    %848 = vmatprep.subr.mxu0 %v169
    %849 = vmatpush1.msra.mxu0 %v168
    %850 = vmatprep.subr.mxu0 %v157
    %851 = vmatpush1.msra.mxu0 %v156
    %852 = vmatprep.subr.mxu0 %v145
    %853 = vmatpush1.msra.mxu0 %v144
    %854 = vmatprep.subr.mxu0 0.0
    %855 = vmatpush2.msra.mxu0 0.0
    %856 = vmatprep.subr.mxu0 0.0
    %857 = vmatpush2.msra.mxu0 0.0
    %858 = vmatprep.subr.mxu0 0.0
    %859 = vmatpush2.msra.mxu0 0.0
    %860 = vmatprep.subr.mxu0 0.0
    %861 = vmatpush2.msra.mxu0 0.0
    %862 = vmatprep.subr.mxu0 0.0
    %863 = vmatpush2.msra.mxu0 0.0
    %864 = vmatprep.subr.mxu0 0.0
    %865 = vmatpush2.msra.mxu0 0.0
    %866 = vmatprep.subr.mxu0 0.0
    %867 = vmatpush2.msra.mxu0 0.0
    %868 = vmatprep.subr.mxu0 0.0
    %869 = vmatpush2.msra.mxu0 0.0
    %870 = vmatprep.subr.mxu0 0.0
    %871 = vmatpush2.msra.mxu0 0.0
    %872 = vmatprep.subr.mxu0 0.0
    %873 = vmatpush2.msra.mxu0 0.0
    %874 = vmatprep.subr.mxu0 0.0
    %875 = vmatpush2.msra.mxu0 0.0
    %876 = vmatprep.subr.mxu0 0.0
    %877 = vmatpush2.msra.mxu0 0.0
    %878 = vmatprep.subr.mxu0 0.0
    %879 = vmatpush2.msra.mxu0 0.0
    %880 = vmatprep.subr.mxu0 0.0
    %881 = vmatpush2.msra.mxu0 0.0
    %882 = vmatprep.subr.mxu0 0.0
    %883 = vmatpush2.msra.mxu0 0.0
    %884 = vmatprep.subr.mxu0 0.0
    %885 = vmatpush2.msra.mxu0 0.0
    %886 = vmatprep.mubr.f32.mxu0 0.0
    %887 = vmatmul.mubr.f32.gmra.mxu0 %v329
    %v888 = vpop.f32.mrf.mxu0
    %v889 = vadd.f32 %v322, %v888
    %v890 = vpop.f32.mrf.mxu0
    %v891 = vadd.f32 %v326, %v890
    %892 = vmatprep.mubr.f32.mxu0 0.0
    %893 = vmatmul.mubr.f32.gmra.mxu0 %v332
    %v894 = vpop.f32.mrf.mxu0
    %v895 = vadd.f32 %v322, %v894
    %v896 = vpop.f32.mrf.mxu0
    %v897 = vadd.f32 %v326, %v896
    %898 = vmatprep.mubr.f32.mxu0 0.0
    %899 = vmatmul.mubr.f32.gmra.mxu0 %v335
    %v900 = vpop.f32.mrf.mxu0
    %v901 = vadd.f32 %v322, %v900
    %v902 = vpop.f32.mrf.mxu0
    %v903 = vadd.f32 %v326, %v902
    %904 = vmatprep.mubr.f32.mxu0 0.0
    %905 = vmatmul.mubr.f32.gmra.mxu0 %v338
    %v906 = vpop.f32.mrf.mxu0
    %v907 = vadd.f32 %v322, %v906
    %v908 = vpop.f32.mrf.mxu0
    %v909 = vadd.f32 %v326, %v908
    %910 = vdwg.mxu0
    %911 = vmatprep.subr.mxu0 0.0
    %912 = vmatpush1.xpose.msra.mxu0 0.0
    %913 = vmatprep.subr.mxu0 0.0
    %914 = vmatpush1.xpose.msra.mxu0 0.0
    %915 = vmatprep.subr.mxu0 0.0
    %916 = vmatpush1.xpose.msra.mxu0 0.0
    %917 = vmatprep.subr.mxu0 0.0
    %918 = vmatpush1.xpose.msra.mxu0 0.0
    %919 = vmatprep.subr.mxu0 0.0
    %920 = vmatpush1.xpose.msra.mxu0 0.0
    %921 = vmatprep.subr.mxu0 0.0
    %922 = vmatpush1.xpose.msra.mxu0 0.0
    %923 = vmatprep.subr.mxu0 0.0
    %924 = vmatpush1.xpose.msra.mxu0 0.0
    %925 = vmatprep.subr.mxu0 0.0
    %926 = vmatpush1.xpose.msra.mxu0 0.0
    %927 = vmatprep.subr.mxu0 0.0
    %928 = vmatpush1.xpose.msra.mxu0 0.0
    %929 = vmatprep.subr.mxu0 0.0
    %930 = vmatpush1.xpose.msra.mxu0 0.0
    %931 = vmatprep.subr.mxu0 0.0
    %932 = vmatpush1.xpose.msra.mxu0 0.0
    %933 = vmatprep.subr.mxu0 0.0
    %934 = vmatpush1.xpose.msra.mxu0 0.0
    %935 = vmatprep.subr.mxu0 0.0
    %936 = vmatpush1.xpose.msra.mxu0 0.0
    %937 = vmatprep.subr.mxu0 0.0
    %938 = vmatpush1.xpose.msra.mxu0 0.0
    %939 = vmatprep.subr.mxu0 0.0
    %940 = vmatpush1.xpose.msra.mxu0 %v628
    %941 = vmatprep.subr.mxu0 0.0
    %942 = vmatpush1.xpose.msra.mxu0 %v622
    %943 = vmatprep.subr.mxu0 0.0
    %944 = vmatpush2.xpose.msra.mxu0 0.0
    %945 = vmatprep.subr.mxu0 0.0
    %946 = vmatpush2.xpose.msra.mxu0 0.0
    %947 = vmatprep.subr.mxu0 0.0
    %948 = vmatpush2.xpose.msra.mxu0 0.0
    %949 = vmatprep.subr.mxu0 0.0
    %950 = vmatpush2.xpose.msra.mxu0 0.0
    %951 = vmatprep.subr.mxu0 0.0
    %952 = vmatpush2.xpose.msra.mxu0 0.0
    %953 = vmatprep.subr.mxu0 0.0
    %954 = vmatpush2.xpose.msra.mxu0 0.0
    %955 = vmatprep.subr.mxu0 0.0
    %956 = vmatpush2.xpose.msra.mxu0 0.0
    %957 = vmatprep.subr.mxu0 0.0
    %958 = vmatpush2.xpose.msra.mxu0 0.0
    %959 = vmatprep.subr.mxu0 0.0
    %960 = vmatpush2.xpose.msra.mxu0 0.0
    %961 = vmatprep.subr.mxu0 0.0
    %962 = vmatpush2.xpose.msra.mxu0 0.0
    %963 = vmatprep.subr.mxu0 0.0
    %964 = vmatpush2.xpose.msra.mxu0 0.0
    %965 = vmatprep.subr.mxu0 0.0
    %966 = vmatpush2.xpose.msra.mxu0 0.0
    %967 = vmatprep.subr.mxu0 0.0
    %968 = vmatpush2.xpose.msra.mxu0 0.0
    %969 = vmatprep.subr.mxu0 0.0
    %970 = vmatpush2.xpose.msra.mxu0 0.0
    %971 = vmatprep.subr.mxu0 0.0
    %972 = vmatpush2.xpose.msra.mxu0 0.0
    %973 = vmatprep.subr.mxu0 0.0
    %974 = vmatpush2.xpose.msra.mxu0 0.0
    %975 = vmatprep.mubr.f32.mxu0 0.0
    %976 = vmatmul.mubr.f32.gmra.mxu0 %v444
    %v977 = vpop.f32.mrf.mxu0
    %v978 = vadd.f32 0.0, %v977
    %v979 = vpop.f32.mrf.mxu0
    %980 = vmatprep.mubr.f32.mxu0 0.0
    %981 = vmatmul.mubr.f32.gmra.mxu0 %v450
    %v982 = vpop.f32.mrf.mxu0
    %v983 = vadd.f32 0.0, %v982
    %v984 = vpop.f32.mrf.mxu0
    %985 = vdwg.mxu0
    %986 = vmatprep.subr.mxu0 0.0
    %987 = vmatpush1.xpose.msra.mxu0 0.0
    %988 = vmatprep.subr.mxu0 0.0
    %989 = vmatpush1.xpose.msra.mxu0 0.0
    %990 = vmatprep.subr.mxu0 0.0
    %991 = vmatpush1.xpose.msra.mxu0 0.0
    %992 = vmatprep.subr.mxu0 0.0
    %993 = vmatpush1.xpose.msra.mxu0 0.0
    %994 = vmatprep.subr.mxu0 0.0
    %995 = vmatpush1.xpose.msra.mxu0 0.0
    %996 = vmatprep.subr.mxu0 0.0
    %997 = vmatpush1.xpose.msra.mxu0 0.0
    %998 = vmatprep.subr.mxu0 0.0
    %999 = vmatpush1.xpose.msra.mxu0 0.0
    %1000 = vmatprep.subr.mxu0 0.0
    %1001 = vmatpush1.xpose.msra.mxu0 0.0
    %1002 = vmatprep.subr.mxu0 0.0
    %1003 = vmatpush1.xpose.msra.mxu0 0.0
    %1004 = vmatprep.subr.mxu0 0.0
    %1005 = vmatpush1.xpose.msra.mxu0 0.0
    %1006 = vmatprep.subr.mxu0 0.0
    %1007 = vmatpush1.xpose.msra.mxu0 0.0
    %1008 = vmatprep.subr.mxu0 0.0
    %1009 = vmatpush1.xpose.msra.mxu0 0.0
    %1010 = vmatprep.subr.mxu0 0.0
    %1011 = vmatpush1.xpose.msra.mxu0 0.0
    %1012 = vmatprep.subr.mxu0 0.0
    %1013 = vmatpush1.xpose.msra.mxu0 0.0
    %1014 = vmatprep.subr.mxu0 0.0
    %1015 = vmatpush1.xpose.msra.mxu0 %v640
    %1016 = vmatprep.subr.mxu0 0.0
    %1017 = vmatpush1.xpose.msra.mxu0 %v634
    %1018 = vmatprep.subr.mxu0 0.0
    %1019 = vmatpush2.xpose.msra.mxu0 0.0
    %1020 = vmatprep.subr.mxu0 0.0
    %1021 = vmatpush2.xpose.msra.mxu0 0.0
    %1022 = vmatprep.subr.mxu0 0.0
    %1023 = vmatpush2.xpose.msra.mxu0 0.0
    %1024 = vmatprep.subr.mxu0 0.0
    %1025 = vmatpush2.xpose.msra.mxu0 0.0
    %1026 = vmatprep.subr.mxu0 0.0
    %1027 = vmatpush2.xpose.msra.mxu0 0.0
    %1028 = vmatprep.subr.mxu0 0.0
    %1029 = vmatpush2.xpose.msra.mxu0 0.0
    %1030 = vmatprep.subr.mxu0 0.0
    %1031 = vmatpush2.xpose.msra.mxu0 0.0
    %1032 = vmatprep.subr.mxu0 0.0
    %1033 = vmatpush2.xpose.msra.mxu0 0.0
    %1034 = vmatprep.subr.mxu0 0.0
    %1035 = vmatpush2.xpose.msra.mxu0 0.0
    %1036 = vmatprep.subr.mxu0 0.0
    %1037 = vmatpush2.xpose.msra.mxu0 0.0
    %1038 = vmatprep.subr.mxu0 0.0
    %1039 = vmatpush2.xpose.msra.mxu0 0.0
    %1040 = vmatprep.subr.mxu0 0.0
    %1041 = vmatpush2.xpose.msra.mxu0 0.0
    %1042 = vmatprep.subr.mxu0 0.0
    %1043 = vmatpush2.xpose.msra.mxu0 0.0
    %1044 = vmatprep.subr.mxu0 0.0
    %1045 = vmatpush2.xpose.msra.mxu0 0.0
    %1046 = vmatprep.subr.mxu0 0.0
    %1047 = vmatpush2.xpose.msra.mxu0 0.0
    %1048 = vmatprep.subr.mxu0 0.0
    %1049 = vmatpush2.xpose.msra.mxu0 0.0
    %1050 = vmatprep.mubr.f32.mxu0 0.0
    %1051 = vmatmul.mubr.f32.gmra.mxu0 %v456
    %v1052 = vpop.f32.mrf.mxu0
    %v1053 = vadd.f32 0.0, %v1052
    %v1054 = vpop.f32.mrf.mxu0
    %1055 = vmatprep.mubr.f32.mxu0 0.0
    %1056 = vmatmul.mubr.f32.gmra.mxu0 %v462
    %v1057 = vpop.f32.mrf.mxu0
    %v1058 = vadd.f32 0.0, %v1057
    %v1059 = vpop.f32.mrf.mxu0
    %1060 = vdwg.mxu0
    %vm1061 = vcmask 130048
    %v1062 = vsel %vm1061, %v978, -inf
    %1063 = vmax.xlane.f32.xlu0 %v1062
    %v1064 = vpop.xlane.xlu0 %1063
    %v1065 = vsel %vm1061, %v983, -inf
    %1066 = vmax.xlane.f32.xlu0 %v1065
    %v1067 = vpop.xlane.xlu0 %1066
    %v1068 = vsel %vm1061, %v1053, -inf
    %1069 = vmax.xlane.f32.xlu0 %v1068
    %v1070 = vpop.xlane.xlu0 %1069
    %v1071 = vsel %vm1061, %v1058, -inf
    %1072 = vmax.xlane.f32.xlu0 %v1071
    %v1073 = vpop.xlane.xlu0 %1072
    %v1074 = vsub.f32 %v978, %v1064
    %v1075 = vsub.f32 %v983, %v1067
    %v1076 = vsub.f32 %v1053, %v1070
    %v1077 = vsub.f32 %v1058, %v1073
    %v1078 = vmul.f32 %v1074, 1.442695
    %v1079 = vpow.pop %v1078
    %v1080 = vmul.f32 %v1075, 1.442695
    %v1081 = vpow.pop %v1080
    %v1082 = vmul.f32 %v1076, 1.442695
    %v1083 = vpow.pop %v1082
    %v1084 = vmul.f32 %v1077, 1.442695
    %v1085 = vpow.pop %v1084
    %v1086 = vsel %vm1061, %v1079, 0.0
    %1087 = vadd.xlane.f32.xlu0 %v1086
    %v1088 = vpop.xlane.xlu0 %1087
    %v1089 = vsel %vm1061, %v1081, 0.0
    %1090 = vadd.xlane.f32.xlu0 %v1089
    %v1091 = vpop.xlane.xlu0 %1090
    %v1092 = vsel %vm1061, %v1083, 0.0
    %1093 = vadd.xlane.f32.xlu0 %v1092
    %v1094 = vpop.xlane.xlu0 %1093
    %v1095 = vsel %vm1061, %v1085, 0.0
    %1096 = vadd.xlane.f32.xlu0 %v1095
    %v1097 = vpop.xlane.xlu0 %1096
    %v1098 = vrcp.pop %v1088
    %v1099 = vrcp.pop %v1091
    %v1100 = vrcp.pop %v1094
    %v1101 = vrcp.pop %v1097
    %v1102 = vmul.f32 %v1079, %v1098
    %v1103 = vmul.f32 %v1081, %v1099
    %v1104 = vmul.f32 %v1083, %v1100
    %v1105 = vmul.f32 %v1085, %v1101
    %v1107 = vsel %vm1061, %v1102, 0
    %v1110 = vsel %vm1061, %v1103, 0
    %1112 = vmatprep.subr.mxu0 0.0
    %1113 = vmatpush1.msra.mxu0 0.0
    %1114 = vmatprep.subr.mxu0 0.0
    %1115 = vmatpush1.msra.mxu0 0.0
    %1116 = vmatprep.subr.mxu0 0.0
    %1117 = vmatpush1.msra.mxu0 0.0
    %1118 = vmatprep.subr.mxu0 0.0
    %1119 = vmatpush1.msra.mxu0 0.0
    %1120 = vmatprep.subr.mxu0 0.0
    %1121 = vmatpush1.msra.mxu0 0.0
    %1122 = vmatprep.subr.mxu0 0.0
    %1123 = vmatpush1.msra.mxu0 0.0
    %1124 = vmatprep.subr.mxu0 0.0
    %1125 = vmatpush1.msra.mxu0 0.0
    %1126 = vmatprep.subr.mxu0 0.0
    %1127 = vmatpush1.msra.mxu0 0.0
    %1128 = vmatprep.subr.mxu0 0.0
    %1129 = vmatpush1.msra.mxu0 0.0
    %1130 = vmatprep.subr.mxu0 0.0
    %1131 = vmatpush1.msra.mxu0 0.0
    %1132 = vmatprep.subr.mxu0 0.0
    %1133 = vmatpush1.msra.mxu0 0.0
    %1134 = vmatprep.subr.mxu0 0.0
    %1135 = vmatpush1.msra.mxu0 0.0
    %1136 = vmatprep.subr.mxu0 0.0
    %1137 = vmatpush1.msra.mxu0 0.0
    %1138 = vmatprep.subr.mxu0 0.0
    %1139 = vmatpush1.msra.mxu0 0.0
    %1140 = vmatprep.subr.mxu0 0.0
    %1141 = vmatpush1.msra.mxu0 %v806
    %1142 = vmatprep.subr.mxu0 0.0
    %1143 = vmatpush1.msra.mxu0 %v800
    %1144 = vmatprep.subr.mxu0 0.0
    %1145 = vmatpush2.msra.mxu0 0.0
    %1146 = vmatprep.subr.mxu0 0.0
    %1147 = vmatpush2.msra.mxu0 0.0
    %1148 = vmatprep.subr.mxu0 0.0
    %1149 = vmatpush2.msra.mxu0 0.0
    %1150 = vmatprep.subr.mxu0 0.0
    %1151 = vmatpush2.msra.mxu0 0.0
    %1152 = vmatprep.subr.mxu0 0.0
    %1153 = vmatpush2.msra.mxu0 0.0
    %1154 = vmatprep.subr.mxu0 0.0
    %1155 = vmatpush2.msra.mxu0 0.0
    %1156 = vmatprep.subr.mxu0 0.0
    %1157 = vmatpush2.msra.mxu0 0.0
    %1158 = vmatprep.subr.mxu0 0.0
    %1159 = vmatpush2.msra.mxu0 0.0
    %1160 = vmatprep.subr.mxu0 0.0
    %1161 = vmatpush2.msra.mxu0 0.0
    %1162 = vmatprep.subr.mxu0 0.0
    %1163 = vmatpush2.msra.mxu0 0.0
    %1164 = vmatprep.subr.mxu0 0.0
    %1165 = vmatpush2.msra.mxu0 0.0
    %1166 = vmatprep.subr.mxu0 0.0
    %1167 = vmatpush2.msra.mxu0 0.0
    %1168 = vmatprep.subr.mxu0 0.0
    %1169 = vmatpush2.msra.mxu0 0.0
    %1170 = vmatprep.subr.mxu0 0.0
    %1171 = vmatpush2.msra.mxu0 0.0
    %1172 = vmatprep.subr.mxu0 0.0
    %1173 = vmatpush2.msra.mxu0 0.0
    %1174 = vmatprep.subr.mxu0 0.0
    %1175 = vmatpush2.msra.mxu0 0.0
    %1176 = vmatprep.mubr.f32.mxu0 0.0
    %1177 = vmatmul.mubr.f32.gmra.mxu0 %v1107
    %v1178 = vpop.f32.mrf.mxu0
    %v1179 = vadd.f32 0.0, %v1178
    %v1180 = vpop.f32.mrf.mxu0
    %1181 = vmatprep.mubr.f32.mxu0 0.0
    %1182 = vmatmul.mubr.f32.gmra.mxu0 %v1110
    %v1183 = vpop.f32.mrf.mxu0
    %v1184 = vadd.f32 0.0, %v1183
    %v1185 = vpop.f32.mrf.mxu0
    %1186 = vdwg.mxu0
    %v1188 = vsel %vm1061, %v1104, 0
    %v1191 = vsel %vm1061, %v1105, 0
    %1193 = vmatprep.subr.mxu0 0.0
    %1194 = vmatpush1.msra.mxu0 0.0
    %1195 = vmatprep.subr.mxu0 0.0
    %1196 = vmatpush1.msra.mxu0 0.0
    %1197 = vmatprep.subr.mxu0 0.0
    %1198 = vmatpush1.msra.mxu0 0.0
    %1199 = vmatprep.subr.mxu0 0.0
    %1200 = vmatpush1.msra.mxu0 0.0
    %1201 = vmatprep.subr.mxu0 0.0
    %1202 = vmatpush1.msra.mxu0 0.0
    %1203 = vmatprep.subr.mxu0 0.0
    %1204 = vmatpush1.msra.mxu0 0.0
    %1205 = vmatprep.subr.mxu0 0.0
    %1206 = vmatpush1.msra.mxu0 0.0
    %1207 = vmatprep.subr.mxu0 0.0
    %1208 = vmatpush1.msra.mxu0 0.0
    %1209 = vmatprep.subr.mxu0 0.0
    %1210 = vmatpush1.msra.mxu0 0.0
    %1211 = vmatprep.subr.mxu0 0.0
    %1212 = vmatpush1.msra.mxu0 0.0
    %1213 = vmatprep.subr.mxu0 0.0
    %1214 = vmatpush1.msra.mxu0 0.0
    %1215 = vmatprep.subr.mxu0 0.0
    %1216 = vmatpush1.msra.mxu0 0.0
    %1217 = vmatprep.subr.mxu0 0.0
    %1218 = vmatpush1.msra.mxu0 0.0
    %1219 = vmatprep.subr.mxu0 0.0
    %1220 = vmatpush1.msra.mxu0 0.0
    %1221 = vmatprep.subr.mxu0 0.0
    %1222 = vmatpush1.msra.mxu0 %v818
    %1223 = vmatprep.subr.mxu0 0.0
    %1224 = vmatpush1.msra.mxu0 %v812
    %1225 = vmatprep.subr.mxu0 0.0
    %1226 = vmatpush2.msra.mxu0 0.0
    %1227 = vmatprep.subr.mxu0 0.0
    %1228 = vmatpush2.msra.mxu0 0.0
    %1229 = vmatprep.subr.mxu0 0.0
    %1230 = vmatpush2.msra.mxu0 0.0
    %1231 = vmatprep.subr.mxu0 0.0
    %1232 = vmatpush2.msra.mxu0 0.0
    %1233 = vmatprep.subr.mxu0 0.0
    %1234 = vmatpush2.msra.mxu0 0.0
    %1235 = vmatprep.subr.mxu0 0.0
    %1236 = vmatpush2.msra.mxu0 0.0
    %1237 = vmatprep.subr.mxu0 0.0
    %1238 = vmatpush2.msra.mxu0 0.0
    %1239 = vmatprep.subr.mxu0 0.0
    %1240 = vmatpush2.msra.mxu0 0.0
    %1241 = vmatprep.subr.mxu0 0.0
    %1242 = vmatpush2.msra.mxu0 0.0
    %1243 = vmatprep.subr.mxu0 0.0
    %1244 = vmatpush2.msra.mxu0 0.0
    %1245 = vmatprep.subr.mxu0 0.0
    %1246 = vmatpush2.msra.mxu0 0.0
    %1247 = vmatprep.subr.mxu0 0.0
    %1248 = vmatpush2.msra.mxu0 0.0
    %1249 = vmatprep.subr.mxu0 0.0
    %1250 = vmatpush2.msra.mxu0 0.0
    %1251 = vmatprep.subr.mxu0 0.0
    %1252 = vmatpush2.msra.mxu0 0.0
    %1253 = vmatprep.subr.mxu0 0.0
    %1254 = vmatpush2.msra.mxu0 0.0
    %1255 = vmatprep.subr.mxu0 0.0
    %1256 = vmatpush2.msra.mxu0 0.0
    %1257 = vmatprep.mubr.f32.mxu0 0.0
    %1258 = vmatmul.mubr.f32.gmra.mxu0 %v1188
    %v1259 = vpop.f32.mrf.mxu0
    %v1260 = vadd.f32 0.0, %v1259
    %v1261 = vpop.f32.mrf.mxu0
    %1262 = vmatprep.mubr.f32.mxu0 0.0
    %1263 = vmatmul.mubr.f32.gmra.mxu0 %v1191
    %v1264 = vpop.f32.mrf.mxu0
    %v1265 = vadd.f32 0.0, %v1264
    %v1266 = vpop.f32.mrf.mxu0
    %1267 = vdwg.mxu0
    %1268 = vmatprep.subr.mxu0 0.0
    %1269 = vmatpush1.xpose.msra.mxu0 0.0
    %1270 = vmatprep.subr.mxu0 0.0
    %1271 = vmatpush1.xpose.msra.mxu0 0.0
    %1272 = vmatprep.subr.mxu0 0.0
    %1273 = vmatpush1.xpose.msra.mxu0 0.0
    %1274 = vmatprep.subr.mxu0 0.0
    %1275 = vmatpush1.xpose.msra.mxu0 0.0
    %1276 = vmatprep.subr.mxu0 0.0
    %1277 = vmatpush1.xpose.msra.mxu0 0.0
    %1278 = vmatprep.subr.mxu0 0.0
    %1279 = vmatpush1.xpose.msra.mxu0 0.0
    %1280 = vmatprep.subr.mxu0 0.0
    %1281 = vmatpush1.xpose.msra.mxu0 0.0
    %1282 = vmatprep.subr.mxu0 0.0
    %1283 = vmatpush1.xpose.msra.mxu0 0.0
    %1284 = vmatprep.subr.mxu0 0.0
    %1285 = vmatpush1.xpose.msra.mxu0 0.0
    %1286 = vmatprep.subr.mxu0 0.0
    %1287 = vmatpush1.xpose.msra.mxu0 0.0
    %1288 = vmatprep.subr.mxu0 0.0
    %1289 = vmatpush1.xpose.msra.mxu0 0.0
    %1290 = vmatprep.subr.mxu0 0.0
    %1291 = vmatpush1.xpose.msra.mxu0 0.0
    %1292 = vmatprep.subr.mxu0 0.0
    %1293 = vmatpush1.xpose.msra.mxu0 0.0
    %1294 = vmatprep.subr.mxu0 0.0
    %1295 = vmatpush1.xpose.msra.mxu0 0.0
    %1296 = vmatprep.subr.mxu0 0.0
    %1297 = vmatpush1.xpose.msra.mxu0 %v630
    %1298 = vmatprep.subr.mxu0 0.0
    %1299 = vmatpush1.xpose.msra.mxu0 %v624
    %1300 = vmatprep.subr.mxu0 0.0
    %1301 = vmatpush2.xpose.msra.mxu0 0.0
    %1302 = vmatprep.subr.mxu0 0.0
    %1303 = vmatpush2.xpose.msra.mxu0 0.0
    %1304 = vmatprep.subr.mxu0 0.0
    %1305 = vmatpush2.xpose.msra.mxu0 0.0
    %1306 = vmatprep.subr.mxu0 0.0
    %1307 = vmatpush2.xpose.msra.mxu0 0.0
    %1308 = vmatprep.subr.mxu0 0.0
    %1309 = vmatpush2.xpose.msra.mxu0 0.0
    %1310 = vmatprep.subr.mxu0 0.0
    %1311 = vmatpush2.xpose.msra.mxu0 0.0
    %1312 = vmatprep.subr.mxu0 0.0
    %1313 = vmatpush2.xpose.msra.mxu0 0.0
    %1314 = vmatprep.subr.mxu0 0.0
    %1315 = vmatpush2.xpose.msra.mxu0 0.0
    %1316 = vmatprep.subr.mxu0 0.0
    %1317 = vmatpush2.xpose.msra.mxu0 0.0
    %1318 = vmatprep.subr.mxu0 0.0
    %1319 = vmatpush2.xpose.msra.mxu0 0.0
    %1320 = vmatprep.subr.mxu0 0.0
    %1321 = vmatpush2.xpose.msra.mxu0 0.0
    %1322 = vmatprep.subr.mxu0 0.0
    %1323 = vmatpush2.xpose.msra.mxu0 0.0
    %1324 = vmatprep.subr.mxu0 0.0
    %1325 = vmatpush2.xpose.msra.mxu0 0.0
    %1326 = vmatprep.subr.mxu0 0.0
    %1327 = vmatpush2.xpose.msra.mxu0 0.0
    %1328 = vmatprep.subr.mxu0 0.0
    %1329 = vmatpush2.xpose.msra.mxu0 0.0
    %1330 = vmatprep.subr.mxu0 0.0
    %1331 = vmatpush2.xpose.msra.mxu0 0.0
    %1332 = vmatprep.mubr.f32.mxu0 0.0
    %1333 = vmatmul.mubr.f32.gmra.mxu0 %v446
    %v1334 = vpop.f32.mrf.mxu0
    %v1335 = vadd.f32 0.0, %v1334
    %v1336 = vpop.f32.mrf.mxu0
    %1337 = vmatprep.mubr.f32.mxu0 0.0
    %1338 = vmatmul.mubr.f32.gmra.mxu0 %v452
    %v1339 = vpop.f32.mrf.mxu0
    %v1340 = vadd.f32 0.0, %v1339
    %v1341 = vpop.f32.mrf.mxu0
    %1342 = vdwg.mxu0
    %1343 = vmatprep.subr.mxu0 0.0
    %1344 = vmatpush1.xpose.msra.mxu0 0.0
    %1345 = vmatprep.subr.mxu0 0.0
    %1346 = vmatpush1.xpose.msra.mxu0 0.0
    %1347 = vmatprep.subr.mxu0 0.0
    %1348 = vmatpush1.xpose.msra.mxu0 0.0
    %1349 = vmatprep.subr.mxu0 0.0
    %1350 = vmatpush1.xpose.msra.mxu0 0.0
    %1351 = vmatprep.subr.mxu0 0.0
    %1352 = vmatpush1.xpose.msra.mxu0 0.0
    %1353 = vmatprep.subr.mxu0 0.0
    %1354 = vmatpush1.xpose.msra.mxu0 0.0
    %1355 = vmatprep.subr.mxu0 0.0
    %1356 = vmatpush1.xpose.msra.mxu0 0.0
    %1357 = vmatprep.subr.mxu0 0.0
    %1358 = vmatpush1.xpose.msra.mxu0 0.0
    %1359 = vmatprep.subr.mxu0 0.0
    %1360 = vmatpush1.xpose.msra.mxu0 0.0
    %1361 = vmatprep.subr.mxu0 0.0
    %1362 = vmatpush1.xpose.msra.mxu0 0.0
    %1363 = vmatprep.subr.mxu0 0.0
    %1364 = vmatpush1.xpose.msra.mxu0 0.0
    %1365 = vmatprep.subr.mxu0 0.0
    %1366 = vmatpush1.xpose.msra.mxu0 0.0
    %1367 = vmatprep.subr.mxu0 0.0
    %1368 = vmatpush1.xpose.msra.mxu0 0.0
    %1369 = vmatprep.subr.mxu0 0.0
    %1370 = vmatpush1.xpose.msra.mxu0 0.0
    %1371 = vmatprep.subr.mxu0 0.0
    %1372 = vmatpush1.xpose.msra.mxu0 %v642
    %1373 = vmatprep.subr.mxu0 0.0
    %1374 = vmatpush1.xpose.msra.mxu0 %v636
    %1375 = vmatprep.subr.mxu0 0.0
    %1376 = vmatpush2.xpose.msra.mxu0 0.0
    %1377 = vmatprep.subr.mxu0 0.0
    %1378 = vmatpush2.xpose.msra.mxu0 0.0
    %1379 = vmatprep.subr.mxu0 0.0
    %1380 = vmatpush2.xpose.msra.mxu0 0.0
    %1381 = vmatprep.subr.mxu0 0.0
    %1382 = vmatpush2.xpose.msra.mxu0 0.0
    %1383 = vmatprep.subr.mxu0 0.0
    %1384 = vmatpush2.xpose.msra.mxu0 0.0
    %1385 = vmatprep.subr.mxu0 0.0
    %1386 = vmatpush2.xpose.msra.mxu0 0.0
    %1387 = vmatprep.subr.mxu0 0.0
    %1388 = vmatpush2.xpose.msra.mxu0 0.0
    %1389 = vmatprep.subr.mxu0 0.0
    %1390 = vmatpush2.xpose.msra.mxu0 0.0
    %1391 = vmatprep.subr.mxu0 0.0
    %1392 = vmatpush2.xpose.msra.mxu0 0.0
    %1393 = vmatprep.subr.mxu0 0.0
    %1394 = vmatpush2.xpose.msra.mxu0 0.0
    %1395 = vmatprep.subr.mxu0 0.0
    %1396 = vmatpush2.xpose.msra.mxu0 0.0
    %1397 = vmatprep.subr.mxu0 0.0
    %1398 = vmatpush2.xpose.msra.mxu0 0.0
    %1399 = vmatprep.subr.mxu0 0.0
    %1400 = vmatpush2.xpose.msra.mxu0 0.0
    %1401 = vmatprep.subr.mxu0 0.0
    %1402 = vmatpush2.xpose.msra.mxu0 0.0
    %1403 = vmatprep.subr.mxu0 0.0
    %1404 = vmatpush2.xpose.msra.mxu0 0.0
    %1405 = vmatprep.subr.mxu0 0.0
    %1406 = vmatpush2.xpose.msra.mxu0 0.0
    %1407 = vmatprep.mubr.f32.mxu0 0.0
    %1408 = vmatmul.mubr.f32.gmra.mxu0 %v458
    %v1409 = vpop.f32.mrf.mxu0
    %v1410 = vadd.f32 0.0, %v1409
    %v1411 = vpop.f32.mrf.mxu0
    %1412 = vmatprep.mubr.f32.mxu0 0.0
    %1413 = vmatmul.mubr.f32.gmra.mxu0 %v464
    %v1414 = vpop.f32.mrf.mxu0
    %v1415 = vadd.f32 0.0, %v1414
    %v1416 = vpop.f32.mrf.mxu0
    %1417 = vdwg.mxu0
    %v1418 = vsel %vm1061, %v1335, -inf
    %1419 = vmax.xlane.f32.xlu0 %v1418
    %v1420 = vpop.xlane.xlu0 %1419
    %v1421 = vsel %vm1061, %v1340, -inf
    %1422 = vmax.xlane.f32.xlu0 %v1421
    %v1423 = vpop.xlane.xlu0 %1422
    %v1424 = vsel %vm1061, %v1410, -inf
    %1425 = vmax.xlane.f32.xlu0 %v1424
    %v1426 = vpop.xlane.xlu0 %1425
    %v1427 = vsel %vm1061, %v1415, -inf
    %1428 = vmax.xlane.f32.xlu0 %v1427
    %v1429 = vpop.xlane.xlu0 %1428
    %v1430 = vsub.f32 %v1335, %v1420
    %v1431 = vsub.f32 %v1340, %v1423
    %v1432 = vsub.f32 %v1410, %v1426
    %v1433 = vsub.f32 %v1415, %v1429
    %v1434 = vmul.f32 %v1430, 1.442695
    %v1435 = vpow.pop %v1434
    %v1436 = vmul.f32 %v1431, 1.442695
    %v1437 = vpow.pop %v1436
    %v1438 = vmul.f32 %v1432, 1.442695
    %v1439 = vpow.pop %v1438
    %v1440 = vmul.f32 %v1433, 1.442695
    %v1441 = vpow.pop %v1440
    %v1442 = vsel %vm1061, %v1435, 0.0
    %1443 = vadd.xlane.f32.xlu0 %v1442
    %v1444 = vpop.xlane.xlu0 %1443
    %v1445 = vsel %vm1061, %v1437, 0.0
    %1446 = vadd.xlane.f32.xlu0 %v1445
    %v1447 = vpop.xlane.xlu0 %1446
    %v1448 = vsel %vm1061, %v1439, 0.0
    %1449 = vadd.xlane.f32.xlu0 %v1448
    %v1450 = vpop.xlane.xlu0 %1449
    %v1451 = vsel %vm1061, %v1441, 0.0
    %1452 = vadd.xlane.f32.xlu0 %v1451
    %v1453 = vpop.xlane.xlu0 %1452
    %v1454 = vrcp.pop %v1444
    %v1455 = vrcp.pop %v1447
    %v1456 = vrcp.pop %v1450
    %v1457 = vrcp.pop %v1453
    %v1458 = vmul.f32 %v1435, %v1454
    %v1459 = vmul.f32 %v1437, %v1455
    %v1460 = vmul.f32 %v1439, %v1456
    %v1461 = vmul.f32 %v1441, %v1457
    %v1463 = vsel %vm1061, %v1458, 0
    %v1466 = vsel %vm1061, %v1459, 0
    %1468 = vmatprep.subr.mxu0 0.0
    %1469 = vmatpush1.msra.mxu0 0.0
    %1470 = vmatprep.subr.mxu0 0.0
    %1471 = vmatpush1.msra.mxu0 0.0
    %1472 = vmatprep.subr.mxu0 0.0
    %1473 = vmatpush1.msra.mxu0 0.0
    %1474 = vmatprep.subr.mxu0 0.0
    %1475 = vmatpush1.msra.mxu0 0.0
    %1476 = vmatprep.subr.mxu0 0.0
    %1477 = vmatpush1.msra.mxu0 0.0
    %1478 = vmatprep.subr.mxu0 0.0
    %1479 = vmatpush1.msra.mxu0 0.0
    %1480 = vmatprep.subr.mxu0 0.0
    %1481 = vmatpush1.msra.mxu0 0.0
    %1482 = vmatprep.subr.mxu0 0.0
    %1483 = vmatpush1.msra.mxu0 0.0
    %1484 = vmatprep.subr.mxu0 0.0
    %1485 = vmatpush1.msra.mxu0 0.0
    %1486 = vmatprep.subr.mxu0 0.0
    %1487 = vmatpush1.msra.mxu0 0.0
    %1488 = vmatprep.subr.mxu0 0.0
    %1489 = vmatpush1.msra.mxu0 0.0
    %1490 = vmatprep.subr.mxu0 0.0
    %1491 = vmatpush1.msra.mxu0 0.0
    %1492 = vmatprep.subr.mxu0 0.0
    %1493 = vmatpush1.msra.mxu0 0.0
    %1494 = vmatprep.subr.mxu0 0.0
    %1495 = vmatpush1.msra.mxu0 0.0
    %1496 = vmatprep.subr.mxu0 0.0
    %1497 = vmatpush1.msra.mxu0 %v808
    %1498 = vmatprep.subr.mxu0 0.0
    %1499 = vmatpush1.msra.mxu0 %v802
    %1500 = vmatprep.subr.mxu0 0.0
    %1501 = vmatpush2.msra.mxu0 0.0
    %1502 = vmatprep.subr.mxu0 0.0
    %1503 = vmatpush2.msra.mxu0 0.0
    %1504 = vmatprep.subr.mxu0 0.0
    %1505 = vmatpush2.msra.mxu0 0.0
    %1506 = vmatprep.subr.mxu0 0.0
    %1507 = vmatpush2.msra.mxu0 0.0
    %1508 = vmatprep.subr.mxu0 0.0
    %1509 = vmatpush2.msra.mxu0 0.0
    %1510 = vmatprep.subr.mxu0 0.0
    %1511 = vmatpush2.msra.mxu0 0.0
    %1512 = vmatprep.subr.mxu0 0.0
    %1513 = vmatpush2.msra.mxu0 0.0
    %1514 = vmatprep.subr.mxu0 0.0
    %1515 = vmatpush2.msra.mxu0 0.0
    %1516 = vmatprep.subr.mxu0 0.0
    %1517 = vmatpush2.msra.mxu0 0.0
    %1518 = vmatprep.subr.mxu0 0.0
    %1519 = vmatpush2.msra.mxu0 0.0
    %1520 = vmatprep.subr.mxu0 0.0
    %1521 = vmatpush2.msra.mxu0 0.0
    %1522 = vmatprep.subr.mxu0 0.0
    %1523 = vmatpush2.msra.mxu0 0.0
    %1524 = vmatprep.subr.mxu0 0.0
    %1525 = vmatpush2.msra.mxu0 0.0
    %1526 = vmatprep.subr.mxu0 0.0
    %1527 = vmatpush2.msra.mxu0 0.0
    %1528 = vmatprep.subr.mxu0 0.0
    %1529 = vmatpush2.msra.mxu0 0.0
    %1530 = vmatprep.subr.mxu0 0.0
    %1531 = vmatpush2.msra.mxu0 0.0
    %1532 = vmatprep.mubr.f32.mxu0 0.0
    %1533 = vmatmul.mubr.f32.gmra.mxu0 %v1463
    %v1534 = vpop.f32.mrf.mxu0
    %v1535 = vadd.f32 0.0, %v1534
    %v1536 = vpop.f32.mrf.mxu0
    %1537 = vmatprep.mubr.f32.mxu0 0.0
    %1538 = vmatmul.mubr.f32.gmra.mxu0 %v1466
    %v1539 = vpop.f32.mrf.mxu0
    %v1540 = vadd.f32 0.0, %v1539
    %v1541 = vpop.f32.mrf.mxu0
    %1542 = vdwg.mxu0
    %v1544 = vsel %vm1061, %v1460, 0
    %v1547 = vsel %vm1061, %v1461, 0
    %1549 = vmatprep.subr.mxu0 0.0
    %1550 = vmatpush1.msra.mxu0 0.0
    %1551 = vmatprep.subr.mxu0 0.0
    %1552 = vmatpush1.msra.mxu0 0.0
    %1553 = vmatprep.subr.mxu0 0.0
    %1554 = vmatpush1.msra.mxu0 0.0
    %1555 = vmatprep.subr.mxu0 0.0
    %1556 = vmatpush1.msra.mxu0 0.0
    %1557 = vmatprep.subr.mxu0 0.0
    %1558 = vmatpush1.msra.mxu0 0.0
    %1559 = vmatprep.subr.mxu0 0.0
    %1560 = vmatpush1.msra.mxu0 0.0
    %1561 = vmatprep.subr.mxu0 0.0
    %1562 = vmatpush1.msra.mxu0 0.0
    %1563 = vmatprep.subr.mxu0 0.0
    %1564 = vmatpush1.msra.mxu0 0.0
    %1565 = vmatprep.subr.mxu0 0.0
    %1566 = vmatpush1.msra.mxu0 0.0
    %1567 = vmatprep.subr.mxu0 0.0
    %1568 = vmatpush1.msra.mxu0 0.0
    %1569 = vmatprep.subr.mxu0 0.0
    %1570 = vmatpush1.msra.mxu0 0.0
    %1571 = vmatprep.subr.mxu0 0.0
    %1572 = vmatpush1.msra.mxu0 0.0
    %1573 = vmatprep.subr.mxu0 0.0
    %1574 = vmatpush1.msra.mxu0 0.0
    %1575 = vmatprep.subr.mxu0 0.0
    %1576 = vmatpush1.msra.mxu0 0.0
    %1577 = vmatprep.subr.mxu0 0.0
    %1578 = vmatpush1.msra.mxu0 %v820
    %1579 = vmatprep.subr.mxu0 0.0
    %1580 = vmatpush1.msra.mxu0 %v814
    %1581 = vmatprep.subr.mxu0 0.0
    %1582 = vmatpush2.msra.mxu0 0.0
    %1583 = vmatprep.subr.mxu0 0.0
    %1584 = vmatpush2.msra.mxu0 0.0
    %1585 = vmatprep.subr.mxu0 0.0
    %1586 = vmatpush2.msra.mxu0 0.0
    %1587 = vmatprep.subr.mxu0 0.0
    %1588 = vmatpush2.msra.mxu0 0.0
    %1589 = vmatprep.subr.mxu0 0.0
    %1590 = vmatpush2.msra.mxu0 0.0
    %1591 = vmatprep.subr.mxu0 0.0
    %1592 = vmatpush2.msra.mxu0 0.0
    %1593 = vmatprep.subr.mxu0 0.0
    %1594 = vmatpush2.msra.mxu0 0.0
    %1595 = vmatprep.subr.mxu0 0.0
    %1596 = vmatpush2.msra.mxu0 0.0
    %1597 = vmatprep.subr.mxu0 0.0
    %1598 = vmatpush2.msra.mxu0 0.0
    %1599 = vmatprep.subr.mxu0 0.0
    %1600 = vmatpush2.msra.mxu0 0.0
    %1601 = vmatprep.subr.mxu0 0.0
    %1602 = vmatpush2.msra.mxu0 0.0
    %1603 = vmatprep.subr.mxu0 0.0
    %1604 = vmatpush2.msra.mxu0 0.0
    %1605 = vmatprep.subr.mxu0 0.0
    %1606 = vmatpush2.msra.mxu0 0.0
    %1607 = vmatprep.subr.mxu0 0.0
    %1608 = vmatpush2.msra.mxu0 0.0
    %1609 = vmatprep.subr.mxu0 0.0
    %1610 = vmatpush2.msra.mxu0 0.0
    %1611 = vmatprep.subr.mxu0 0.0
    %1612 = vmatpush2.msra.mxu0 0.0
    %1613 = vmatprep.mubr.f32.mxu0 0.0
    %1614 = vmatmul.mubr.f32.gmra.mxu0 %v1544
    %v1615 = vpop.f32.mrf.mxu0
    %v1616 = vadd.f32 0.0, %v1615
    %v1617 = vpop.f32.mrf.mxu0
    %1618 = vmatprep.mubr.f32.mxu0 0.0
    %1619 = vmatmul.mubr.f32.gmra.mxu0 %v1547
    %v1620 = vpop.f32.mrf.mxu0
    %v1621 = vadd.f32 0.0, %v1620
    %v1622 = vpop.f32.mrf.mxu0
    %1623 = vdwg.mxu0
    %1624 = vmatprep.subr.mxu0 0.0
    %1625 = vmatpush1.xpose.msra.mxu0 0.0
    %1626 = vmatprep.subr.mxu0 0.0
    %1627 = vmatpush1.xpose.msra.mxu0 0.0
    %1628 = vmatprep.subr.mxu0 0.0
    %1629 = vmatpush1.xpose.msra.mxu0 0.0
    %1630 = vmatprep.subr.mxu0 0.0
    %1631 = vmatpush1.xpose.msra.mxu0 0.0
    %1632 = vmatprep.subr.mxu0 0.0
    %1633 = vmatpush1.xpose.msra.mxu0 0.0
    %1634 = vmatprep.subr.mxu0 0.0
    %1635 = vmatpush1.xpose.msra.mxu0 0.0
    %1636 = vmatprep.subr.mxu0 0.0
    %1637 = vmatpush1.xpose.msra.mxu0 0.0
    %1638 = vmatprep.subr.mxu0 0.0
    %1639 = vmatpush1.xpose.msra.mxu0 0.0
    %1640 = vmatprep.subr.mxu0 0.0
    %1641 = vmatpush1.xpose.msra.mxu0 0.0
    %1642 = vmatprep.subr.mxu0 0.0
    %1643 = vmatpush1.xpose.msra.mxu0 0.0
    %1644 = vmatprep.subr.mxu0 0.0
    %1645 = vmatpush1.xpose.msra.mxu0 0.0
    %1646 = vmatprep.subr.mxu0 0.0
    %1647 = vmatpush1.xpose.msra.mxu0 0.0
    %1648 = vmatprep.subr.mxu0 0.0
    %1649 = vmatpush1.xpose.msra.mxu0 0.0
    %1650 = vmatprep.subr.mxu0 0.0
    %1651 = vmatpush1.xpose.msra.mxu0 0.0
    %1652 = vmatprep.subr.mxu0 0.0
    %1653 = vmatpush1.xpose.msra.mxu0 %v717
    %1654 = vmatprep.subr.mxu0 0.0
    %1655 = vmatpush1.xpose.msra.mxu0 %v711
    %1656 = vmatprep.subr.mxu0 0.0
    %1657 = vmatpush2.xpose.msra.mxu0 0.0
    %1658 = vmatprep.subr.mxu0 0.0
    %1659 = vmatpush2.xpose.msra.mxu0 0.0
    %1660 = vmatprep.subr.mxu0 0.0
    %1661 = vmatpush2.xpose.msra.mxu0 0.0
    %1662 = vmatprep.subr.mxu0 0.0
    %1663 = vmatpush2.xpose.msra.mxu0 0.0
    %1664 = vmatprep.subr.mxu0 0.0
    %1665 = vmatpush2.xpose.msra.mxu0 0.0
    %1666 = vmatprep.subr.mxu0 0.0
    %1667 = vmatpush2.xpose.msra.mxu0 0.0
    %1668 = vmatprep.subr.mxu0 0.0
    %1669 = vmatpush2.xpose.msra.mxu0 0.0
    %1670 = vmatprep.subr.mxu0 0.0
    %1671 = vmatpush2.xpose.msra.mxu0 0.0
    %1672 = vmatprep.subr.mxu0 0.0
    %1673 = vmatpush2.xpose.msra.mxu0 0.0
    %1674 = vmatprep.subr.mxu0 0.0
    %1675 = vmatpush2.xpose.msra.mxu0 0.0
    %1676 = vmatprep.subr.mxu0 0.0
    %1677 = vmatpush2.xpose.msra.mxu0 0.0
    %1678 = vmatprep.subr.mxu0 0.0
    %1679 = vmatpush2.xpose.msra.mxu0 0.0
    %1680 = vmatprep.subr.mxu0 0.0
    %1681 = vmatpush2.xpose.msra.mxu0 0.0
    %1682 = vmatprep.subr.mxu0 0.0
    %1683 = vmatpush2.xpose.msra.mxu0 0.0
    %1684 = vmatprep.subr.mxu0 0.0
    %1685 = vmatpush2.xpose.msra.mxu0 0.0
    %1686 = vmatprep.subr.mxu0 0.0
    %1687 = vmatpush2.xpose.msra.mxu0 0.0
    %1688 = vmatprep.mubr.f32.mxu0 0.0
    %1689 = vmatmul.mubr.f32.gmra.mxu0 %v533
    %v1690 = vpop.f32.mrf.mxu0
    %v1691 = vadd.f32 0.0, %v1690
    %v1692 = vpop.f32.mrf.mxu0
    %1693 = vmatprep.mubr.f32.mxu0 0.0
    %1694 = vmatmul.mubr.f32.gmra.mxu0 %v539
    %v1695 = vpop.f32.mrf.mxu0
    %v1696 = vadd.f32 0.0, %v1695
    %v1697 = vpop.f32.mrf.mxu0
    %1698 = vdwg.mxu0
    %1699 = vmatprep.subr.mxu0 0.0
    %1700 = vmatpush1.xpose.msra.mxu0 0.0
    %1701 = vmatprep.subr.mxu0 0.0
    %1702 = vmatpush1.xpose.msra.mxu0 0.0
    %1703 = vmatprep.subr.mxu0 0.0
    %1704 = vmatpush1.xpose.msra.mxu0 0.0
    %1705 = vmatprep.subr.mxu0 0.0
    %1706 = vmatpush1.xpose.msra.mxu0 0.0
    %1707 = vmatprep.subr.mxu0 0.0
    %1708 = vmatpush1.xpose.msra.mxu0 0.0
    %1709 = vmatprep.subr.mxu0 0.0
    %1710 = vmatpush1.xpose.msra.mxu0 0.0
    %1711 = vmatprep.subr.mxu0 0.0
    %1712 = vmatpush1.xpose.msra.mxu0 0.0
    %1713 = vmatprep.subr.mxu0 0.0
    %1714 = vmatpush1.xpose.msra.mxu0 0.0
    %1715 = vmatprep.subr.mxu0 0.0
    %1716 = vmatpush1.xpose.msra.mxu0 0.0
    %1717 = vmatprep.subr.mxu0 0.0
    %1718 = vmatpush1.xpose.msra.mxu0 0.0
    %1719 = vmatprep.subr.mxu0 0.0
    %1720 = vmatpush1.xpose.msra.mxu0 0.0
    %1721 = vmatprep.subr.mxu0 0.0
    %1722 = vmatpush1.xpose.msra.mxu0 0.0
    %1723 = vmatprep.subr.mxu0 0.0
    %1724 = vmatpush1.xpose.msra.mxu0 0.0
    %1725 = vmatprep.subr.mxu0 0.0
    %1726 = vmatpush1.xpose.msra.mxu0 0.0
    %1727 = vmatprep.subr.mxu0 0.0
    %1728 = vmatpush1.xpose.msra.mxu0 %v729
    %1729 = vmatprep.subr.mxu0 0.0
    %1730 = vmatpush1.xpose.msra.mxu0 %v723
    %1731 = vmatprep.subr.mxu0 0.0
    %1732 = vmatpush2.xpose.msra.mxu0 0.0
    %1733 = vmatprep.subr.mxu0 0.0
    %1734 = vmatpush2.xpose.msra.mxu0 0.0
    %1735 = vmatprep.subr.mxu0 0.0
    %1736 = vmatpush2.xpose.msra.mxu0 0.0
    %1737 = vmatprep.subr.mxu0 0.0
    %1738 = vmatpush2.xpose.msra.mxu0 0.0
    %1739 = vmatprep.subr.mxu0 0.0
    %1740 = vmatpush2.xpose.msra.mxu0 0.0
    %1741 = vmatprep.subr.mxu0 0.0
    %1742 = vmatpush2.xpose.msra.mxu0 0.0
    %1743 = vmatprep.subr.mxu0 0.0
    %1744 = vmatpush2.xpose.msra.mxu0 0.0
    %1745 = vmatprep.subr.mxu0 0.0
    %1746 = vmatpush2.xpose.msra.mxu0 0.0
    %1747 = vmatprep.subr.mxu0 0.0
    %1748 = vmatpush2.xpose.msra.mxu0 0.0
    %1749 = vmatprep.subr.mxu0 0.0
    %1750 = vmatpush2.xpose.msra.mxu0 0.0
    %1751 = vmatprep.subr.mxu0 0.0
    %1752 = vmatpush2.xpose.msra.mxu0 0.0
    %1753 = vmatprep.subr.mxu0 0.0
    %1754 = vmatpush2.xpose.msra.mxu0 0.0
    %1755 = vmatprep.subr.mxu0 0.0
    %1756 = vmatpush2.xpose.msra.mxu0 0.0
    %1757 = vmatprep.subr.mxu0 0.0
    %1758 = vmatpush2.xpose.msra.mxu0 0.0
    %1759 = vmatprep.subr.mxu0 0.0
    %1760 = vmatpush2.xpose.msra.mxu0 0.0
    %1761 = vmatprep.subr.mxu0 0.0
    %1762 = vmatpush2.xpose.msra.mxu0 0.0
    %1763 = vmatprep.mubr.f32.mxu0 0.0
    %1764 = vmatmul.mubr.f32.gmra.mxu0 %v545
    %v1765 = vpop.f32.mrf.mxu0
    %v1766 = vadd.f32 0.0, %v1765
    %v1767 = vpop.f32.mrf.mxu0
    %1768 = vmatprep.mubr.f32.mxu0 0.0
    %1769 = vmatmul.mubr.f32.gmra.mxu0 %v551
    %v1770 = vpop.f32.mrf.mxu0
    %v1771 = vadd.f32 0.0, %v1770
    %v1772 = vpop.f32.mrf.mxu0
    %1773 = vdwg.mxu0
    %v1774 = vsel %vm1061, %v1691, -inf
    %1775 = vmax.xlane.f32.xlu0 %v1774
    %v1776 = vpop.xlane.xlu0 %1775
    %v1777 = vsel %vm1061, %v1696, -inf
    %1778 = vmax.xlane.f32.xlu0 %v1777
    %v1779 = vpop.xlane.xlu0 %1778
    %v1780 = vsel %vm1061, %v1766, -inf
    %1781 = vmax.xlane.f32.xlu0 %v1780
    %v1782 = vpop.xlane.xlu0 %1781
    %v1783 = vsel %vm1061, %v1771, -inf
    %1784 = vmax.xlane.f32.xlu0 %v1783
    %v1785 = vpop.xlane.xlu0 %1784
    %v1786 = vsub.f32 %v1691, %v1776
    %v1787 = vsub.f32 %v1696, %v1779
    %v1788 = vsub.f32 %v1766, %v1782
    %v1789 = vsub.f32 %v1771, %v1785
    %v1790 = vmul.f32 %v1786, 1.442695
    %v1791 = vpow.pop %v1790
    %v1792 = vmul.f32 %v1787, 1.442695
    %v1793 = vpow.pop %v1792
    %v1794 = vmul.f32 %v1788, 1.442695
    %v1795 = vpow.pop %v1794
    %v1796 = vmul.f32 %v1789, 1.442695
    %v1797 = vpow.pop %v1796
    %v1798 = vsel %vm1061, %v1791, 0.0
    %1799 = vadd.xlane.f32.xlu0 %v1798
    %v1800 = vpop.xlane.xlu0 %1799
    %v1801 = vsel %vm1061, %v1793, 0.0
    %1802 = vadd.xlane.f32.xlu0 %v1801
    %v1803 = vpop.xlane.xlu0 %1802
    %v1804 = vsel %vm1061, %v1795, 0.0
    %1805 = vadd.xlane.f32.xlu0 %v1804
    %v1806 = vpop.xlane.xlu0 %1805
    %v1807 = vsel %vm1061, %v1797, 0.0
    %1808 = vadd.xlane.f32.xlu0 %v1807
    %v1809 = vpop.xlane.xlu0 %1808
    %v1810 = vrcp.pop %v1800
    %v1811 = vrcp.pop %v1803
    %v1812 = vrcp.pop %v1806
    %v1813 = vrcp.pop %v1809
    %v1814 = vmul.f32 %v1791, %v1810
    %v1815 = vmul.f32 %v1793, %v1811
    %v1816 = vmul.f32 %v1795, %v1812
    %v1817 = vmul.f32 %v1797, %v1813
    %v1819 = vsel %vm1061, %v1814, 0
    %v1822 = vsel %vm1061, %v1815, 0
    %1824 = vmatprep.subr.mxu0 0.0
    %1825 = vmatpush1.msra.mxu0 0.0
    %1826 = vmatprep.subr.mxu0 0.0
    %1827 = vmatpush1.msra.mxu0 0.0
    %1828 = vmatprep.subr.mxu0 0.0
    %1829 = vmatpush1.msra.mxu0 0.0
    %1830 = vmatprep.subr.mxu0 0.0
    %1831 = vmatpush1.msra.mxu0 0.0
    %1832 = vmatprep.subr.mxu0 0.0
    %1833 = vmatpush1.msra.mxu0 0.0
    %1834 = vmatprep.subr.mxu0 0.0
    %1835 = vmatpush1.msra.mxu0 0.0
    %1836 = vmatprep.subr.mxu0 0.0
    %1837 = vmatpush1.msra.mxu0 0.0
    %1838 = vmatprep.subr.mxu0 0.0
    %1839 = vmatpush1.msra.mxu0 0.0
    %1840 = vmatprep.subr.mxu0 0.0
    %1841 = vmatpush1.msra.mxu0 0.0
    %1842 = vmatprep.subr.mxu0 0.0
    %1843 = vmatpush1.msra.mxu0 0.0
    %1844 = vmatprep.subr.mxu0 0.0
    %1845 = vmatpush1.msra.mxu0 0.0
    %1846 = vmatprep.subr.mxu0 0.0
    %1847 = vmatpush1.msra.mxu0 0.0
    %1848 = vmatprep.subr.mxu0 0.0
    %1849 = vmatpush1.msra.mxu0 0.0
    %1850 = vmatprep.subr.mxu0 0.0
    %1851 = vmatpush1.msra.mxu0 0.0
    %1852 = vmatprep.subr.mxu0 0.0
    %1853 = vmatpush1.msra.mxu0 %v895
    %1854 = vmatprep.subr.mxu0 0.0
    %1855 = vmatpush1.msra.mxu0 %v889
    %1856 = vmatprep.subr.mxu0 0.0
    %1857 = vmatpush2.msra.mxu0 0.0
    %1858 = vmatprep.subr.mxu0 0.0
    %1859 = vmatpush2.msra.mxu0 0.0
    %1860 = vmatprep.subr.mxu0 0.0
    %1861 = vmatpush2.msra.mxu0 0.0
    %1862 = vmatprep.subr.mxu0 0.0
    %1863 = vmatpush2.msra.mxu0 0.0
    %1864 = vmatprep.subr.mxu0 0.0
    %1865 = vmatpush2.msra.mxu0 0.0
    %1866 = vmatprep.subr.mxu0 0.0
    %1867 = vmatpush2.msra.mxu0 0.0
    %1868 = vmatprep.subr.mxu0 0.0
    %1869 = vmatpush2.msra.mxu0 0.0
    %1870 = vmatprep.subr.mxu0 0.0
    %1871 = vmatpush2.msra.mxu0 0.0
    %1872 = vmatprep.subr.mxu0 0.0
    %1873 = vmatpush2.msra.mxu0 0.0
    %1874 = vmatprep.subr.mxu0 0.0
    %1875 = vmatpush2.msra.mxu0 0.0
    %1876 = vmatprep.subr.mxu0 0.0
    %1877 = vmatpush2.msra.mxu0 0.0
    %1878 = vmatprep.subr.mxu0 0.0
    %1879 = vmatpush2.msra.mxu0 0.0
    %1880 = vmatprep.subr.mxu0 0.0
    %1881 = vmatpush2.msra.mxu0 0.0
    %1882 = vmatprep.subr.mxu0 0.0
    %1883 = vmatpush2.msra.mxu0 0.0
    %1884 = vmatprep.subr.mxu0 0.0
    %1885 = vmatpush2.msra.mxu0 0.0
    %1886 = vmatprep.subr.mxu0 0.0
    %1887 = vmatpush2.msra.mxu0 0.0
    %1888 = vmatprep.mubr.f32.mxu0 0.0
    %1889 = vmatmul.mubr.f32.gmra.mxu0 %v1819
    %v1890 = vpop.f32.mrf.mxu0
    %v1891 = vadd.f32 0.0, %v1890
    %v1892 = vpop.f32.mrf.mxu0
    %1893 = vmatprep.mubr.f32.mxu0 0.0
    %1894 = vmatmul.mubr.f32.gmra.mxu0 %v1822
    %v1895 = vpop.f32.mrf.mxu0
    %v1896 = vadd.f32 0.0, %v1895
    %v1897 = vpop.f32.mrf.mxu0
    %1898 = vdwg.mxu0
    %v1900 = vsel %vm1061, %v1816, 0
    %v1903 = vsel %vm1061, %v1817, 0
    %1905 = vmatprep.subr.mxu0 0.0
    %1906 = vmatpush1.msra.mxu0 0.0
    %1907 = vmatprep.subr.mxu0 0.0
    %1908 = vmatpush1.msra.mxu0 0.0
    %1909 = vmatprep.subr.mxu0 0.0
    %1910 = vmatpush1.msra.mxu0 0.0
    %1911 = vmatprep.subr.mxu0 0.0
    %1912 = vmatpush1.msra.mxu0 0.0
    %1913 = vmatprep.subr.mxu0 0.0
    %1914 = vmatpush1.msra.mxu0 0.0
    %1915 = vmatprep.subr.mxu0 0.0
    %1916 = vmatpush1.msra.mxu0 0.0
    %1917 = vmatprep.subr.mxu0 0.0
    %1918 = vmatpush1.msra.mxu0 0.0
    %1919 = vmatprep.subr.mxu0 0.0
    %1920 = vmatpush1.msra.mxu0 0.0
    %1921 = vmatprep.subr.mxu0 0.0
    %1922 = vmatpush1.msra.mxu0 0.0
    %1923 = vmatprep.subr.mxu0 0.0
    %1924 = vmatpush1.msra.mxu0 0.0
    %1925 = vmatprep.subr.mxu0 0.0
    %1926 = vmatpush1.msra.mxu0 0.0
    %1927 = vmatprep.subr.mxu0 0.0
    %1928 = vmatpush1.msra.mxu0 0.0
    %1929 = vmatprep.subr.mxu0 0.0
    %1930 = vmatpush1.msra.mxu0 0.0
    %1931 = vmatprep.subr.mxu0 0.0
    %1932 = vmatpush1.msra.mxu0 0.0
    %1933 = vmatprep.subr.mxu0 0.0
    %1934 = vmatpush1.msra.mxu0 %v907
    %1935 = vmatprep.subr.mxu0 0.0
    %1936 = vmatpush1.msra.mxu0 %v901
    %1937 = vmatprep.subr.mxu0 0.0
    %1938 = vmatpush2.msra.mxu0 0.0
    %1939 = vmatprep.subr.mxu0 0.0
    %1940 = vmatpush2.msra.mxu0 0.0
    %1941 = vmatprep.subr.mxu0 0.0
    %1942 = vmatpush2.msra.mxu0 0.0
    %1943 = vmatprep.subr.mxu0 0.0
    %1944 = vmatpush2.msra.mxu0 0.0
    %1945 = vmatprep.subr.mxu0 0.0
    %1946 = vmatpush2.msra.mxu0 0.0
    %1947 = vmatprep.subr.mxu0 0.0
    %1948 = vmatpush2.msra.mxu0 0.0
    %1949 = vmatprep.subr.mxu0 0.0
    %1950 = vmatpush2.msra.mxu0 0.0
    %1951 = vmatprep.subr.mxu0 0.0
    %1952 = vmatpush2.msra.mxu0 0.0
    %1953 = vmatprep.subr.mxu0 0.0
    %1954 = vmatpush2.msra.mxu0 0.0
    %1955 = vmatprep.subr.mxu0 0.0
    %1956 = vmatpush2.msra.mxu0 0.0
    %1957 = vmatprep.subr.mxu0 0.0
    %1958 = vmatpush2.msra.mxu0 0.0
    %1959 = vmatprep.subr.mxu0 0.0
    %1960 = vmatpush2.msra.mxu0 0.0
    %1961 = vmatprep.subr.mxu0 0.0
    %1962 = vmatpush2.msra.mxu0 0.0
    %1963 = vmatprep.subr.mxu0 0.0
    %1964 = vmatpush2.msra.mxu0 0.0
    %1965 = vmatprep.subr.mxu0 0.0
    %1966 = vmatpush2.msra.mxu0 0.0
    %1967 = vmatprep.subr.mxu0 0.0
    %1968 = vmatpush2.msra.mxu0 0.0
    %1969 = vmatprep.mubr.f32.mxu0 0.0
    %1970 = vmatmul.mubr.f32.gmra.mxu0 %v1900
    %v1971 = vpop.f32.mrf.mxu0
    %v1972 = vadd.f32 0.0, %v1971
    %v1973 = vpop.f32.mrf.mxu0
    %1974 = vmatprep.mubr.f32.mxu0 0.0
    %1975 = vmatmul.mubr.f32.gmra.mxu0 %v1903
    %v1976 = vpop.f32.mrf.mxu0
    %v1977 = vadd.f32 0.0, %v1976
    %v1978 = vpop.f32.mrf.mxu0
    %1979 = vdwg.mxu0
    %1980 = vmatprep.subr.mxu0 0.0
    %1981 = vmatpush1.xpose.msra.mxu0 0.0
    %1982 = vmatprep.subr.mxu0 0.0
    %1983 = vmatpush1.xpose.msra.mxu0 0.0
    %1984 = vmatprep.subr.mxu0 0.0
    %1985 = vmatpush1.xpose.msra.mxu0 0.0
    %1986 = vmatprep.subr.mxu0 0.0
    %1987 = vmatpush1.xpose.msra.mxu0 0.0
    %1988 = vmatprep.subr.mxu0 0.0
    %1989 = vmatpush1.xpose.msra.mxu0 0.0
    %1990 = vmatprep.subr.mxu0 0.0
    %1991 = vmatpush1.xpose.msra.mxu0 0.0
    %1992 = vmatprep.subr.mxu0 0.0
    %1993 = vmatpush1.xpose.msra.mxu0 0.0
    %1994 = vmatprep.subr.mxu0 0.0
    %1995 = vmatpush1.xpose.msra.mxu0 0.0
    %1996 = vmatprep.subr.mxu0 0.0
    %1997 = vmatpush1.xpose.msra.mxu0 0.0
    %1998 = vmatprep.subr.mxu0 0.0
    %1999 = vmatpush1.xpose.msra.mxu0 0.0
    %2000 = vmatprep.subr.mxu0 0.0
    %2001 = vmatpush1.xpose.msra.mxu0 0.0
    %2002 = vmatprep.subr.mxu0 0.0
    %2003 = vmatpush1.xpose.msra.mxu0 0.0
    %2004 = vmatprep.subr.mxu0 0.0
    %2005 = vmatpush1.xpose.msra.mxu0 0.0
    %2006 = vmatprep.subr.mxu0 0.0
    %2007 = vmatpush1.xpose.msra.mxu0 0.0
    %2008 = vmatprep.subr.mxu0 0.0
    %2009 = vmatpush1.xpose.msra.mxu0 %v719
    %2010 = vmatprep.subr.mxu0 0.0
    %2011 = vmatpush1.xpose.msra.mxu0 %v713
    %2012 = vmatprep.subr.mxu0 0.0
    %2013 = vmatpush2.xpose.msra.mxu0 0.0
    %2014 = vmatprep.subr.mxu0 0.0
    %2015 = vmatpush2.xpose.msra.mxu0 0.0
    %2016 = vmatprep.subr.mxu0 0.0
    %2017 = vmatpush2.xpose.msra.mxu0 0.0
    %2018 = vmatprep.subr.mxu0 0.0
    %2019 = vmatpush2.xpose.msra.mxu0 0.0
    %2020 = vmatprep.subr.mxu0 0.0
    %2021 = vmatpush2.xpose.msra.mxu0 0.0
    %2022 = vmatprep.subr.mxu0 0.0
    %2023 = vmatpush2.xpose.msra.mxu0 0.0
    %2024 = vmatprep.subr.mxu0 0.0
    %2025 = vmatpush2.xpose.msra.mxu0 0.0
    %2026 = vmatprep.subr.mxu0 0.0
    %2027 = vmatpush2.xpose.msra.mxu0 0.0
    %2028 = vmatprep.subr.mxu0 0.0
    %2029 = vmatpush2.xpose.msra.mxu0 0.0
    %2030 = vmatprep.subr.mxu0 0.0
    %2031 = vmatpush2.xpose.msra.mxu0 0.0
    %2032 = vmatprep.subr.mxu0 0.0
    %2033 = vmatpush2.xpose.msra.mxu0 0.0
    %2034 = vmatprep.subr.mxu0 0.0
    %2035 = vmatpush2.xpose.msra.mxu0 0.0
    %2036 = vmatprep.subr.mxu0 0.0
    %2037 = vmatpush2.xpose.msra.mxu0 0.0
    %2038 = vmatprep.subr.mxu0 0.0
    %2039 = vmatpush2.xpose.msra.mxu0 0.0
    %2040 = vmatprep.subr.mxu0 0.0
    %2041 = vmatpush2.xpose.msra.mxu0 0.0
    %2042 = vmatprep.subr.mxu0 0.0
    %2043 = vmatpush2.xpose.msra.mxu0 0.0
    %2044 = vmatprep.mubr.f32.mxu0 0.0
    %2045 = vmatmul.mubr.f32.gmra.mxu0 %v535
    %v2046 = vpop.f32.mrf.mxu0
    %v2047 = vadd.f32 0.0, %v2046
    %v2048 = vpop.f32.mrf.mxu0
    %2049 = vmatprep.mubr.f32.mxu0 0.0
    %2050 = vmatmul.mubr.f32.gmra.mxu0 %v541
    %v2051 = vpop.f32.mrf.mxu0
    %v2052 = vadd.f32 0.0, %v2051
    %v2053 = vpop.f32.mrf.mxu0
    %2054 = vdwg.mxu0
    %2055 = vmatprep.subr.mxu0 0.0
    %2056 = vmatpush1.xpose.msra.mxu0 0.0
    %2057 = vmatprep.subr.mxu0 0.0
    %2058 = vmatpush1.xpose.msra.mxu0 0.0
    %2059 = vmatprep.subr.mxu0 0.0
    %2060 = vmatpush1.xpose.msra.mxu0 0.0
    %2061 = vmatprep.subr.mxu0 0.0
    %2062 = vmatpush1.xpose.msra.mxu0 0.0
    %2063 = vmatprep.subr.mxu0 0.0
    %2064 = vmatpush1.xpose.msra.mxu0 0.0
    %2065 = vmatprep.subr.mxu0 0.0
    %2066 = vmatpush1.xpose.msra.mxu0 0.0
    %2067 = vmatprep.subr.mxu0 0.0
    %2068 = vmatpush1.xpose.msra.mxu0 0.0
    %2069 = vmatprep.subr.mxu0 0.0
    %2070 = vmatpush1.xpose.msra.mxu0 0.0
    %2071 = vmatprep.subr.mxu0 0.0
    %2072 = vmatpush1.xpose.msra.mxu0 0.0
    %2073 = vmatprep.subr.mxu0 0.0
    %2074 = vmatpush1.xpose.msra.mxu0 0.0
    %2075 = vmatprep.subr.mxu0 0.0
    %2076 = vmatpush1.xpose.msra.mxu0 0.0
    %2077 = vmatprep.subr.mxu0 0.0
    %2078 = vmatpush1.xpose.msra.mxu0 0.0
    %2079 = vmatprep.subr.mxu0 0.0
    %2080 = vmatpush1.xpose.msra.mxu0 0.0
    %2081 = vmatprep.subr.mxu0 0.0
    %2082 = vmatpush1.xpose.msra.mxu0 0.0
    %2083 = vmatprep.subr.mxu0 0.0
    %2084 = vmatpush1.xpose.msra.mxu0 %v731
    %2085 = vmatprep.subr.mxu0 0.0
    %2086 = vmatpush1.xpose.msra.mxu0 %v725
    %2087 = vmatprep.subr.mxu0 0.0
    %2088 = vmatpush2.xpose.msra.mxu0 0.0
    %2089 = vmatprep.subr.mxu0 0.0
    %2090 = vmatpush2.xpose.msra.mxu0 0.0
    %2091 = vmatprep.subr.mxu0 0.0
    %2092 = vmatpush2.xpose.msra.mxu0 0.0
    %2093 = vmatprep.subr.mxu0 0.0
    %2094 = vmatpush2.xpose.msra.mxu0 0.0
    %2095 = vmatprep.subr.mxu0 0.0
    %2096 = vmatpush2.xpose.msra.mxu0 0.0
    %2097 = vmatprep.subr.mxu0 0.0
    %2098 = vmatpush2.xpose.msra.mxu0 0.0
    %2099 = vmatprep.subr.mxu0 0.0
    %2100 = vmatpush2.xpose.msra.mxu0 0.0
    %2101 = vmatprep.subr.mxu0 0.0
    %2102 = vmatpush2.xpose.msra.mxu0 0.0
    %2103 = vmatprep.subr.mxu0 0.0
    %2104 = vmatpush2.xpose.msra.mxu0 0.0
    %2105 = vmatprep.subr.mxu0 0.0
    %2106 = vmatpush2.xpose.msra.mxu0 0.0
    %2107 = vmatprep.subr.mxu0 0.0
    %2108 = vmatpush2.xpose.msra.mxu0 0.0
    %2109 = vmatprep.subr.mxu0 0.0
    %2110 = vmatpush2.xpose.msra.mxu0 0.0
    %2111 = vmatprep.subr.mxu0 0.0
    %2112 = vmatpush2.xpose.msra.mxu0 0.0
    %2113 = vmatprep.subr.mxu0 0.0
    %2114 = vmatpush2.xpose.msra.mxu0 0.0
    %2115 = vmatprep.subr.mxu0 0.0
    %2116 = vmatpush2.xpose.msra.mxu0 0.0
    %2117 = vmatprep.subr.mxu0 0.0
    %2118 = vmatpush2.xpose.msra.mxu0 0.0
    %2119 = vmatprep.mubr.f32.mxu0 0.0
    %2120 = vmatmul.mubr.f32.gmra.mxu0 %v547
    %v2121 = vpop.f32.mrf.mxu0
    %v2122 = vadd.f32 0.0, %v2121
    %v2123 = vpop.f32.mrf.mxu0
    %2124 = vmatprep.mubr.f32.mxu0 0.0
    %2125 = vmatmul.mubr.f32.gmra.mxu0 %v553
    %v2126 = vpop.f32.mrf.mxu0
    %v2127 = vadd.f32 0.0, %v2126
    %v2128 = vpop.f32.mrf.mxu0
    %2129 = vdwg.mxu0
    %v2130 = vsel %vm1061, %v2047, -inf
    %2131 = vmax.xlane.f32.xlu0 %v2130
    %v2132 = vpop.xlane.xlu0 %2131
    %v2133 = vsel %vm1061, %v2052, -inf
    %2134 = vmax.xlane.f32.xlu0 %v2133
    %v2135 = vpop.xlane.xlu0 %2134
    %v2136 = vsel %vm1061, %v2122, -inf
    %2137 = vmax.xlane.f32.xlu0 %v2136
    %v2138 = vpop.xlane.xlu0 %2137
    %v2139 = vsel %vm1061, %v2127, -inf
    %2140 = vmax.xlane.f32.xlu0 %v2139
    %v2141 = vpop.xlane.xlu0 %2140
    %v2142 = vsub.f32 %v2047, %v2132
    %v2143 = vsub.f32 %v2052, %v2135
    %v2144 = vsub.f32 %v2122, %v2138
    %v2145 = vsub.f32 %v2127, %v2141
    %v2146 = vmul.f32 %v2142, 1.442695
    %v2147 = vpow.pop %v2146
    %v2148 = vmul.f32 %v2143, 1.442695
    %v2149 = vpow.pop %v2148
    %v2150 = vmul.f32 %v2144, 1.442695
    %v2151 = vpow.pop %v2150
    %v2152 = vmul.f32 %v2145, 1.442695
    %v2153 = vpow.pop %v2152
    %v2154 = vsel %vm1061, %v2147, 0.0
    %2155 = vadd.xlane.f32.xlu0 %v2154
    %v2156 = vpop.xlane.xlu0 %2155
    %v2157 = vsel %vm1061, %v2149, 0.0
    %2158 = vadd.xlane.f32.xlu0 %v2157
    %v2159 = vpop.xlane.xlu0 %2158
    %v2160 = vsel %vm1061, %v2151, 0.0
    %2161 = vadd.xlane.f32.xlu0 %v2160
    %v2162 = vpop.xlane.xlu0 %2161
    %v2163 = vsel %vm1061, %v2153, 0.0
    %2164 = vadd.xlane.f32.xlu0 %v2163
    %v2165 = vpop.xlane.xlu0 %2164
    %v2166 = vrcp.pop %v2156
    %v2167 = vrcp.pop %v2159
    %v2168 = vrcp.pop %v2162
    %v2169 = vrcp.pop %v2165
    %v2170 = vmul.f32 %v2147, %v2166
    %v2171 = vmul.f32 %v2149, %v2167
    %v2172 = vmul.f32 %v2151, %v2168
    %v2173 = vmul.f32 %v2153, %v2169
    %v2175 = vsel %vm1061, %v2170, 0
    %v2178 = vsel %vm1061, %v2171, 0
    %2180 = vmatprep.subr.mxu0 0.0
    %2181 = vmatpush1.msra.mxu0 0.0
    %2182 = vmatprep.subr.mxu0 0.0
    %2183 = vmatpush1.msra.mxu0 0.0
    %2184 = vmatprep.subr.mxu0 0.0
    %2185 = vmatpush1.msra.mxu0 0.0
    %2186 = vmatprep.subr.mxu0 0.0
    %2187 = vmatpush1.msra.mxu0 0.0
    %2188 = vmatprep.subr.mxu0 0.0
    %2189 = vmatpush1.msra.mxu0 0.0
    %2190 = vmatprep.subr.mxu0 0.0
    %2191 = vmatpush1.msra.mxu0 0.0
    %2192 = vmatprep.subr.mxu0 0.0
    %2193 = vmatpush1.msra.mxu0 0.0
    %2194 = vmatprep.subr.mxu0 0.0
    %2195 = vmatpush1.msra.mxu0 0.0
    %2196 = vmatprep.subr.mxu0 0.0
    %2197 = vmatpush1.msra.mxu0 0.0
    %2198 = vmatprep.subr.mxu0 0.0
    %2199 = vmatpush1.msra.mxu0 0.0
    %2200 = vmatprep.subr.mxu0 0.0
    %2201 = vmatpush1.msra.mxu0 0.0
    %2202 = vmatprep.subr.mxu0 0.0
    %2203 = vmatpush1.msra.mxu0 0.0
    %2204 = vmatprep.subr.mxu0 0.0
    %2205 = vmatpush1.msra.mxu0 0.0
    %2206 = vmatprep.subr.mxu0 0.0
    %2207 = vmatpush1.msra.mxu0 0.0
    %2208 = vmatprep.subr.mxu0 0.0
    %2209 = vmatpush1.msra.mxu0 %v897
    %2210 = vmatprep.subr.mxu0 0.0
    %2211 = vmatpush1.msra.mxu0 %v891
    %2212 = vmatprep.subr.mxu0 0.0
    %2213 = vmatpush2.msra.mxu0 0.0
    %2214 = vmatprep.subr.mxu0 0.0
    %2215 = vmatpush2.msra.mxu0 0.0
    %2216 = vmatprep.subr.mxu0 0.0
    %2217 = vmatpush2.msra.mxu0 0.0
    %2218 = vmatprep.subr.mxu0 0.0
    %2219 = vmatpush2.msra.mxu0 0.0
    %2220 = vmatprep.subr.mxu0 0.0
    %2221 = vmatpush2.msra.mxu0 0.0
    %2222 = vmatprep.subr.mxu0 0.0
    %2223 = vmatpush2.msra.mxu0 0.0
    %2224 = vmatprep.subr.mxu0 0.0
    %2225 = vmatpush2.msra.mxu0 0.0
    %2226 = vmatprep.subr.mxu0 0.0
    %2227 = vmatpush2.msra.mxu0 0.0
    %2228 = vmatprep.subr.mxu0 0.0
    %2229 = vmatpush2.msra.mxu0 0.0
    %2230 = vmatprep.subr.mxu0 0.0
    %2231 = vmatpush2.msra.mxu0 0.0
    %2232 = vmatprep.subr.mxu0 0.0
    %2233 = vmatpush2.msra.mxu0 0.0
    %2234 = vmatprep.subr.mxu0 0.0
    %2235 = vmatpush2.msra.mxu0 0.0
    %2236 = vmatprep.subr.mxu0 0.0
    %2237 = vmatpush2.msra.mxu0 0.0
    %2238 = vmatprep.subr.mxu0 0.0
    %2239 = vmatpush2.msra.mxu0 0.0
    %2240 = vmatprep.subr.mxu0 0.0
    %2241 = vmatpush2.msra.mxu0 0.0
    %2242 = vmatprep.subr.mxu0 0.0
    %2243 = vmatpush2.msra.mxu0 0.0
    %2244 = vmatprep.mubr.f32.mxu0 0.0
    %2245 = vmatmul.mubr.f32.gmra.mxu0 %v2175
    %v2246 = vpop.f32.mrf.mxu0
    %v2247 = vadd.f32 0.0, %v2246
    %v2248 = vpop.f32.mrf.mxu0
    %2249 = vmatprep.mubr.f32.mxu0 0.0
    %2250 = vmatmul.mubr.f32.gmra.mxu0 %v2178
    %v2251 = vpop.f32.mrf.mxu0
    %v2252 = vadd.f32 0.0, %v2251
    %v2253 = vpop.f32.mrf.mxu0
    %2254 = vdwg.mxu0
    %v2256 = vsel %vm1061, %v2172, 0
    %v2259 = vsel %vm1061, %v2173, 0
    %2261 = vmatprep.subr.mxu0 0.0
    %2262 = vmatpush1.msra.mxu0 0.0
    %2263 = vmatprep.subr.mxu0 0.0
    %2264 = vmatpush1.msra.mxu0 0.0
    %2265 = vmatprep.subr.mxu0 0.0
    %2266 = vmatpush1.msra.mxu0 0.0
    %2267 = vmatprep.subr.mxu0 0.0
    %2268 = vmatpush1.msra.mxu0 0.0
    %2269 = vmatprep.subr.mxu0 0.0
    %2270 = vmatpush1.msra.mxu0 0.0
    %2271 = vmatprep.subr.mxu0 0.0
    %2272 = vmatpush1.msra.mxu0 0.0
    %2273 = vmatprep.subr.mxu0 0.0
    %2274 = vmatpush1.msra.mxu0 0.0
    %2275 = vmatprep.subr.mxu0 0.0
    %2276 = vmatpush1.msra.mxu0 0.0
    %2277 = vmatprep.subr.mxu0 0.0
    %2278 = vmatpush1.msra.mxu0 0.0
    %2279 = vmatprep.subr.mxu0 0.0
    %2280 = vmatpush1.msra.mxu0 0.0
    %2281 = vmatprep.subr.mxu0 0.0
    %2282 = vmatpush1.msra.mxu0 0.0
    %2283 = vmatprep.subr.mxu0 0.0
    %2284 = vmatpush1.msra.mxu0 0.0
    %2285 = vmatprep.subr.mxu0 0.0
    %2286 = vmatpush1.msra.mxu0 0.0
    %2287 = vmatprep.subr.mxu0 0.0
    %2288 = vmatpush1.msra.mxu0 0.0
    %2289 = vmatprep.subr.mxu0 0.0
    %2290 = vmatpush1.msra.mxu0 %v909
    %2291 = vmatprep.subr.mxu0 0.0
    %2292 = vmatpush1.msra.mxu0 %v903
    %2293 = vmatprep.subr.mxu0 0.0
    %2294 = vmatpush2.msra.mxu0 0.0
    %2295 = vmatprep.subr.mxu0 0.0
    %2296 = vmatpush2.msra.mxu0 0.0
    %2297 = vmatprep.subr.mxu0 0.0
    %2298 = vmatpush2.msra.mxu0 0.0
    %2299 = vmatprep.subr.mxu0 0.0
    %2300 = vmatpush2.msra.mxu0 0.0
    %2301 = vmatprep.subr.mxu0 0.0
    %2302 = vmatpush2.msra.mxu0 0.0
    %2303 = vmatprep.subr.mxu0 0.0
    %2304 = vmatpush2.msra.mxu0 0.0
    %2305 = vmatprep.subr.mxu0 0.0
    %2306 = vmatpush2.msra.mxu0 0.0
    %2307 = vmatprep.subr.mxu0 0.0
    %2308 = vmatpush2.msra.mxu0 0.0
    %2309 = vmatprep.subr.mxu0 0.0
    %2310 = vmatpush2.msra.mxu0 0.0
    %2311 = vmatprep.subr.mxu0 0.0
    %2312 = vmatpush2.msra.mxu0 0.0
    %2313 = vmatprep.subr.mxu0 0.0
    %2314 = vmatpush2.msra.mxu0 0.0
    %2315 = vmatprep.subr.mxu0 0.0
    %2316 = vmatpush2.msra.mxu0 0.0
    %2317 = vmatprep.subr.mxu0 0.0
    %2318 = vmatpush2.msra.mxu0 0.0
    %2319 = vmatprep.subr.mxu0 0.0
    %2320 = vmatpush2.msra.mxu0 0.0
    %2321 = vmatprep.subr.mxu0 0.0
    %2322 = vmatpush2.msra.mxu0 0.0
    %2323 = vmatprep.subr.mxu0 0.0
    %2324 = vmatpush2.msra.mxu0 0.0
    %2325 = vmatprep.mubr.f32.mxu0 0.0
    %2326 = vmatmul.mubr.f32.gmra.mxu0 %v2256
    %v2327 = vpop.f32.mrf.mxu0
    %v2328 = vadd.f32 0.0, %v2327
    %v2329 = vpop.f32.mrf.mxu0
    %2330 = vmatprep.mubr.f32.mxu0 0.0
    %2331 = vmatmul.mubr.f32.gmra.mxu0 %v2259
    %v2332 = vpop.f32.mrf.mxu0
    %v2333 = vadd.f32 0.0, %v2332
    %v2334 = vpop.f32.mrf.mxu0
    %2335 = vdwg.mxu0
    %v2336 = vlaneseq
    %v2337 = vshrl.u32 %v2336, 7
    %v2338 = vsub.s32 1, %v2337
    %v2339 = vrot.slane %v267, %v2338
    %2340 = vmatprep.subr.mxu0 0.0
    %2341 = vmatpush1.msra.mxu0 %v214
    %2342 = vmatprep.subr.mxu0 0.0
    %2343 = vmatpush1.msra.mxu0 %v213
    %2344 = vmatprep.subr.mxu0 0.0
    %2345 = vmatpush1.msra.mxu0 %v212
    %2346 = vmatprep.subr.mxu0 0.0
    %2347 = vmatpush1.msra.mxu0 %v211
    %2348 = vmatprep.subr.mxu0 0.0
    %2349 = vmatpush1.msra.mxu0 %v210
    %2350 = vmatprep.subr.mxu0 0.0
    %2351 = vmatpush1.msra.mxu0 %v209
    %2352 = vmatprep.subr.mxu0 0.0
    %2353 = vmatpush1.msra.mxu0 %v208
    %2354 = vmatprep.subr.mxu0 0.0
    %2355 = vmatpush1.msra.mxu0 %v207
    %2356 = vmatprep.subr.mxu0 0.0
    %2357 = vmatpush1.msra.mxu0 %v206
    %2358 = vmatprep.subr.mxu0 0.0
    %2359 = vmatpush1.msra.mxu0 %v205
    %2360 = vmatprep.subr.mxu0 0.0
    %2361 = vmatpush1.msra.mxu0 %v204
    %2362 = vmatprep.subr.mxu0 0.0
    %2363 = vmatpush1.msra.mxu0 %v203
    %2364 = vmatprep.subr.mxu0 0.0
    %2365 = vmatpush1.msra.mxu0 %v202
    %2366 = vmatprep.subr.mxu0 0.0
    %2367 = vmatpush1.msra.mxu0 %v201
    %2368 = vmatprep.subr.mxu0 0.0
    %2369 = vmatpush1.msra.mxu0 %v200
    %2370 = vmatprep.subr.mxu0 0.0
    %2371 = vmatpush1.msra.mxu0 %v199
    %2372 = vmatprep.subr.mxu0 0.0
    %2373 = vmatpush2.msra.mxu0 %v230
    %2374 = vmatprep.subr.mxu0 0.0
    %2375 = vmatpush2.msra.mxu0 %v229
    %2376 = vmatprep.subr.mxu0 0.0
    %2377 = vmatpush2.msra.mxu0 %v228
    %2378 = vmatprep.subr.mxu0 0.0
    %2379 = vmatpush2.msra.mxu0 %v227
    %2380 = vmatprep.subr.mxu0 0.0
    %2381 = vmatpush2.msra.mxu0 %v226
    %2382 = vmatprep.subr.mxu0 0.0
    %2383 = vmatpush2.msra.mxu0 %v225
    %2384 = vmatprep.subr.mxu0 0.0
    %2385 = vmatpush2.msra.mxu0 %v224
    %2386 = vmatprep.subr.mxu0 0.0
    %2387 = vmatpush2.msra.mxu0 %v223
    %2388 = vmatprep.subr.mxu0 0.0
    %2389 = vmatpush2.msra.mxu0 %v222
    %2390 = vmatprep.subr.mxu0 0.0
    %2391 = vmatpush2.msra.mxu0 %v221
    %2392 = vmatprep.subr.mxu0 0.0
    %2393 = vmatpush2.msra.mxu0 %v220
    %2394 = vmatprep.subr.mxu0 0.0
    %2395 = vmatpush2.msra.mxu0 %v219
    %2396 = vmatprep.subr.mxu0 0.0
    %2397 = vmatpush2.msra.mxu0 %v218
    %2398 = vmatprep.subr.mxu0 0.0
    %2399 = vmatpush2.msra.mxu0 %v217
    %2400 = vmatprep.subr.mxu0 0.0
    %2401 = vmatpush2.msra.mxu0 %v216
    %2402 = vmatprep.subr.mxu0 0.0
    %2403 = vmatpush2.msra.mxu0 %v215
    %2404 = vmatprep.mubr.f32.mxu0 %v1535
    %2405 = vmatmul.mubr.f32.gmra.mxu0 %v1179
    %v2406 = vpop.f32.mrf.mxu0
    %v2407 = vadd.f32 %v2339, %v2406
    %v2408 = vpop.f32.mrf.mxu0
    %2409 = vmatprep.mubr.f32.mxu0 %v1540
    %2410 = vmatmul.mubr.f32.gmra.mxu0 %v1184
    %v2411 = vpop.f32.mrf.mxu0
    %v2412 = vadd.f32 %v2339, %v2411
    %v2413 = vpop.f32.mrf.mxu0
    %2414 = vmatprep.mubr.f32.mxu0 %v1616
    %2415 = vmatmul.mubr.f32.gmra.mxu0 %v1260
    %v2416 = vpop.f32.mrf.mxu0
    %v2417 = vadd.f32 %v2339, %v2416
    %v2418 = vpop.f32.mrf.mxu0
    %2419 = vmatprep.mubr.f32.mxu0 %v1621
    %2420 = vmatmul.mubr.f32.gmra.mxu0 %v1265
    %v2421 = vpop.f32.mrf.mxu0
    %v2422 = vadd.f32 %v2339, %v2421
    %v2423 = vpop.f32.mrf.mxu0
    %2424 = vdwg.mxu0
    %2425 = vmatprep.subr.mxu0 0.0
    %2426 = vmatpush1.msra.mxu0 %v246
    %2427 = vmatprep.subr.mxu0 0.0
    %2428 = vmatpush1.msra.mxu0 %v245
    %2429 = vmatprep.subr.mxu0 0.0
    %2430 = vmatpush1.msra.mxu0 %v244
    %2431 = vmatprep.subr.mxu0 0.0
    %2432 = vmatpush1.msra.mxu0 %v243
    %2433 = vmatprep.subr.mxu0 0.0
    %2434 = vmatpush1.msra.mxu0 %v242
    %2435 = vmatprep.subr.mxu0 0.0
    %2436 = vmatpush1.msra.mxu0 %v241
    %2437 = vmatprep.subr.mxu0 0.0
    %2438 = vmatpush1.msra.mxu0 %v240
    %2439 = vmatprep.subr.mxu0 0.0
    %2440 = vmatpush1.msra.mxu0 %v239
    %2441 = vmatprep.subr.mxu0 0.0
    %2442 = vmatpush1.msra.mxu0 %v238
    %2443 = vmatprep.subr.mxu0 0.0
    %2444 = vmatpush1.msra.mxu0 %v237
    %2445 = vmatprep.subr.mxu0 0.0
    %2446 = vmatpush1.msra.mxu0 %v236
    %2447 = vmatprep.subr.mxu0 0.0
    %2448 = vmatpush1.msra.mxu0 %v235
    %2449 = vmatprep.subr.mxu0 0.0
    %2450 = vmatpush1.msra.mxu0 %v234
    %2451 = vmatprep.subr.mxu0 0.0
    %2452 = vmatpush1.msra.mxu0 %v233
    %2453 = vmatprep.subr.mxu0 0.0
    %2454 = vmatpush1.msra.mxu0 %v232
    %2455 = vmatprep.subr.mxu0 0.0
    %2456 = vmatpush1.msra.mxu0 %v231
    %2457 = vmatprep.subr.mxu0 0.0
    %2458 = vmatpush2.msra.mxu0 %v262
    %2459 = vmatprep.subr.mxu0 0.0
    %2460 = vmatpush2.msra.mxu0 %v261
    %2461 = vmatprep.subr.mxu0 0.0
    %2462 = vmatpush2.msra.mxu0 %v260
    %2463 = vmatprep.subr.mxu0 0.0
    %2464 = vmatpush2.msra.mxu0 %v259
    %2465 = vmatprep.subr.mxu0 0.0
    %2466 = vmatpush2.msra.mxu0 %v258
    %2467 = vmatprep.subr.mxu0 0.0
    %2468 = vmatpush2.msra.mxu0 %v257
    %2469 = vmatprep.subr.mxu0 0.0
    %2470 = vmatpush2.msra.mxu0 %v256
    %2471 = vmatprep.subr.mxu0 0.0
    %2472 = vmatpush2.msra.mxu0 %v255
    %2473 = vmatprep.subr.mxu0 0.0
    %2474 = vmatpush2.msra.mxu0 %v254
    %2475 = vmatprep.subr.mxu0 0.0
    %2476 = vmatpush2.msra.mxu0 %v253
    %2477 = vmatprep.subr.mxu0 0.0
    %2478 = vmatpush2.msra.mxu0 %v252
    %2479 = vmatprep.subr.mxu0 0.0
    %2480 = vmatpush2.msra.mxu0 %v251
    %2481 = vmatprep.subr.mxu0 0.0
    %2482 = vmatpush2.msra.mxu0 %v250
    %2483 = vmatprep.subr.mxu0 0.0
    %2484 = vmatpush2.msra.mxu0 %v249
    %2485 = vmatprep.subr.mxu0 0.0
    %2486 = vmatpush2.msra.mxu0 %v248
    %2487 = vmatprep.subr.mxu0 0.0
    %2488 = vmatpush2.msra.mxu0 %v247
    %2489 = vmatprep.mubr.f32.mxu0 %v2247
    %2490 = vmatmul.mubr.f32.gmra.mxu0 %v1891
    %v2491 = vpop.f32.mrf.mxu0
    %v2492 = vadd.f32 %v2407, %v2491
    %v2493 = vpop.f32.mrf.mxu0
    %2494 = vmatprep.mubr.f32.mxu0 %v2252
    %2495 = vmatmul.mubr.f32.gmra.mxu0 %v1896
    %v2496 = vpop.f32.mrf.mxu0
    %v2497 = vadd.f32 %v2412, %v2496
    %v2498 = vpop.f32.mrf.mxu0
    %2499 = vmatprep.mubr.f32.mxu0 %v2328
    %2500 = vmatmul.mubr.f32.gmra.mxu0 %v1972
    %v2501 = vpop.f32.mrf.mxu0
    %v2502 = vadd.f32 %v2417, %v2501
    %v2503 = vpop.f32.mrf.mxu0
    %2504 = vmatprep.mubr.f32.mxu0 %v2333
    %2505 = vmatmul.mubr.f32.gmra.mxu0 %v1977
    %v2506 = vpop.f32.mrf.mxu0
    %v2507 = vadd.f32 %v2422, %v2506
    %v2508 = vpop.f32.mrf.mxu0
    %2509 = vdwg.mxu0
    %v2510 = vadd.f32 %v116, %v2492
    %v2511 = vadd.f32 %v121, %v2497
    %v2512 = vadd.f32 %v126, %v2502
    %v2513 = vadd.f32 %v131, %v2507
    %v2514 = vsel %vm327, %v2510, 0.0
    %2515 = vadd.xlane.f32.xlu0 %v2514
    %v2516 = vpop.xlane.xlu0 %2515
    %v2517 = vsel %vm327, %v2511, 0.0
    %2518 = vadd.xlane.f32.xlu0 %v2517
    %v2519 = vpop.xlane.xlu0 %2518
    %v2520 = vsel %vm327, %v2512, 0.0
    %2521 = vadd.xlane.f32.xlu0 %v2520
    %v2522 = vpop.xlane.xlu0 %2521
    %v2523 = vsel %vm327, %v2513, 0.0
    %2524 = vadd.xlane.f32.xlu0 %v2523
    %v2525 = vpop.xlane.xlu0 %2524
    %v2526 = vrcp.pop 36.0
    %v2527 = vmul.f32 %v2516, %v2526
    %v2528 = vmul.f32 %v2519, %v2526
    %v2529 = vmul.f32 %v2522, %v2526
    %v2530 = vmul.f32 %v2525, %v2526
    %v2531 = vsub.f32 %v2510, %v2527
    %v2532 = vsub.f32 %v2511, %v2528
    %v2533 = vsub.f32 %v2512, %v2529
    %v2534 = vsub.f32 %v2513, %v2530
    %v2535 = vmul.f32 %v2531, %v2531
    %v2536 = vmul.f32 %v2532, %v2532
    %v2537 = vmul.f32 %v2533, %v2533
    %v2538 = vmul.f32 %v2534, %v2534
    %v2539 = vsel %vm327, %v2535, 0.0
    %2540 = vadd.xlane.f32.xlu0 %v2539
    %v2541 = vpop.xlane.xlu0 %2540
    %v2542 = vsel %vm327, %v2536, 0.0
    %2543 = vadd.xlane.f32.xlu0 %v2542
    %v2544 = vpop.xlane.xlu0 %2543
    %v2545 = vsel %vm327, %v2537, 0.0
    %2546 = vadd.xlane.f32.xlu0 %v2545
    %v2547 = vpop.xlane.xlu0 %2546
    %v2548 = vsel %vm327, %v2538, 0.0
    %2549 = vadd.xlane.f32.xlu0 %v2548
    %v2550 = vpop.xlane.xlu0 %2549
    %v2551 = vmul.f32 %v2541, %v2526
    %v2552 = vmul.f32 %v2544, %v2526
    %v2553 = vmul.f32 %v2547, %v2526
    %v2554 = vmul.f32 %v2550, %v2526
    %v2555 = vadd.f32 %v2551, 1e-05
    %v2556 = vadd.f32 %v2552, 1e-05
    %v2557 = vadd.f32 %v2553, 1e-05
    %v2558 = vadd.f32 %v2554, 1e-05
    %v2559 = vrsqrt.pop %v2555
    %v2560 = vrsqrt.pop %v2556
    %v2561 = vrsqrt.pop %v2557
    %v2562 = vrsqrt.pop %v2558
    %v2563 = vmul.f32 %v2531, %v2559
    %v2564 = vmul.f32 %v2532, %v2560
    %v2565 = vmul.f32 %v2533, %v2561
    %v2566 = vmul.f32 %v2534, %v2562
    %v2567 = vlaneseq
    %v2568 = vshrl.u32 %v2567, 7
    %v2569 = vsub.s32 4, %v2568
    %v2570 = vrot.slane %v267, %v2569
    %v2571 = vmul.f32 %v2563, %v2570
    %v2572 = vmul.f32 %v2564, %v2570
    %v2573 = vmul.f32 %v2565, %v2570
    %v2574 = vmul.f32 %v2566, %v2570
    %v2575 = vlaneseq
    %v2576 = vshrl.u32 %v2575, 7
    %v2577 = vsub.s32 5, %v2576
    %v2578 = vrot.slane %v267, %v2577
    %v2579 = vadd.f32 %v2571, %v2578
    %v2580 = vadd.f32 %v2572, %v2578
    %v2581 = vadd.f32 %v2573, %v2578
    %v2582 = vadd.f32 %v2574, %v2578
    %v2583 = vlaneseq
    %v2584 = vshrl.u32 %v2583, 7
    %v2585 = vsub.s32 2, %v2584
    %v2586 = vrot.slane %v267, %v2585
    %v2588 = vsel %vm327, %v2579, 0
    %v2591 = vsel %vm327, %v2580, 0
    %v2594 = vsel %vm327, %v2581, 0
    %v2597 = vsel %vm327, %v2582, 0
    %v2600 = vsel %vm340, %v198, 0
    %2602 = vmatprep.subr.mxu0 0.0
    %2603 = vmatpush1.msra.mxu0 0.0
    %2604 = vmatprep.subr.mxu0 0.0
    %2605 = vmatpush1.msra.mxu0 0.0
    %2606 = vmatprep.subr.mxu0 0.0
    %2607 = vmatpush1.msra.mxu0 0.0
    %2608 = vmatprep.subr.mxu0 0.0
    %2609 = vmatpush1.msra.mxu0 0.0
    %2610 = vmatprep.subr.mxu0 0.0
    %2611 = vmatpush1.msra.mxu0 0.0
    %2612 = vmatprep.subr.mxu0 0.0
    %2613 = vmatpush1.msra.mxu0 0.0
    %2614 = vmatprep.subr.mxu0 0.0
    %2615 = vmatpush1.msra.mxu0 0.0
    %2616 = vmatprep.subr.mxu0 0.0
    %2617 = vmatpush1.msra.mxu0 0.0
    %2618 = vmatprep.subr.mxu0 0.0
    %2619 = vmatpush1.msra.mxu0 0.0
    %2620 = vmatprep.subr.mxu0 0.0
    %2621 = vmatpush1.msra.mxu0 0.0
    %2622 = vmatprep.subr.mxu0 0.0
    %2623 = vmatpush1.msra.mxu0 0.0
    %2624 = vmatprep.subr.mxu0 0.0
    %2625 = vmatpush1.msra.mxu0 %v2600
    %2626 = vmatprep.subr.mxu0 0.0
    %2627 = vmatpush1.msra.mxu0 %v197
    %2628 = vmatprep.subr.mxu0 0.0
    %2629 = vmatpush1.msra.mxu0 %v196
    %2630 = vmatprep.subr.mxu0 0.0
    %2631 = vmatpush1.msra.mxu0 %v195
    %2632 = vmatprep.subr.mxu0 0.0
    %2633 = vmatpush1.msra.mxu0 %v194
    %2634 = vmatprep.subr.mxu0 0.0
    %2635 = vmatpush2.msra.mxu0 0.0
    %2636 = vmatprep.subr.mxu0 0.0
    %2637 = vmatpush2.msra.mxu0 0.0
    %2638 = vmatprep.subr.mxu0 0.0
    %2639 = vmatpush2.msra.mxu0 0.0
    %2640 = vmatprep.subr.mxu0 0.0
    %2641 = vmatpush2.msra.mxu0 0.0
    %2642 = vmatprep.subr.mxu0 0.0
    %2643 = vmatpush2.msra.mxu0 0.0
    %2644 = vmatprep.subr.mxu0 0.0
    %2645 = vmatpush2.msra.mxu0 0.0
    %2646 = vmatprep.subr.mxu0 0.0
    %2647 = vmatpush2.msra.mxu0 0.0
    %2648 = vmatprep.subr.mxu0 0.0
    %2649 = vmatpush2.msra.mxu0 0.0
    %2650 = vmatprep.subr.mxu0 0.0
    %2651 = vmatpush2.msra.mxu0 0.0
    %2652 = vmatprep.subr.mxu0 0.0
    %2653 = vmatpush2.msra.mxu0 0.0
    %2654 = vmatprep.subr.mxu0 0.0
    %2655 = vmatpush2.msra.mxu0 0.0
    %2656 = vmatprep.subr.mxu0 0.0
    %2657 = vmatpush2.msra.mxu0 0.0
    %2658 = vmatprep.subr.mxu0 0.0
    %2659 = vmatpush2.msra.mxu0 0.0
    %2660 = vmatprep.subr.mxu0 0.0
    %2661 = vmatpush2.msra.mxu0 0.0
    %2662 = vmatprep.subr.mxu0 0.0
    %2663 = vmatpush2.msra.mxu0 0.0
    %2664 = vmatprep.subr.mxu0 0.0
    %2665 = vmatpush2.msra.mxu0 0.0
    %2666 = vmatprep.mubr.f32.mxu0 0.0
    %2667 = vmatmul.mubr.f32.gmra.mxu0 %v2588
    %v2668 = vpop.f32.mrf.mxu0
    %v2669 = vadd.f32 %v2586, %v2668
    %v2670 = vpop.f32.mrf.mxu0
    %2671 = vmatprep.mubr.f32.mxu0 0.0
    %2672 = vmatmul.mubr.f32.gmra.mxu0 %v2591
    %v2673 = vpop.f32.mrf.mxu0
    %v2674 = vadd.f32 %v2586, %v2673
    %v2675 = vpop.f32.mrf.mxu0
    %2676 = vmatprep.mubr.f32.mxu0 0.0
    %2677 = vmatmul.mubr.f32.gmra.mxu0 %v2594
    %v2678 = vpop.f32.mrf.mxu0
    %v2679 = vadd.f32 %v2586, %v2678
    %v2680 = vpop.f32.mrf.mxu0
    %2681 = vmatprep.mubr.f32.mxu0 0.0
    %2682 = vmatmul.mubr.f32.gmra.mxu0 %v2597
    %v2683 = vpop.f32.mrf.mxu0
    %v2684 = vadd.f32 %v2586, %v2683
    %v2685 = vpop.f32.mrf.mxu0
    %2686 = vdwg.mxu0
    %v2687 = vmax.f32 %v2669, 0.0
    %v2688 = vmax.f32 %v2674, 0.0
    %v2689 = vmax.f32 %v2679, 0.0
    %v2690 = vmax.f32 %v2684, 0.0
    %v2691 = vlaneseq
    %v2692 = vshrl.u32 %v2691, 7
    %v2693 = vsub.s32 3, %v2692
    %v2694 = vrot.slane %v267, %v2693
    %v2696 = vsel %vm36, %v2687, 0
    %v2699 = vsel %vm36, %v2688, 0
    %v2702 = vsel %vm36, %v2689, 0
    %v2705 = vsel %vm36, %v2690, 0
    %2707 = vmatprep.subr.mxu0 0.0
    %2708 = vmatpush1.msra.mxu0 0.0
    %2709 = vmatprep.subr.mxu0 0.0
    %2710 = vmatpush1.msra.mxu0 0.0
    %2711 = vmatprep.subr.mxu0 0.0
    %2712 = vmatpush1.msra.mxu0 0.0
    %2713 = vmatprep.subr.mxu0 0.0
    %2714 = vmatpush1.msra.mxu0 0.0
    %2715 = vmatprep.subr.mxu0 0.0
    %2716 = vmatpush1.msra.mxu0 0.0
    %2717 = vmatprep.subr.mxu0 0.0
    %2718 = vmatpush1.msra.mxu0 0.0
    %2719 = vmatprep.subr.mxu0 0.0
    %2720 = vmatpush1.msra.mxu0 0.0
    %2721 = vmatprep.subr.mxu0 0.0
    %2722 = vmatpush1.msra.mxu0 0.0
    %2723 = vmatprep.subr.mxu0 0.0
    %2724 = vmatpush1.msra.mxu0 0.0
    %2725 = vmatprep.subr.mxu0 0.0
    %2726 = vmatpush1.msra.mxu0 0.0
    %2727 = vmatprep.subr.mxu0 0.0
    %2728 = vmatpush1.msra.mxu0 0.0
    %2729 = vmatprep.subr.mxu0 0.0
    %2730 = vmatpush1.msra.mxu0 0.0
    %2731 = vmatprep.subr.mxu0 0.0
    %2732 = vmatpush1.msra.mxu0 %v266
    %2733 = vmatprep.subr.mxu0 0.0
    %2734 = vmatpush1.msra.mxu0 %v265
    %2735 = vmatprep.subr.mxu0 0.0
    %2736 = vmatpush1.msra.mxu0 %v264
    %2737 = vmatprep.subr.mxu0 0.0
    %2738 = vmatpush1.msra.mxu0 %v263
    %2739 = vmatprep.subr.mxu0 0.0
    %2740 = vmatpush2.msra.mxu0 0.0
    %2741 = vmatprep.subr.mxu0 0.0
    %2742 = vmatpush2.msra.mxu0 0.0
    %2743 = vmatprep.subr.mxu0 0.0
    %2744 = vmatpush2.msra.mxu0 0.0
    %2745 = vmatprep.subr.mxu0 0.0
    %2746 = vmatpush2.msra.mxu0 0.0
    %2747 = vmatprep.subr.mxu0 0.0
    %2748 = vmatpush2.msra.mxu0 0.0
    %2749 = vmatprep.subr.mxu0 0.0
    %2750 = vmatpush2.msra.mxu0 0.0
    %2751 = vmatprep.subr.mxu0 0.0
    %2752 = vmatpush2.msra.mxu0 0.0
    %2753 = vmatprep.subr.mxu0 0.0
    %2754 = vmatpush2.msra.mxu0 0.0
    %2755 = vmatprep.subr.mxu0 0.0
    %2756 = vmatpush2.msra.mxu0 0.0
    %2757 = vmatprep.subr.mxu0 0.0
    %2758 = vmatpush2.msra.mxu0 0.0
    %2759 = vmatprep.subr.mxu0 0.0
    %2760 = vmatpush2.msra.mxu0 0.0
    %2761 = vmatprep.subr.mxu0 0.0
    %2762 = vmatpush2.msra.mxu0 0.0
    %2763 = vmatprep.subr.mxu0 0.0
    %2764 = vmatpush2.msra.mxu0 0.0
    %2765 = vmatprep.subr.mxu0 0.0
    %2766 = vmatpush2.msra.mxu0 0.0
    %2767 = vmatprep.subr.mxu0 0.0
    %2768 = vmatpush2.msra.mxu0 0.0
    %2769 = vmatprep.subr.mxu0 0.0
    %2770 = vmatpush2.msra.mxu0 0.0
    %2771 = vmatprep.mubr.f32.mxu0 0.0
    %2772 = vmatmul.mubr.f32.gmra.mxu0 %v2696
    %v2773 = vpop.f32.mrf.mxu0
    %v2774 = vadd.f32 %v2694, %v2773
    %v2775 = vpop.f32.mrf.mxu0
    %2776 = vmatprep.mubr.f32.mxu0 0.0
    %2777 = vmatmul.mubr.f32.gmra.mxu0 %v2699
    %v2778 = vpop.f32.mrf.mxu0
    %v2779 = vadd.f32 %v2694, %v2778
    %v2780 = vpop.f32.mrf.mxu0
    %2781 = vmatprep.mubr.f32.mxu0 0.0
    %2782 = vmatmul.mubr.f32.gmra.mxu0 %v2702
    %v2783 = vpop.f32.mrf.mxu0
    %v2784 = vadd.f32 %v2694, %v2783
    %v2785 = vpop.f32.mrf.mxu0
    %2786 = vmatprep.mubr.f32.mxu0 0.0
    %2787 = vmatmul.mubr.f32.gmra.mxu0 %v2705
    %v2788 = vpop.f32.mrf.mxu0
    %v2789 = vadd.f32 %v2694, %v2788
    %v2790 = vpop.f32.mrf.mxu0
    %2791 = vdwg.mxu0
    %v2792 = vadd.f32 %v2579, %v2774
    %v2793 = vadd.f32 %v2580, %v2779
    %v2794 = vadd.f32 %v2581, %v2784
    %v2795 = vadd.f32 %v2582, %v2789
    %v2796 = vsel %vm327, %v2792, 0.0
    %2797 = vadd.xlane.f32.xlu0 %v2796
    %v2798 = vpop.xlane.xlu0 %2797
    %v2799 = vsel %vm327, %v2793, 0.0
    %2800 = vadd.xlane.f32.xlu0 %v2799
    %v2801 = vpop.xlane.xlu0 %2800
    %v2802 = vsel %vm327, %v2794, 0.0
    %2803 = vadd.xlane.f32.xlu0 %v2802
    %v2804 = vpop.xlane.xlu0 %2803
    %v2805 = vsel %vm327, %v2795, 0.0
    %2806 = vadd.xlane.f32.xlu0 %v2805
    %v2807 = vpop.xlane.xlu0 %2806
    %v2808 = vmul.f32 %v2798, %v2526
    %v2809 = vmul.f32 %v2801, %v2526
    %v2810 = vmul.f32 %v2804, %v2526
    %v2811 = vmul.f32 %v2807, %v2526
    %v2812 = vsub.f32 %v2792, %v2808
    %v2813 = vsub.f32 %v2793, %v2809
    %v2814 = vsub.f32 %v2794, %v2810
    %v2815 = vsub.f32 %v2795, %v2811
    %v2816 = vmul.f32 %v2812, %v2812
    %v2817 = vmul.f32 %v2813, %v2813
    %v2818 = vmul.f32 %v2814, %v2814
    %v2819 = vmul.f32 %v2815, %v2815
    %v2820 = vsel %vm327, %v2816, 0.0
    %2821 = vadd.xlane.f32.xlu0 %v2820
    %v2822 = vpop.xlane.xlu0 %2821
    %v2823 = vsel %vm327, %v2817, 0.0
    %2824 = vadd.xlane.f32.xlu0 %v2823
    %v2825 = vpop.xlane.xlu0 %2824
    %v2826 = vsel %vm327, %v2818, 0.0
    %2827 = vadd.xlane.f32.xlu0 %v2826
    %v2828 = vpop.xlane.xlu0 %2827
    %v2829 = vsel %vm327, %v2819, 0.0
    %2830 = vadd.xlane.f32.xlu0 %v2829
    %v2831 = vpop.xlane.xlu0 %2830
    %v2832 = vmul.f32 %v2822, %v2526
    %v2833 = vmul.f32 %v2825, %v2526
    %v2834 = vmul.f32 %v2828, %v2526
    %v2835 = vmul.f32 %v2831, %v2526
    %v2836 = vadd.f32 %v2832, 1e-05
    %v2837 = vadd.f32 %v2833, 1e-05
    %v2838 = vadd.f32 %v2834, 1e-05
    %v2839 = vadd.f32 %v2835, 1e-05
    %v2840 = vrsqrt.pop %v2836
    %v2841 = vrsqrt.pop %v2837
    %v2842 = vrsqrt.pop %v2838
    %v2843 = vrsqrt.pop %v2839
    %v2844 = vmul.f32 %v2812, %v2840
    %v2845 = vmul.f32 %v2813, %v2841
    %v2846 = vmul.f32 %v2814, %v2842
    %v2847 = vmul.f32 %v2815, %v2843
    %v2848 = vlaneseq
    %v2849 = vshrl.u32 %v2848, 7
    %v2850 = vsub.s32 6, %v2849
    %v2851 = vrot.slane %v267, %v2850
    %v2852 = vmul.f32 %v2844, %v2851
    %v2853 = vmul.f32 %v2845, %v2851
    %v2854 = vmul.f32 %v2846, %v2851
    %v2855 = vmul.f32 %v2847, %v2851
    %v2856 = vlaneseq
    %v2857 = vshrl.u32 %v2856, 7
    %v2858 = vsub.s32 7, %v2857
    %v2859 = vrot.slane %v267, %v2858
    %v2860 = vadd.f32 %v2852, %v2859
    %v2861 = vadd.f32 %v2853, %v2859
    %v2862 = vadd.f32 %v2854, %v2859
    %v2863 = vadd.f32 %v2855, %v2859
    %v2864 = vld [vmem:[%s3 + $0x241] sm:$0x1]
    %v2865 = vld [vmem:[%s3 + $0x242] sm:$0x1]
    %v2866 = vld [vmem:[%s3 + $0x248] sm:$0xff]
    %v2867 = vld [vmem:[%s3 + $0x250] sm:$0xff]
    %v2868 = vld [vmem:[%s3 + $0x258] sm:$0xff]
    %v2869 = vld [vmem:[%s3 + $0x260] sm:$0xff]
    %v2870 = vld [vmem:[%s3 + $0x268] sm:$0xf]
    %v2871 = vld [vmem:[%s3 + $0x270] sm:$0xff]
    %v2872 = vld [vmem:[%s3 + $0x278] sm:$0xff]
    %v2873 = vld [vmem:[%s3 + $0x280] sm:$0xff]
    %v2874 = vld [vmem:[%s3 + $0x288] sm:$0xff]
    %v2875 = vld [vmem:[%s3 + $0x290] sm:$0xf]
    %v2876 = vsel %vm327, %v2860, 0.0
    %v2877 = vsel %vm327, %v2861, 0.0
    %v2878 = vadd.f32 %v2876, %v2877
    %v2879 = vrot.slane %v2878, 4
    %v2880 = vadd.f32 %v2878, %v2879
    %v2881 = vrot.slane %v2880, 2
    %v2882 = vadd.f32 %v2880, %v2881
    %v2883 = vrot.slane %v2882, 1
    %v2884 = vadd.f32 %v2882, %v2883
    %v2885 = vsel %vm327, %v2862, 0.0
    %v2886 = vsel %vm327, %v2863, 0.0
    %v2887 = vadd.f32 %v2885, %v2886
    %v2888 = vrot.slane %v2887, 4
    %v2889 = vadd.f32 %v2887, %v2888
    %v2890 = vrot.slane %v2889, 2
    %v2891 = vadd.f32 %v2889, %v2890
    %v2892 = vrot.slane %v2891, 1
    %v2893 = vadd.f32 %v2891, %v2892
    %v2894 = vrcp.pop 16.0
    %v2895 = vmul.f32 %v2884, %v2894
    %v2896 = vmul.f32 %v2893, %v2894
    %v2897 = vlaneseq
    %v2898 = vshrl.u32 %v2897, 7
    %v2899 = vsub.s32 0, %v2898
    %v2900 = vrot.slane %v2864, %v2899
    %vm2903 = vcmask 1041409
    %v2904 = vsel %vm2903, %v2896, %v2895
    %v2905 = vsel %vm327, %v2904, 0
    %v2908 = vsel %vm340, %v2870, 0
    %2910 = vmatprep.subr.mxu0 0.0
    %2911 = vmatpush1.msra.mxu0 0.0
    %2912 = vmatprep.subr.mxu0 0.0
    %2913 = vmatpush1.msra.mxu0 0.0
    %2914 = vmatprep.subr.mxu0 0.0
    %2915 = vmatpush1.msra.mxu0 0.0
    %2916 = vmatprep.subr.mxu0 0.0
    %2917 = vmatpush1.msra.mxu0 0.0
    %2918 = vmatprep.subr.mxu0 0.0
    %2919 = vmatpush1.msra.mxu0 0.0
    %2920 = vmatprep.subr.mxu0 0.0
    %2921 = vmatpush1.msra.mxu0 0.0
    %2922 = vmatprep.subr.mxu0 0.0
    %2923 = vmatpush1.msra.mxu0 0.0
    %2924 = vmatprep.subr.mxu0 0.0
    %2925 = vmatpush1.msra.mxu0 0.0
    %2926 = vmatprep.subr.mxu0 0.0
    %2927 = vmatpush1.msra.mxu0 0.0
    %2928 = vmatprep.subr.mxu0 0.0
    %2929 = vmatpush1.msra.mxu0 0.0
    %2930 = vmatprep.subr.mxu0 0.0
    %2931 = vmatpush1.msra.mxu0 0.0
    %2932 = vmatprep.subr.mxu0 0.0
    %2933 = vmatpush1.msra.mxu0 %v2908
    %2934 = vmatprep.subr.mxu0 0.0
    %2935 = vmatpush1.msra.mxu0 %v2869
    %2936 = vmatprep.subr.mxu0 0.0
    %2937 = vmatpush1.msra.mxu0 %v2868
    %2938 = vmatprep.subr.mxu0 0.0
    %2939 = vmatpush1.msra.mxu0 %v2867
    %2940 = vmatprep.subr.mxu0 0.0
    %2941 = vmatpush1.msra.mxu0 %v2866
    %2942 = vmatprep.subr.mxu0 0.0
    %2943 = vmatpush2.msra.mxu0 0.0
    %2944 = vmatprep.subr.mxu0 0.0
    %2945 = vmatpush2.msra.mxu0 0.0
    %2946 = vmatprep.subr.mxu0 0.0
    %2947 = vmatpush2.msra.mxu0 0.0
    %2948 = vmatprep.subr.mxu0 0.0
    %2949 = vmatpush2.msra.mxu0 0.0
    %2950 = vmatprep.subr.mxu0 0.0
    %2951 = vmatpush2.msra.mxu0 0.0
    %2952 = vmatprep.subr.mxu0 0.0
    %2953 = vmatpush2.msra.mxu0 0.0
    %2954 = vmatprep.subr.mxu0 0.0
    %2955 = vmatpush2.msra.mxu0 0.0
    %2956 = vmatprep.subr.mxu0 0.0
    %2957 = vmatpush2.msra.mxu0 0.0
    %2958 = vmatprep.subr.mxu0 0.0
    %2959 = vmatpush2.msra.mxu0 0.0
    %2960 = vmatprep.subr.mxu0 0.0
    %2961 = vmatpush2.msra.mxu0 0.0
    %2962 = vmatprep.subr.mxu0 0.0
    %2963 = vmatpush2.msra.mxu0 0.0
    %2964 = vmatprep.subr.mxu0 0.0
    %2965 = vmatpush2.msra.mxu0 0.0
    %2966 = vmatprep.subr.mxu0 0.0
    %2967 = vmatpush2.msra.mxu0 0.0
    %2968 = vmatprep.subr.mxu0 0.0
    %2969 = vmatpush2.msra.mxu0 0.0
    %2970 = vmatprep.subr.mxu0 0.0
    %2971 = vmatpush2.msra.mxu0 0.0
    %2972 = vmatprep.subr.mxu0 0.0
    %2973 = vmatpush2.msra.mxu0 0.0
    %2974 = vmatprep.mubr.f32.mxu0 0.0
    %2975 = vmatmul.mubr.f32.gmra.mxu0 %v2905
    %v2976 = vpop.f32.mrf.mxu0
    %v2977 = vadd.f32 %v2900, %v2976
    %v2978 = vpop.f32.mrf.mxu0
    %2979 = vdwg.mxu0
    %v2982 = vunpack.c.l.s4 1966171168
    %v2983 = vunpack.c.0.s8 %v2982
    %v2984 = vlaneseq
    %v2985 = vshrl.u32 %v2984, 7
    %v2986 = vsub.s32 %v2983, %v2985
    %v2987 = vrot.slane %v2977, %v2986
    %v2988 = vcombine.high %v2987, %v2987
    %v2990 = vunpack.c.l.s4 1966171168
    %v2991 = vunpack.c.0.s8 %v2990
    %v2992 = vlaneseq
    %v2993 = vshrl.u32 %v2992, 7
    %v2994 = vsub.s32 %v2991, %v2993
    %v2995 = vrot.slane %v2987, %v2994
    %v2997 = vunpack.c.l.s4 1966171168
    %v2998 = vunpack.c.0.s8 %v2997
    %v2999 = vlaneseq
    %v3000 = vshrl.u32 %v2999, 7
    %v3001 = vsub.s32 %v2998, %v3000
    %v3002 = vrot.slane %v2988, %v3001
    %vm3005 = vcmask 8192
    %3006 = vst.msk [vmem:[#allocation2] sm:$0x1] %vm3005, %v2995
    %3007 = vst.msk [vmem:[#allocation2 + $0x1] sm:$0x1] %vm3005, %v3002
    %v3008 = vlaneseq
    %v3009 = vshrl.u32 %v3008, 7
    %v3010 = vsub.s32 0, %v3009
    %v3011 = vrot.slane %v2865, %v3010
    %v3013 = vsel %vm327, %v2860, 0
    %v3016 = vsel %vm327, %v2861, 0
    %v3019 = vsel %vm327, %v2862, 0
    %v3022 = vsel %vm327, %v2863, 0
    %v3025 = vsel %vm340, %v2875, 0
    %3027 = vmatprep.subr.mxu0 0.0
    %3028 = vmatpush1.msra.mxu0 0.0
    %3029 = vmatprep.subr.mxu0 0.0
    %3030 = vmatpush1.msra.mxu0 0.0
    %3031 = vmatprep.subr.mxu0 0.0
    %3032 = vmatpush1.msra.mxu0 0.0
    %3033 = vmatprep.subr.mxu0 0.0
    %3034 = vmatpush1.msra.mxu0 0.0
    %3035 = vmatprep.subr.mxu0 0.0
    %3036 = vmatpush1.msra.mxu0 0.0
    %3037 = vmatprep.subr.mxu0 0.0
    %3038 = vmatpush1.msra.mxu0 0.0
    %3039 = vmatprep.subr.mxu0 0.0
    %3040 = vmatpush1.msra.mxu0 0.0
    %3041 = vmatprep.subr.mxu0 0.0
    %3042 = vmatpush1.msra.mxu0 0.0
    %3043 = vmatprep.subr.mxu0 0.0
    %3044 = vmatpush1.msra.mxu0 0.0
    %3045 = vmatprep.subr.mxu0 0.0
    %3046 = vmatpush1.msra.mxu0 0.0
    %3047 = vmatprep.subr.mxu0 0.0
    %3048 = vmatpush1.msra.mxu0 0.0
    %3049 = vmatprep.subr.mxu0 0.0
    %3050 = vmatpush1.msra.mxu0 %v3025
    %3051 = vmatprep.subr.mxu0 0.0
    %3052 = vmatpush1.msra.mxu0 %v2874
    %3053 = vmatprep.subr.mxu0 0.0
    %3054 = vmatpush1.msra.mxu0 %v2873
    %3055 = vmatprep.subr.mxu0 0.0
    %3056 = vmatpush1.msra.mxu0 %v2872
    %3057 = vmatprep.subr.mxu0 0.0
    %3058 = vmatpush1.msra.mxu0 %v2871
    %3059 = vmatprep.subr.mxu0 0.0
    %3060 = vmatpush2.msra.mxu0 0.0
    %3061 = vmatprep.subr.mxu0 0.0
    %3062 = vmatpush2.msra.mxu0 0.0
    %3063 = vmatprep.subr.mxu0 0.0
    %3064 = vmatpush2.msra.mxu0 0.0
    %3065 = vmatprep.subr.mxu0 0.0
    %3066 = vmatpush2.msra.mxu0 0.0
    %3067 = vmatprep.subr.mxu0 0.0
    %3068 = vmatpush2.msra.mxu0 0.0
    %3069 = vmatprep.subr.mxu0 0.0
    %3070 = vmatpush2.msra.mxu0 0.0
    %3071 = vmatprep.subr.mxu0 0.0
    %3072 = vmatpush2.msra.mxu0 0.0
    %3073 = vmatprep.subr.mxu0 0.0
    %3074 = vmatpush2.msra.mxu0 0.0
    %3075 = vmatprep.subr.mxu0 0.0
    %3076 = vmatpush2.msra.mxu0 0.0
    %3077 = vmatprep.subr.mxu0 0.0
    %3078 = vmatpush2.msra.mxu0 0.0
    %3079 = vmatprep.subr.mxu0 0.0
    %3080 = vmatpush2.msra.mxu0 0.0
    %3081 = vmatprep.subr.mxu0 0.0
    %3082 = vmatpush2.msra.mxu0 0.0
    %3083 = vmatprep.subr.mxu0 0.0
    %3084 = vmatpush2.msra.mxu0 0.0
    %3085 = vmatprep.subr.mxu0 0.0
    %3086 = vmatpush2.msra.mxu0 0.0
    %3087 = vmatprep.subr.mxu0 0.0
    %3088 = vmatpush2.msra.mxu0 0.0
    %3089 = vmatprep.subr.mxu0 0.0
    %3090 = vmatpush2.msra.mxu0 0.0
    %3091 = vmatprep.mubr.f32.mxu0 0.0
    %3092 = vmatmul.mubr.f32.gmra.mxu0 %v3013
    %v3093 = vpop.f32.mrf.mxu0
    %v3094 = vadd.f32 %v3011, %v3093
    %v3095 = vpop.f32.mrf.mxu0
    %3096 = vmatprep.mubr.f32.mxu0 0.0
    %3097 = vmatmul.mubr.f32.gmra.mxu0 %v3016
    %v3098 = vpop.f32.mrf.mxu0
    %v3099 = vadd.f32 %v3011, %v3098
    %v3100 = vpop.f32.mrf.mxu0
    %3101 = vmatprep.mubr.f32.mxu0 0.0
    %3102 = vmatmul.mubr.f32.gmra.mxu0 %v3019
    %v3103 = vpop.f32.mrf.mxu0
    %v3104 = vadd.f32 %v3011, %v3103
    %v3105 = vpop.f32.mrf.mxu0
    %3106 = vmatprep.mubr.f32.mxu0 0.0
    %3107 = vmatmul.mubr.f32.gmra.mxu0 %v3022
    %v3108 = vpop.f32.mrf.mxu0
    %v3109 = vadd.f32 %v3011, %v3108
    %v3110 = vpop.f32.mrf.mxu0
    %3111 = vdwg.mxu0
    %v3112 = vld [vmem:[%s1] sm:$0xff]
    %v3113 = vld [vmem:[%s1 + $0x8] sm:$0xff]
    %v3114 = vld [vmem:[%s4] sm:$0xf]
    %v3115 = vld [vmem:[%s4 + $0x8] sm:$0xff]
    %v3116 = vld [vmem:[%s4 + $0x10] sm:$0xff]
    %v3117 = vld [vmem:[%s4 + $0x18] sm:$0xff]
    %v3118 = vld [vmem:[%s4 + $0x20] sm:$0xff]
    %v3119 = vld [vmem:[%s4 + $0x28] sm:$0xff]
    %v3120 = vld [vmem:[%s4 + $0x30] sm:$0xff]
    %v3121 = vlaneseq
    %v3122 = vshrl.u32 %v3121, 7
    %v3123 = vsub.s32 0, %v3122
    %v3124 = vrot.slane %v3119, %v3123
    %vm3125 = vcmask 31744
    %v3127 = vsel %vm3125, %v3112, 0
    %v3130 = vsel %vm3125, %v3113, 0
    %v3133 = vsel %vm340, %v3114, 0
    %3135 = vmatprep.subr.mxu0 0.0
    %3136 = vmatpush1.msra.mxu0 0.0
    %3137 = vmatprep.subr.mxu0 0.0
    %3138 = vmatpush1.msra.mxu0 0.0
    %3139 = vmatprep.subr.mxu0 0.0
    %3140 = vmatpush1.msra.mxu0 0.0
    %3141 = vmatprep.subr.mxu0 0.0
    %3142 = vmatpush1.msra.mxu0 0.0
    %3143 = vmatprep.subr.mxu0 0.0
    %3144 = vmatpush1.msra.mxu0 0.0
    %3145 = vmatprep.subr.mxu0 0.0
    %3146 = vmatpush1.msra.mxu0 0.0
    %3147 = vmatprep.subr.mxu0 0.0
    %3148 = vmatpush1.msra.mxu0 0.0
    %3149 = vmatprep.subr.mxu0 0.0
    %3150 = vmatpush1.msra.mxu0 0.0
    %3151 = vmatprep.subr.mxu0 0.0
    %3152 = vmatpush1.msra.mxu0 0.0
    %3153 = vmatprep.subr.mxu0 0.0
    %3154 = vmatpush1.msra.mxu0 0.0
    %3155 = vmatprep.subr.mxu0 0.0
    %3156 = vmatpush1.msra.mxu0 0.0
    %3157 = vmatprep.subr.mxu0 0.0
    %3158 = vmatpush1.msra.mxu0 0.0
    %3159 = vmatprep.subr.mxu0 0.0
    %3160 = vmatpush1.msra.mxu0 0.0
    %3161 = vmatprep.subr.mxu0 0.0
    %3162 = vmatpush1.msra.mxu0 0.0
    %3163 = vmatprep.subr.mxu0 0.0
    %3164 = vmatpush1.msra.mxu0 0.0
    %3165 = vmatprep.subr.mxu0 0.0
    %3166 = vmatpush1.msra.mxu0 %v3133
    %3167 = vmatprep.subr.mxu0 0.0
    %3168 = vmatpush2.msra.mxu0 0.0
    %3169 = vmatprep.subr.mxu0 0.0
    %3170 = vmatpush2.msra.mxu0 0.0
    %3171 = vmatprep.subr.mxu0 0.0
    %3172 = vmatpush2.msra.mxu0 0.0
    %3173 = vmatprep.subr.mxu0 0.0
    %3174 = vmatpush2.msra.mxu0 0.0
    %3175 = vmatprep.subr.mxu0 0.0
    %3176 = vmatpush2.msra.mxu0 0.0
    %3177 = vmatprep.subr.mxu0 0.0
    %3178 = vmatpush2.msra.mxu0 0.0
    %3179 = vmatprep.subr.mxu0 0.0
    %3180 = vmatpush2.msra.mxu0 0.0
    %3181 = vmatprep.subr.mxu0 0.0
    %3182 = vmatpush2.msra.mxu0 0.0
    %3183 = vmatprep.subr.mxu0 0.0
    %3184 = vmatpush2.msra.mxu0 0.0
    %3185 = vmatprep.subr.mxu0 0.0
    %3186 = vmatpush2.msra.mxu0 0.0
    %3187 = vmatprep.subr.mxu0 0.0
    %3188 = vmatpush2.msra.mxu0 0.0
    %3189 = vmatprep.subr.mxu0 0.0
    %3190 = vmatpush2.msra.mxu0 0.0
    %3191 = vmatprep.subr.mxu0 0.0
    %3192 = vmatpush2.msra.mxu0 0.0
    %3193 = vmatprep.subr.mxu0 0.0
    %3194 = vmatpush2.msra.mxu0 0.0
    %3195 = vmatprep.subr.mxu0 0.0
    %3196 = vmatpush2.msra.mxu0 0.0
    %3197 = vmatprep.subr.mxu0 0.0
    %3198 = vmatpush2.msra.mxu0 0.0
    %3199 = vmatprep.mubr.f32.mxu0 0.0
    %3200 = vmatmul.mubr.f32.gmra.mxu0 %v3127
    %v3201 = vpop.f32.mrf.mxu0
    %v3202 = vadd.f32 %v3124, %v3201
    %v3203 = vpop.f32.mrf.mxu0
    %3204 = vmatprep.mubr.f32.mxu0 0.0
    %3205 = vmatmul.mubr.f32.gmra.mxu0 %v3130
    %v3206 = vpop.f32.mrf.mxu0
    %v3207 = vadd.f32 %v3124, %v3206
    %v3208 = vpop.f32.mrf.mxu0
    %3209 = vdwg.mxu0
    %v3210 = vlaneseq
    %v3211 = vshrl.u32 %v3210, 7
    %v3212 = vsub.s32 1, %v3211
    %v3213 = vrot.slane %v3119, %v3212
    %3214 = vrot.lane.b32.xlu0 %v3114, 124
    %v3215 = vpop.permute.xlu0 %3214
    %v3216 = vsel %vm340, %v3215, 0
    %3218 = vmatprep.subr.mxu0 0.0
    %3219 = vmatpush1.msra.mxu0 0.0
    %3220 = vmatprep.subr.mxu0 0.0
    %3221 = vmatpush1.msra.mxu0 0.0
    %3222 = vmatprep.subr.mxu0 0.0
    %3223 = vmatpush1.msra.mxu0 0.0
    %3224 = vmatprep.subr.mxu0 0.0
    %3225 = vmatpush1.msra.mxu0 0.0
    %3226 = vmatprep.subr.mxu0 0.0
    %3227 = vmatpush1.msra.mxu0 0.0
    %3228 = vmatprep.subr.mxu0 0.0
    %3229 = vmatpush1.msra.mxu0 0.0
    %3230 = vmatprep.subr.mxu0 0.0
    %3231 = vmatpush1.msra.mxu0 0.0
    %3232 = vmatprep.subr.mxu0 0.0
    %3233 = vmatpush1.msra.mxu0 0.0
    %3234 = vmatprep.subr.mxu0 0.0
    %3235 = vmatpush1.msra.mxu0 0.0
    %3236 = vmatprep.subr.mxu0 0.0
    %3237 = vmatpush1.msra.mxu0 0.0
    %3238 = vmatprep.subr.mxu0 0.0
    %3239 = vmatpush1.msra.mxu0 0.0
    %3240 = vmatprep.subr.mxu0 0.0
    %3241 = vmatpush1.msra.mxu0 0.0
    %3242 = vmatprep.subr.mxu0 0.0
    %3243 = vmatpush1.msra.mxu0 0.0
    %3244 = vmatprep.subr.mxu0 0.0
    %3245 = vmatpush1.msra.mxu0 0.0
    %3246 = vmatprep.subr.mxu0 0.0
    %3247 = vmatpush1.msra.mxu0 0.0
    %3248 = vmatprep.subr.mxu0 0.0
    %3249 = vmatpush1.msra.mxu0 %v3216
    %3250 = vmatprep.subr.mxu0 0.0
    %3251 = vmatpush2.msra.mxu0 0.0
    %3252 = vmatprep.subr.mxu0 0.0
    %3253 = vmatpush2.msra.mxu0 0.0
    %3254 = vmatprep.subr.mxu0 0.0
    %3255 = vmatpush2.msra.mxu0 0.0
    %3256 = vmatprep.subr.mxu0 0.0
    %3257 = vmatpush2.msra.mxu0 0.0
    %3258 = vmatprep.subr.mxu0 0.0
    %3259 = vmatpush2.msra.mxu0 0.0
    %3260 = vmatprep.subr.mxu0 0.0
    %3261 = vmatpush2.msra.mxu0 0.0
    %3262 = vmatprep.subr.mxu0 0.0
    %3263 = vmatpush2.msra.mxu0 0.0
    %3264 = vmatprep.subr.mxu0 0.0
    %3265 = vmatpush2.msra.mxu0 0.0
    %3266 = vmatprep.subr.mxu0 0.0
    %3267 = vmatpush2.msra.mxu0 0.0
    %3268 = vmatprep.subr.mxu0 0.0
    %3269 = vmatpush2.msra.mxu0 0.0
    %3270 = vmatprep.subr.mxu0 0.0
    %3271 = vmatpush2.msra.mxu0 0.0
    %3272 = vmatprep.subr.mxu0 0.0
    %3273 = vmatpush2.msra.mxu0 0.0
    %3274 = vmatprep.subr.mxu0 0.0
    %3275 = vmatpush2.msra.mxu0 0.0
    %3276 = vmatprep.subr.mxu0 0.0
    %3277 = vmatpush2.msra.mxu0 0.0
    %3278 = vmatprep.subr.mxu0 0.0
    %3279 = vmatpush2.msra.mxu0 0.0
    %3280 = vmatprep.subr.mxu0 0.0
    %3281 = vmatpush2.msra.mxu0 0.0
    %3282 = vmatprep.mubr.f32.mxu0 0.0
    %3283 = vmatmul.mubr.f32.gmra.mxu0 %v3127
    %v3284 = vpop.f32.mrf.mxu0
    %v3285 = vadd.f32 %v3213, %v3284
    %v3286 = vpop.f32.mrf.mxu0
    %3287 = vmatprep.mubr.f32.mxu0 0.0
    %3288 = vmatmul.mubr.f32.gmra.mxu0 %v3130
    %v3289 = vpop.f32.mrf.mxu0
    %v3290 = vadd.f32 %v3213, %v3289
    %v3291 = vpop.f32.mrf.mxu0
    %3292 = vdwg.mxu0
    %v3293 = vlaneseq
    %v3294 = vshrl.u32 %v3293, 7
    %v3295 = vsub.s32 2, %v3294
    %v3296 = vrot.slane %v3119, %v3295
    %3297 = vrot.lane.b32.xlu0 %v3114, 120
    %v3298 = vpop.permute.xlu0 %3297
    %v3299 = vsel %vm340, %v3298, 0
    %3301 = vmatprep.subr.mxu0 0.0
    %3302 = vmatpush1.msra.mxu0 0.0
    %3303 = vmatprep.subr.mxu0 0.0
    %3304 = vmatpush1.msra.mxu0 0.0
    %3305 = vmatprep.subr.mxu0 0.0
    %3306 = vmatpush1.msra.mxu0 0.0
    %3307 = vmatprep.subr.mxu0 0.0
    %3308 = vmatpush1.msra.mxu0 0.0
    %3309 = vmatprep.subr.mxu0 0.0
    %3310 = vmatpush1.msra.mxu0 0.0
    %3311 = vmatprep.subr.mxu0 0.0
    %3312 = vmatpush1.msra.mxu0 0.0
    %3313 = vmatprep.subr.mxu0 0.0
    %3314 = vmatpush1.msra.mxu0 0.0
    %3315 = vmatprep.subr.mxu0 0.0
    %3316 = vmatpush1.msra.mxu0 0.0
    %3317 = vmatprep.subr.mxu0 0.0
    %3318 = vmatpush1.msra.mxu0 0.0
    %3319 = vmatprep.subr.mxu0 0.0
    %3320 = vmatpush1.msra.mxu0 0.0
    %3321 = vmatprep.subr.mxu0 0.0
    %3322 = vmatpush1.msra.mxu0 0.0
    %3323 = vmatprep.subr.mxu0 0.0
    %3324 = vmatpush1.msra.mxu0 0.0
    %3325 = vmatprep.subr.mxu0 0.0
    %3326 = vmatpush1.msra.mxu0 0.0
    %3327 = vmatprep.subr.mxu0 0.0
    %3328 = vmatpush1.msra.mxu0 0.0
    %3329 = vmatprep.subr.mxu0 0.0
    %3330 = vmatpush1.msra.mxu0 0.0
    %3331 = vmatprep.subr.mxu0 0.0
    %3332 = vmatpush1.msra.mxu0 %v3299
    %3333 = vmatprep.subr.mxu0 0.0
    %3334 = vmatpush2.msra.mxu0 0.0
    %3335 = vmatprep.subr.mxu0 0.0
    %3336 = vmatpush2.msra.mxu0 0.0
    %3337 = vmatprep.subr.mxu0 0.0
    %3338 = vmatpush2.msra.mxu0 0.0
    %3339 = vmatprep.subr.mxu0 0.0
    %3340 = vmatpush2.msra.mxu0 0.0
    %3341 = vmatprep.subr.mxu0 0.0
    %3342 = vmatpush2.msra.mxu0 0.0
    %3343 = vmatprep.subr.mxu0 0.0
    %3344 = vmatpush2.msra.mxu0 0.0
    %3345 = vmatprep.subr.mxu0 0.0
    %3346 = vmatpush2.msra.mxu0 0.0
    %3347 = vmatprep.subr.mxu0 0.0
    %3348 = vmatpush2.msra.mxu0 0.0
    %3349 = vmatprep.subr.mxu0 0.0
    %3350 = vmatpush2.msra.mxu0 0.0
    %3351 = vmatprep.subr.mxu0 0.0
    %3352 = vmatpush2.msra.mxu0 0.0
    %3353 = vmatprep.subr.mxu0 0.0
    %3354 = vmatpush2.msra.mxu0 0.0
    %3355 = vmatprep.subr.mxu0 0.0
    %3356 = vmatpush2.msra.mxu0 0.0
    %3357 = vmatprep.subr.mxu0 0.0
    %3358 = vmatpush2.msra.mxu0 0.0
    %3359 = vmatprep.subr.mxu0 0.0
    %3360 = vmatpush2.msra.mxu0 0.0
    %3361 = vmatprep.subr.mxu0 0.0
    %3362 = vmatpush2.msra.mxu0 0.0
    %3363 = vmatprep.subr.mxu0 0.0
    %3364 = vmatpush2.msra.mxu0 0.0
    %3365 = vmatprep.mubr.f32.mxu0 0.0
    %3366 = vmatmul.mubr.f32.gmra.mxu0 %v3127
    %v3367 = vpop.f32.mrf.mxu0
    %v3368 = vadd.f32 %v3296, %v3367
    %v3369 = vpop.f32.mrf.mxu0
    %3370 = vmatprep.mubr.f32.mxu0 0.0
    %3371 = vmatmul.mubr.f32.gmra.mxu0 %v3130
    %v3372 = vpop.f32.mrf.mxu0
    %v3373 = vadd.f32 %v3296, %v3372
    %v3374 = vpop.f32.mrf.mxu0
    %3375 = vdwg.mxu0
    %v3378 = vcombine.high %v3202, %v3202
    %v3380 = vunpack.c.l.s4 1966171168
    %v3381 = vunpack.c.0.s8 %v3380
    %v3382 = vlaneseq
    %v3383 = vshrl.u32 %v3382, 7
    %v3384 = vsub.s32 %v3381, %v3383
    %v3385 = vrot.slane %v3202, %v3384
    %v3387 = vunpack.c.l.s4 1966171168
    %v3388 = vunpack.c.0.s8 %v3387
    %v3389 = vlaneseq
    %v3390 = vshrl.u32 %v3389, 7
    %v3391 = vsub.s32 %v3388, %v3390
    %v3392 = vrot.slane %v3378, %v3391
    %v3393 = vcombine.high %v3385, %v3385
    %v3394 = vcombine.high %v3392, %v3392
    %v3396 = vunpack.c.l.s4 1966171168
    %v3397 = vunpack.c.0.s8 %v3396
    %v3398 = vlaneseq
    %v3399 = vshrl.u32 %v3398, 7
    %v3400 = vsub.s32 %v3397, %v3399
    %v3401 = vrot.slane %v3385, %v3400
    %v3403 = vunpack.c.l.s4 1966171168
    %v3404 = vunpack.c.0.s8 %v3403
    %v3405 = vlaneseq
    %v3406 = vshrl.u32 %v3405, 7
    %v3407 = vsub.s32 %v3404, %v3406
    %v3408 = vrot.slane %v3392, %v3407
    %v3410 = vunpack.c.l.s4 1966171168
    %v3411 = vunpack.c.0.s8 %v3410
    %v3412 = vlaneseq
    %v3413 = vshrl.u32 %v3412, 7
    %v3414 = vsub.s32 %v3411, %v3413
    %v3415 = vrot.slane %v3393, %v3414
    %v3417 = vunpack.c.l.s4 1966171168
    %v3418 = vunpack.c.0.s8 %v3417
    %v3419 = vlaneseq
    %v3420 = vshrl.u32 %v3419, 7
    %v3421 = vsub.s32 %v3418, %v3420
    %v3422 = vrot.slane %v3394, %v3421
    %v3423 = vcombine.high %v3401, %v3401
    %v3424 = vcombine.high %v3408, %v3408
    %v3425 = vcombine.high %v3415, %v3415
    %v3426 = vcombine.high %v3422, %v3422
    %v3427 = vcombine.high %v3207, %v3207
    %v3429 = vunpack.c.l.s4 1966171168
    %v3430 = vunpack.c.0.s8 %v3429
    %v3431 = vlaneseq
    %v3432 = vshrl.u32 %v3431, 7
    %v3433 = vsub.s32 %v3430, %v3432
    %v3434 = vrot.slane %v3207, %v3433
    %v3436 = vunpack.c.l.s4 1966171168
    %v3437 = vunpack.c.0.s8 %v3436
    %v3438 = vlaneseq
    %v3439 = vshrl.u32 %v3438, 7
    %v3440 = vsub.s32 %v3437, %v3439
    %v3441 = vrot.slane %v3427, %v3440
    %v3442 = vcombine.high %v3434, %v3434
    %v3443 = vcombine.high %v3441, %v3441
    %v3445 = vunpack.c.l.s4 1966171168
    %v3446 = vunpack.c.0.s8 %v3445
    %v3447 = vlaneseq
    %v3448 = vshrl.u32 %v3447, 7
    %v3449 = vsub.s32 %v3446, %v3448
    %v3450 = vrot.slane %v3434, %v3449
    %v3452 = vunpack.c.l.s4 1966171168
    %v3453 = vunpack.c.0.s8 %v3452
    %v3454 = vlaneseq
    %v3455 = vshrl.u32 %v3454, 7
    %v3456 = vsub.s32 %v3453, %v3455
    %v3457 = vrot.slane %v3441, %v3456
    %v3459 = vunpack.c.l.s4 1966171168
    %v3460 = vunpack.c.0.s8 %v3459
    %v3461 = vlaneseq
    %v3462 = vshrl.u32 %v3461, 7
    %v3463 = vsub.s32 %v3460, %v3462
    %v3464 = vrot.slane %v3442, %v3463
    %v3466 = vunpack.c.l.s4 1966171168
    %v3467 = vunpack.c.0.s8 %v3466
    %v3468 = vlaneseq
    %v3469 = vshrl.u32 %v3468, 7
    %v3470 = vsub.s32 %v3467, %v3469
    %v3471 = vrot.slane %v3443, %v3470
    %v3472 = vcombine.high %v3450, %v3450
    %v3473 = vcombine.high %v3457, %v3457
    %v3474 = vcombine.high %v3464, %v3464
    %v3475 = vcombine.high %v3471, %v3471
    %v3476 = vlaneseq
    %v3477 = vshrl.u32 %v3476, 7
    %v3478 = vsub.s32 0, %v3477
    %v3479 = vrot.slane %v3401, %v3478
    %v3480 = vlaneseq
    %v3481 = vshrl.u32 %v3480, 7
    %v3482 = vsub.s32 0, %v3481
    %v3483 = vrot.slane %v3415, %v3482
    %v3484 = vlaneseq
    %v3485 = vshrl.u32 %v3484, 7
    %v3486 = vsub.s32 0, %v3485
    %v3487 = vrot.slane %v3423, %v3486
    %v3488 = vlaneseq
    %v3489 = vshrl.u32 %v3488, 7
    %v3490 = vsub.s32 0, %v3489
    %v3491 = vrot.slane %v3425, %v3490
    %v3492 = vlaneseq
    %v3493 = vshrl.u32 %v3492, 7
    %v3494 = vsub.s32 0, %v3493
    %v3495 = vrot.slane %v3408, %v3494
    %v3496 = vlaneseq
    %v3497 = vshrl.u32 %v3496, 7
    %v3498 = vsub.s32 0, %v3497
    %v3499 = vrot.slane %v3422, %v3498
    %v3500 = vlaneseq
    %v3501 = vshrl.u32 %v3500, 7
    %v3502 = vsub.s32 0, %v3501
    %v3503 = vrot.slane %v3424, %v3502
    %v3504 = vlaneseq
    %v3505 = vshrl.u32 %v3504, 7
    %v3506 = vsub.s32 0, %v3505
    %v3507 = vrot.slane %v3426, %v3506
    %v3508 = vlaneseq
    %v3509 = vshrl.u32 %v3508, 7
    %v3510 = vsub.s32 0, %v3509
    %v3511 = vrot.slane %v3450, %v3510
    %v3512 = vlaneseq
    %v3513 = vshrl.u32 %v3512, 7
    %v3514 = vsub.s32 0, %v3513
    %v3515 = vrot.slane %v3464, %v3514
    %v3516 = vlaneseq
    %v3517 = vshrl.u32 %v3516, 7
    %v3518 = vsub.s32 0, %v3517
    %v3519 = vrot.slane %v3472, %v3518
    %v3520 = vlaneseq
    %v3521 = vshrl.u32 %v3520, 7
    %v3522 = vsub.s32 0, %v3521
    %v3523 = vrot.slane %v3474, %v3522
    %v3524 = vlaneseq
    %v3525 = vshrl.u32 %v3524, 7
    %v3526 = vsub.s32 0, %v3525
    %v3527 = vrot.slane %v3457, %v3526
    %v3528 = vlaneseq
    %v3529 = vshrl.u32 %v3528, 7
    %v3530 = vsub.s32 0, %v3529
    %v3531 = vrot.slane %v3471, %v3530
    %v3532 = vlaneseq
    %v3533 = vshrl.u32 %v3532, 7
    %v3534 = vsub.s32 0, %v3533
    %v3535 = vrot.slane %v3473, %v3534
    %v3536 = vlaneseq
    %v3537 = vshrl.u32 %v3536, 7
    %v3538 = vsub.s32 0, %v3537
    %v3539 = vrot.slane %v3475, %v3538
    %v3556 = vmul.f32 %v3479, %v3285
    %v3557 = vmul.f32 %v3483, %v3285
    %v3558 = vmul.f32 %v3487, %v3285
    %v3559 = vmul.f32 %v3491, %v3285
    %v3560 = vmul.f32 %v3495, %v3285
    %v3561 = vmul.f32 %v3499, %v3285
    %v3562 = vmul.f32 %v3503, %v3285
    %v3563 = vmul.f32 %v3507, %v3285
    %v3564 = vmul.f32 %v3511, %v3290
    %v3565 = vmul.f32 %v3515, %v3290
    %v3566 = vmul.f32 %v3519, %v3290
    %v3567 = vmul.f32 %v3523, %v3290
    %v3568 = vmul.f32 %v3527, %v3290
    %v3569 = vmul.f32 %v3531, %v3290
    %v3570 = vmul.f32 %v3535, %v3290
    %v3571 = vmul.f32 %v3539, %v3290
    %v3572 = vsel %vm3125, %v3556, -inf
    %v3573 = vrot.slane %v3572, 4
    %v3574 = vmax.f32 %v3572, %v3573
    %v3575 = vrot.slane %v3574, 2
    %v3576 = vmax.f32 %v3574, %v3575
    %v3577 = vrot.slane %v3576, 1
    %v3578 = vmax.f32 %v3576, %v3577
    %v3579 = vsel %vm3125, %v3557, -inf
    %v3580 = vrot.slane %v3579, 4
    %v3581 = vmax.f32 %v3579, %v3580
    %v3582 = vrot.slane %v3581, 2
    %v3583 = vmax.f32 %v3581, %v3582
    %v3584 = vrot.slane %v3583, 1
    %v3585 = vmax.f32 %v3583, %v3584
    %v3586 = vsel %vm3125, %v3558, -inf
    %v3587 = vrot.slane %v3586, 4
    %v3588 = vmax.f32 %v3586, %v3587
    %v3589 = vrot.slane %v3588, 2
    %v3590 = vmax.f32 %v3588, %v3589
    %v3591 = vrot.slane %v3590, 1
    %v3592 = vmax.f32 %v3590, %v3591
    %v3593 = vsel %vm3125, %v3559, -inf
    %v3594 = vrot.slane %v3593, 4
    %v3595 = vmax.f32 %v3593, %v3594
    %v3596 = vrot.slane %v3595, 2
    %v3597 = vmax.f32 %v3595, %v3596
    %v3598 = vrot.slane %v3597, 1
    %v3599 = vmax.f32 %v3597, %v3598
    %v3600 = vsel %vm3125, %v3560, -inf
    %v3601 = vrot.slane %v3600, 4
    %v3602 = vmax.f32 %v3600, %v3601
    %v3603 = vrot.slane %v3602, 2
    %v3604 = vmax.f32 %v3602, %v3603
    %v3605 = vrot.slane %v3604, 1
    %v3606 = vmax.f32 %v3604, %v3605
    %v3607 = vsel %vm3125, %v3561, -inf
    %v3608 = vrot.slane %v3607, 4
    %v3609 = vmax.f32 %v3607, %v3608
    %v3610 = vrot.slane %v3609, 2
    %v3611 = vmax.f32 %v3609, %v3610
    %v3612 = vrot.slane %v3611, 1
    %v3613 = vmax.f32 %v3611, %v3612
    %v3614 = vsel %vm3125, %v3562, -inf
    %v3615 = vrot.slane %v3614, 4
    %v3616 = vmax.f32 %v3614, %v3615
    %v3617 = vrot.slane %v3616, 2
    %v3618 = vmax.f32 %v3616, %v3617
    %v3619 = vrot.slane %v3618, 1
    %v3620 = vmax.f32 %v3618, %v3619
    %v3621 = vsel %vm3125, %v3563, -inf
    %v3622 = vrot.slane %v3621, 4
    %v3623 = vmax.f32 %v3621, %v3622
    %v3624 = vrot.slane %v3623, 2
    %v3625 = vmax.f32 %v3623, %v3624
    %v3626 = vrot.slane %v3625, 1
    %v3627 = vmax.f32 %v3625, %v3626
    %v3628 = vsel %vm3125, %v3564, -inf
    %v3629 = vrot.slane %v3628, 4
    %v3630 = vmax.f32 %v3628, %v3629
    %v3631 = vrot.slane %v3630, 2
    %v3632 = vmax.f32 %v3630, %v3631
    %v3633 = vrot.slane %v3632, 1
    %v3634 = vmax.f32 %v3632, %v3633
    %v3635 = vsel %vm3125, %v3565, -inf
    %v3636 = vrot.slane %v3635, 4
    %v3637 = vmax.f32 %v3635, %v3636
    %v3638 = vrot.slane %v3637, 2
    %v3639 = vmax.f32 %v3637, %v3638
    %v3640 = vrot.slane %v3639, 1
    %v3641 = vmax.f32 %v3639, %v3640
    %v3642 = vsel %vm3125, %v3566, -inf
    %v3643 = vrot.slane %v3642, 4
    %v3644 = vmax.f32 %v3642, %v3643
    %v3645 = vrot.slane %v3644, 2
    %v3646 = vmax.f32 %v3644, %v3645
    %v3647 = vrot.slane %v3646, 1
    %v3648 = vmax.f32 %v3646, %v3647
    %v3649 = vsel %vm3125, %v3567, -inf
    %v3650 = vrot.slane %v3649, 4
    %v3651 = vmax.f32 %v3649, %v3650
    %v3652 = vrot.slane %v3651, 2
    %v3653 = vmax.f32 %v3651, %v3652
    %v3654 = vrot.slane %v3653, 1
    %v3655 = vmax.f32 %v3653, %v3654
    %v3656 = vsel %vm3125, %v3568, -inf
    %v3657 = vrot.slane %v3656, 4
    %v3658 = vmax.f32 %v3656, %v3657
    %v3659 = vrot.slane %v3658, 2
    %v3660 = vmax.f32 %v3658, %v3659
    %v3661 = vrot.slane %v3660, 1
    %v3662 = vmax.f32 %v3660, %v3661
    %v3663 = vsel %vm3125, %v3569, -inf
    %v3664 = vrot.slane %v3663, 4
    %v3665 = vmax.f32 %v3663, %v3664
    %v3666 = vrot.slane %v3665, 2
    %v3667 = vmax.f32 %v3665, %v3666
    %v3668 = vrot.slane %v3667, 1
    %v3669 = vmax.f32 %v3667, %v3668
    %v3670 = vsel %vm3125, %v3570, -inf
    %v3671 = vrot.slane %v3670, 4
    %v3672 = vmax.f32 %v3670, %v3671
    %v3673 = vrot.slane %v3672, 2
    %v3674 = vmax.f32 %v3672, %v3673
    %v3675 = vrot.slane %v3674, 1
    %v3676 = vmax.f32 %v3674, %v3675
    %v3677 = vsel %vm3125, %v3571, -inf
    %v3678 = vrot.slane %v3677, 4
    %v3679 = vmax.f32 %v3677, %v3678
    %v3680 = vrot.slane %v3679, 2
    %v3681 = vmax.f32 %v3679, %v3680
    %v3682 = vrot.slane %v3681, 1
    %v3683 = vmax.f32 %v3681, %v3682
    %v3684 = vsub.f32 %v3556, %v3578
    %v3685 = vsub.f32 %v3557, %v3585
    %v3686 = vsub.f32 %v3558, %v3592
    %v3687 = vsub.f32 %v3559, %v3599
    %v3688 = vsub.f32 %v3560, %v3606
    %v3689 = vsub.f32 %v3561, %v3613
    %v3690 = vsub.f32 %v3562, %v3620
    %v3691 = vsub.f32 %v3563, %v3627
    %v3692 = vsub.f32 %v3564, %v3634
    %v3693 = vsub.f32 %v3565, %v3641
    %v3694 = vsub.f32 %v3566, %v3648
    %v3695 = vsub.f32 %v3567, %v3655
    %v3696 = vsub.f32 %v3568, %v3662
    %v3697 = vsub.f32 %v3569, %v3669
    %v3698 = vsub.f32 %v3570, %v3676
    %v3699 = vsub.f32 %v3571, %v3683
    %v3700 = vmul.f32 %v3684, 1.442695
    %v3701 = vpow.pop %v3700
    %v3702 = vmul.f32 %v3685, 1.442695
    %v3703 = vpow.pop %v3702
    %v3704 = vmul.f32 %v3686, 1.442695
    %v3705 = vpow.pop %v3704
    %v3706 = vmul.f32 %v3687, 1.442695
    %v3707 = vpow.pop %v3706
    %v3708 = vmul.f32 %v3688, 1.442695
    %v3709 = vpow.pop %v3708
    %v3710 = vmul.f32 %v3689, 1.442695
    %v3711 = vpow.pop %v3710
    %v3712 = vmul.f32 %v3690, 1.442695
    %v3713 = vpow.pop %v3712
    %v3714 = vmul.f32 %v3691, 1.442695
    %v3715 = vpow.pop %v3714
    %v3716 = vmul.f32 %v3692, 1.442695
    %v3717 = vpow.pop %v3716
    %v3718 = vmul.f32 %v3693, 1.442695
    %v3719 = vpow.pop %v3718
    %v3720 = vmul.f32 %v3694, 1.442695
    %v3721 = vpow.pop %v3720
    %v3722 = vmul.f32 %v3695, 1.442695
    %v3723 = vpow.pop %v3722
    %v3724 = vmul.f32 %v3696, 1.442695
    %v3725 = vpow.pop %v3724
    %v3726 = vmul.f32 %v3697, 1.442695
    %v3727 = vpow.pop %v3726
    %v3728 = vmul.f32 %v3698, 1.442695
    %v3729 = vpow.pop %v3728
    %v3730 = vmul.f32 %v3699, 1.442695
    %v3731 = vpow.pop %v3730
    %v3732 = vsel %vm3125, %v3701, 0.0
    %v3733 = vrot.slane %v3732, 4
    %v3734 = vadd.f32 %v3732, %v3733
    %v3735 = vrot.slane %v3734, 2
    %v3736 = vadd.f32 %v3734, %v3735
    %v3737 = vrot.slane %v3736, 1
    %v3738 = vadd.f32 %v3736, %v3737
    %v3739 = vsel %vm3125, %v3703, 0.0
    %v3740 = vrot.slane %v3739, 4
    %v3741 = vadd.f32 %v3739, %v3740
    %v3742 = vrot.slane %v3741, 2
    %v3743 = vadd.f32 %v3741, %v3742
    %v3744 = vrot.slane %v3743, 1
    %v3745 = vadd.f32 %v3743, %v3744
    %v3746 = vsel %vm3125, %v3705, 0.0
    %v3747 = vrot.slane %v3746, 4
    %v3748 = vadd.f32 %v3746, %v3747
    %v3749 = vrot.slane %v3748, 2
    %v3750 = vadd.f32 %v3748, %v3749
    %v3751 = vrot.slane %v3750, 1
    %v3752 = vadd.f32 %v3750, %v3751
    %v3753 = vsel %vm3125, %v3707, 0.0
    %v3754 = vrot.slane %v3753, 4
    %v3755 = vadd.f32 %v3753, %v3754
    %v3756 = vrot.slane %v3755, 2
    %v3757 = vadd.f32 %v3755, %v3756
    %v3758 = vrot.slane %v3757, 1
    %v3759 = vadd.f32 %v3757, %v3758
    %v3760 = vsel %vm3125, %v3709, 0.0
    %v3761 = vrot.slane %v3760, 4
    %v3762 = vadd.f32 %v3760, %v3761
    %v3763 = vrot.slane %v3762, 2
    %v3764 = vadd.f32 %v3762, %v3763
    %v3765 = vrot.slane %v3764, 1
    %v3766 = vadd.f32 %v3764, %v3765
    %v3767 = vsel %vm3125, %v3711, 0.0
    %v3768 = vrot.slane %v3767, 4
    %v3769 = vadd.f32 %v3767, %v3768
    %v3770 = vrot.slane %v3769, 2
    %v3771 = vadd.f32 %v3769, %v3770
    %v3772 = vrot.slane %v3771, 1
    %v3773 = vadd.f32 %v3771, %v3772
    %v3774 = vsel %vm3125, %v3713, 0.0
    %v3775 = vrot.slane %v3774, 4
    %v3776 = vadd.f32 %v3774, %v3775
    %v3777 = vrot.slane %v3776, 2
    %v3778 = vadd.f32 %v3776, %v3777
    %v3779 = vrot.slane %v3778, 1
    %v3780 = vadd.f32 %v3778, %v3779
    %v3781 = vsel %vm3125, %v3715, 0.0
    %v3782 = vrot.slane %v3781, 4
    %v3783 = vadd.f32 %v3781, %v3782
    %v3784 = vrot.slane %v3783, 2
    %v3785 = vadd.f32 %v3783, %v3784
    %v3786 = vrot.slane %v3785, 1
    %v3787 = vadd.f32 %v3785, %v3786
    %v3788 = vsel %vm3125, %v3717, 0.0
    %v3789 = vrot.slane %v3788, 4
    %v3790 = vadd.f32 %v3788, %v3789
    %v3791 = vrot.slane %v3790, 2
    %v3792 = vadd.f32 %v3790, %v3791
    %v3793 = vrot.slane %v3792, 1
    %v3794 = vadd.f32 %v3792, %v3793
    %v3795 = vsel %vm3125, %v3719, 0.0
    %v3796 = vrot.slane %v3795, 4
    %v3797 = vadd.f32 %v3795, %v3796
    %v3798 = vrot.slane %v3797, 2
    %v3799 = vadd.f32 %v3797, %v3798
    %v3800 = vrot.slane %v3799, 1
    %v3801 = vadd.f32 %v3799, %v3800
    %v3802 = vsel %vm3125, %v3721, 0.0
    %v3803 = vrot.slane %v3802, 4
    %v3804 = vadd.f32 %v3802, %v3803
    %v3805 = vrot.slane %v3804, 2
    %v3806 = vadd.f32 %v3804, %v3805
    %v3807 = vrot.slane %v3806, 1
    %v3808 = vadd.f32 %v3806, %v3807
    %v3809 = vsel %vm3125, %v3723, 0.0
    %v3810 = vrot.slane %v3809, 4
    %v3811 = vadd.f32 %v3809, %v3810
    %v3812 = vrot.slane %v3811, 2
    %v3813 = vadd.f32 %v3811, %v3812
    %v3814 = vrot.slane %v3813, 1
    %v3815 = vadd.f32 %v3813, %v3814
    %v3816 = vsel %vm3125, %v3725, 0.0
    %v3817 = vrot.slane %v3816, 4
    %v3818 = vadd.f32 %v3816, %v3817
    %v3819 = vrot.slane %v3818, 2
    %v3820 = vadd.f32 %v3818, %v3819
    %v3821 = vrot.slane %v3820, 1
    %v3822 = vadd.f32 %v3820, %v3821
    %v3823 = vsel %vm3125, %v3727, 0.0
    %v3824 = vrot.slane %v3823, 4
    %v3825 = vadd.f32 %v3823, %v3824
    %v3826 = vrot.slane %v3825, 2
    %v3827 = vadd.f32 %v3825, %v3826
    %v3828 = vrot.slane %v3827, 1
    %v3829 = vadd.f32 %v3827, %v3828
    %v3830 = vsel %vm3125, %v3729, 0.0
    %v3831 = vrot.slane %v3830, 4
    %v3832 = vadd.f32 %v3830, %v3831
    %v3833 = vrot.slane %v3832, 2
    %v3834 = vadd.f32 %v3832, %v3833
    %v3835 = vrot.slane %v3834, 1
    %v3836 = vadd.f32 %v3834, %v3835
    %v3837 = vsel %vm3125, %v3731, 0.0
    %v3838 = vrot.slane %v3837, 4
    %v3839 = vadd.f32 %v3837, %v3838
    %v3840 = vrot.slane %v3839, 2
    %v3841 = vadd.f32 %v3839, %v3840
    %v3842 = vrot.slane %v3841, 1
    %v3843 = vadd.f32 %v3841, %v3842
    %v3844 = vrcp.pop %v3738
    %v3845 = vrcp.pop %v3745
    %v3846 = vrcp.pop %v3752
    %v3847 = vrcp.pop %v3759
    %v3848 = vrcp.pop %v3766
    %v3849 = vrcp.pop %v3773
    %v3850 = vrcp.pop %v3780
    %v3851 = vrcp.pop %v3787
    %v3852 = vrcp.pop %v3794
    %v3853 = vrcp.pop %v3801
    %v3854 = vrcp.pop %v3808
    %v3855 = vrcp.pop %v3815
    %v3856 = vrcp.pop %v3822
    %v3857 = vrcp.pop %v3829
    %v3858 = vrcp.pop %v3836
    %v3859 = vrcp.pop %v3843
    %v3860 = vmul.f32 %v3701, %v3844
    %v3861 = vmul.f32 %v3703, %v3845
    %v3862 = vmul.f32 %v3705, %v3846
    %v3863 = vmul.f32 %v3707, %v3847
    %v3864 = vmul.f32 %v3709, %v3848
    %v3865 = vmul.f32 %v3711, %v3849
    %v3866 = vmul.f32 %v3713, %v3850
    %v3867 = vmul.f32 %v3715, %v3851
    %v3868 = vmul.f32 %v3717, %v3852
    %v3869 = vmul.f32 %v3719, %v3853
    %v3870 = vmul.f32 %v3721, %v3854
    %v3871 = vmul.f32 %v3723, %v3855
    %v3872 = vmul.f32 %v3725, %v3856
    %v3873 = vmul.f32 %v3727, %v3857
    %v3874 = vmul.f32 %v3729, %v3858
    %v3875 = vmul.f32 %v3731, %v3859
    %v3876 = vmul.f32 %v3860, %v3368
    %v3877 = vmul.f32 %v3861, %v3368
    %v3878 = vmul.f32 %v3862, %v3368
    %v3879 = vmul.f32 %v3863, %v3368
    %v3880 = vmul.f32 %v3864, %v3368
    %v3881 = vmul.f32 %v3865, %v3368
    %v3882 = vmul.f32 %v3866, %v3368
    %v3883 = vmul.f32 %v3867, %v3368
    %v3884 = vmul.f32 %v3868, %v3373
    %v3885 = vmul.f32 %v3869, %v3373
    %v3886 = vmul.f32 %v3870, %v3373
    %v3887 = vmul.f32 %v3871, %v3373
    %v3888 = vmul.f32 %v3872, %v3373
    %v3889 = vmul.f32 %v3873, %v3373
    %v3890 = vmul.f32 %v3874, %v3373
    %v3891 = vmul.f32 %v3875, %v3373
    %v3892 = vsel %vm3125, %v3876, 0.0
    %v3893 = vrot.slane %v3892, 4
    %v3894 = vadd.f32 %v3892, %v3893
    %v3895 = vrot.slane %v3894, 2
    %v3896 = vadd.f32 %v3894, %v3895
    %v3897 = vrot.slane %v3896, 1
    %v3898 = vadd.f32 %v3896, %v3897
    %v3899 = vsel %vm3125, %v3877, 0.0
    %v3900 = vrot.slane %v3899, 4
    %v3901 = vadd.f32 %v3899, %v3900
    %v3902 = vrot.slane %v3901, 2
    %v3903 = vadd.f32 %v3901, %v3902
    %v3904 = vrot.slane %v3903, 1
    %v3905 = vadd.f32 %v3903, %v3904
    %v3906 = vsel %vm3125, %v3878, 0.0
    %v3907 = vrot.slane %v3906, 4
    %v3908 = vadd.f32 %v3906, %v3907
    %v3909 = vrot.slane %v3908, 2
    %v3910 = vadd.f32 %v3908, %v3909
    %v3911 = vrot.slane %v3910, 1
    %v3912 = vadd.f32 %v3910, %v3911
    %v3913 = vsel %vm3125, %v3879, 0.0
    %v3914 = vrot.slane %v3913, 4
    %v3915 = vadd.f32 %v3913, %v3914
    %v3916 = vrot.slane %v3915, 2
    %v3917 = vadd.f32 %v3915, %v3916
    %v3918 = vrot.slane %v3917, 1
    %v3919 = vadd.f32 %v3917, %v3918
    %v3920 = vsel %vm3125, %v3880, 0.0
    %v3921 = vrot.slane %v3920, 4
    %v3922 = vadd.f32 %v3920, %v3921
    %v3923 = vrot.slane %v3922, 2
    %v3924 = vadd.f32 %v3922, %v3923
    %v3925 = vrot.slane %v3924, 1
    %v3926 = vadd.f32 %v3924, %v3925
    %v3927 = vsel %vm3125, %v3881, 0.0
    %v3928 = vrot.slane %v3927, 4
    %v3929 = vadd.f32 %v3927, %v3928
    %v3930 = vrot.slane %v3929, 2
    %v3931 = vadd.f32 %v3929, %v3930
    %v3932 = vrot.slane %v3931, 1
    %v3933 = vadd.f32 %v3931, %v3932
    %v3934 = vsel %vm3125, %v3882, 0.0
    %v3935 = vrot.slane %v3934, 4
    %v3936 = vadd.f32 %v3934, %v3935
    %v3937 = vrot.slane %v3936, 2
    %v3938 = vadd.f32 %v3936, %v3937
    %v3939 = vrot.slane %v3938, 1
    %v3940 = vadd.f32 %v3938, %v3939
    %v3941 = vsel %vm3125, %v3883, 0.0
    %v3942 = vrot.slane %v3941, 4
    %v3943 = vadd.f32 %v3941, %v3942
    %v3944 = vrot.slane %v3943, 2
    %v3945 = vadd.f32 %v3943, %v3944
    %v3946 = vrot.slane %v3945, 1
    %v3947 = vadd.f32 %v3945, %v3946
    %v3948 = vsel %vm3125, %v3884, 0.0
    %v3949 = vrot.slane %v3948, 4
    %v3950 = vadd.f32 %v3948, %v3949
    %v3951 = vrot.slane %v3950, 2
    %v3952 = vadd.f32 %v3950, %v3951
    %v3953 = vrot.slane %v3952, 1
    %v3954 = vadd.f32 %v3952, %v3953
    %v3955 = vsel %vm3125, %v3885, 0.0
    %v3956 = vrot.slane %v3955, 4
    %v3957 = vadd.f32 %v3955, %v3956
    %v3958 = vrot.slane %v3957, 2
    %v3959 = vadd.f32 %v3957, %v3958
    %v3960 = vrot.slane %v3959, 1
    %v3961 = vadd.f32 %v3959, %v3960
    %v3962 = vsel %vm3125, %v3886, 0.0
    %v3963 = vrot.slane %v3962, 4
    %v3964 = vadd.f32 %v3962, %v3963
    %v3965 = vrot.slane %v3964, 2
    %v3966 = vadd.f32 %v3964, %v3965
    %v3967 = vrot.slane %v3966, 1
    %v3968 = vadd.f32 %v3966, %v3967
    %v3969 = vsel %vm3125, %v3887, 0.0
    %v3970 = vrot.slane %v3969, 4
    %v3971 = vadd.f32 %v3969, %v3970
    %v3972 = vrot.slane %v3971, 2
    %v3973 = vadd.f32 %v3971, %v3972
    %v3974 = vrot.slane %v3973, 1
    %v3975 = vadd.f32 %v3973, %v3974
    %v3976 = vsel %vm3125, %v3888, 0.0
    %v3977 = vrot.slane %v3976, 4
    %v3978 = vadd.f32 %v3976, %v3977
    %v3979 = vrot.slane %v3978, 2
    %v3980 = vadd.f32 %v3978, %v3979
    %v3981 = vrot.slane %v3980, 1
    %v3982 = vadd.f32 %v3980, %v3981
    %v3983 = vsel %vm3125, %v3889, 0.0
    %v3984 = vrot.slane %v3983, 4
    %v3985 = vadd.f32 %v3983, %v3984
    %v3986 = vrot.slane %v3985, 2
    %v3987 = vadd.f32 %v3985, %v3986
    %v3988 = vrot.slane %v3987, 1
    %v3989 = vadd.f32 %v3987, %v3988
    %v3990 = vsel %vm3125, %v3890, 0.0
    %v3991 = vrot.slane %v3990, 4
    %v3992 = vadd.f32 %v3990, %v3991
    %v3993 = vrot.slane %v3992, 2
    %v3994 = vadd.f32 %v3992, %v3993
    %v3995 = vrot.slane %v3994, 1
    %v3996 = vadd.f32 %v3994, %v3995
    %v3997 = vsel %vm3125, %v3891, 0.0
    %v3998 = vrot.slane %v3997, 4
    %v3999 = vadd.f32 %v3997, %v3998
    %v4000 = vrot.slane %v3999, 2
    %v4001 = vadd.f32 %v3999, %v4000
    %v4002 = vrot.slane %v4001, 1
    %v4003 = vadd.f32 %v4001, %v4002
    %v4004 = vlaneseq
    %v4005 = vshrl.u32 %v4004, 7
    %v4006 = vsub.s32 3, %v4005
    %v4007 = vrot.slane %v3119, %v4006
    %v4024 = vsel %vm2903, %v3905, %v3898
    %vm4025 = vcmask 1042434
    %v4026 = vsel %vm4025, %v3912, %v4024
    %vm4027 = vcmask 1043459
    %v4028 = vsel %vm4027, %v3919, %v4026
    %vm4029 = vcmask 1044484
    %v4030 = vsel %vm4029, %v3926, %v4028
    %vm4031 = vcmask 1045509
    %v4032 = vsel %vm4031, %v3933, %v4030
    %vm4033 = vcmask 1046534
    %v4034 = vsel %vm4033, %v3940, %v4032
    %vm4035 = vcmask 1047559
    %v4036 = vsel %vm4035, %v3947, %v4034
    %v4037 = vsel %vm2903, %v3961, %v3954
    %v4038 = vsel %vm4025, %v3968, %v4037
    %v4039 = vsel %vm4027, %v3975, %v4038
    %v4040 = vsel %vm4029, %v3982, %v4039
    %v4041 = vsel %vm4031, %v3989, %v4040
    %v4042 = vsel %vm4033, %v3996, %v4041
    %v4043 = vsel %vm4035, %v4003, %v4042
    %4044 = vrot.lane.b32.xlu0 %v3114, 116
    %v4045 = vpop.permute.xlu0 %4044
    %v4046 = vsel %vm3125, %v4036, 0
    %v4048 = vsel %vm3125, %v4043, 0
    %v4050 = vsel %vm340, %v4045, 0
    %4052 = vmatprep.subr.mxu0 0.0
    %4053 = vmatpush1.msra.mxu0 0.0
    %4054 = vmatprep.subr.mxu0 0.0
    %4055 = vmatpush1.msra.mxu0 0.0
    %4056 = vmatprep.subr.mxu0 0.0
    %4057 = vmatpush1.msra.mxu0 0.0
    %4058 = vmatprep.subr.mxu0 0.0
    %4059 = vmatpush1.msra.mxu0 0.0
    %4060 = vmatprep.subr.mxu0 0.0
    %4061 = vmatpush1.msra.mxu0 0.0
    %4062 = vmatprep.subr.mxu0 0.0
    %4063 = vmatpush1.msra.mxu0 0.0
    %4064 = vmatprep.subr.mxu0 0.0
    %4065 = vmatpush1.msra.mxu0 0.0
    %4066 = vmatprep.subr.mxu0 0.0
    %4067 = vmatpush1.msra.mxu0 0.0
    %4068 = vmatprep.subr.mxu0 0.0
    %4069 = vmatpush1.msra.mxu0 0.0
    %4070 = vmatprep.subr.mxu0 0.0
    %4071 = vmatpush1.msra.mxu0 0.0
    %4072 = vmatprep.subr.mxu0 0.0
    %4073 = vmatpush1.msra.mxu0 0.0
    %4074 = vmatprep.subr.mxu0 0.0
    %4075 = vmatpush1.msra.mxu0 0.0
    %4076 = vmatprep.subr.mxu0 0.0
    %4077 = vmatpush1.msra.mxu0 0.0
    %4078 = vmatprep.subr.mxu0 0.0
    %4079 = vmatpush1.msra.mxu0 0.0
    %4080 = vmatprep.subr.mxu0 0.0
    %4081 = vmatpush1.msra.mxu0 0.0
    %4082 = vmatprep.subr.mxu0 0.0
    %4083 = vmatpush1.msra.mxu0 %v4050
    %4084 = vmatprep.subr.mxu0 0.0
    %4085 = vmatpush2.msra.mxu0 0.0
    %4086 = vmatprep.subr.mxu0 0.0
    %4087 = vmatpush2.msra.mxu0 0.0
    %4088 = vmatprep.subr.mxu0 0.0
    %4089 = vmatpush2.msra.mxu0 0.0
    %4090 = vmatprep.subr.mxu0 0.0
    %4091 = vmatpush2.msra.mxu0 0.0
    %4092 = vmatprep.subr.mxu0 0.0
    %4093 = vmatpush2.msra.mxu0 0.0
    %4094 = vmatprep.subr.mxu0 0.0
    %4095 = vmatpush2.msra.mxu0 0.0
    %4096 = vmatprep.subr.mxu0 0.0
    %4097 = vmatpush2.msra.mxu0 0.0
    %4098 = vmatprep.subr.mxu0 0.0
    %4099 = vmatpush2.msra.mxu0 0.0
    %4100 = vmatprep.subr.mxu0 0.0
    %4101 = vmatpush2.msra.mxu0 0.0
    %4102 = vmatprep.subr.mxu0 0.0
    %4103 = vmatpush2.msra.mxu0 0.0
    %4104 = vmatprep.subr.mxu0 0.0
    %4105 = vmatpush2.msra.mxu0 0.0
    %4106 = vmatprep.subr.mxu0 0.0
    %4107 = vmatpush2.msra.mxu0 0.0
    %4108 = vmatprep.subr.mxu0 0.0
    %4109 = vmatpush2.msra.mxu0 0.0
    %4110 = vmatprep.subr.mxu0 0.0
    %4111 = vmatpush2.msra.mxu0 0.0
    %4112 = vmatprep.subr.mxu0 0.0
    %4113 = vmatpush2.msra.mxu0 0.0
    %4114 = vmatprep.subr.mxu0 0.0
    %4115 = vmatpush2.msra.mxu0 0.0
    %4116 = vmatprep.mubr.f32.mxu0 0.0
    %4117 = vmatmul.mubr.f32.gmra.mxu0 %v4046
    %v4118 = vpop.f32.mrf.mxu0
    %v4119 = vadd.f32 %v4007, %v4118
    %v4120 = vpop.f32.mrf.mxu0
    %4121 = vmatprep.mubr.f32.mxu0 0.0
    %4122 = vmatmul.mubr.f32.gmra.mxu0 %v4048
    %v4123 = vpop.f32.mrf.mxu0
    %v4124 = vadd.f32 %v4007, %v4123
    %v4125 = vpop.f32.mrf.mxu0
    %4126 = vdwg.mxu0
    %v4127 = vadd.f32 %v3112, %v4119
    %v4128 = vadd.f32 %v3113, %v4124
    %v4129 = vsel %vm3125, %v4127, 0.0
    %4130 = vadd.xlane.f32.xlu0 %v4129
    %v4131 = vpop.xlane.xlu0 %4130
    %v4132 = vsel %vm3125, %v4128, 0.0
    %4133 = vadd.xlane.f32.xlu0 %v4132
    %v4134 = vpop.xlane.xlu0 %4133
    %v4135 = vrcp.pop 4.0
    %v4136 = vmul.f32 %v4131, %v4135
    %v4137 = vmul.f32 %v4134, %v4135
    %v4138 = vsub.f32 %v4127, %v4136
    %v4139 = vsub.f32 %v4128, %v4137
    %v4140 = vmul.f32 %v4138, %v4138
    %v4141 = vmul.f32 %v4139, %v4139
    %v4142 = vsel %vm3125, %v4140, 0.0
    %4143 = vadd.xlane.f32.xlu0 %v4142
    %v4144 = vpop.xlane.xlu0 %4143
    %v4145 = vsel %vm3125, %v4141, 0.0
    %4146 = vadd.xlane.f32.xlu0 %v4145
    %v4147 = vpop.xlane.xlu0 %4146
    %v4148 = vmul.f32 %v4144, %v4135
    %v4149 = vmul.f32 %v4147, %v4135
    %v4150 = vadd.f32 %v4148, 1e-05
    %v4151 = vadd.f32 %v4149, 1e-05
    %v4152 = vrsqrt.pop %v4150
    %v4153 = vrsqrt.pop %v4151
    %v4154 = vmul.f32 %v4138, %v4152
    %v4155 = vmul.f32 %v4139, %v4153
    %v4156 = vlaneseq
    %v4157 = vshrl.u32 %v4156, 7
    %v4158 = vsub.s32 2, %v4157
    %v4159 = vrot.slane %v3120, %v4158
    %v4160 = vmul.f32 %v4154, %v4159
    %v4161 = vmul.f32 %v4155, %v4159
    %v4162 = vlaneseq
    %v4163 = vshrl.u32 %v4162, 7
    %v4164 = vsub.s32 3, %v4163
    %v4165 = vrot.slane %v3120, %v4164
    %v4166 = vadd.f32 %v4160, %v4165
    %v4167 = vadd.f32 %v4161, %v4165
    %v4168 = vlaneseq
    %v4169 = vshrl.u32 %v4168, 7
    %v4170 = vsub.s32 4, %v4169
    %v4171 = vrot.slane %v3119, %v4170
    %4172 = vrot.lane.b32.xlu0 %v3114, 112
    %v4173 = vpop.permute.xlu0 %4172
    %v4175 = vsel %vm3125, %v4166, 0
    %v4178 = vsel %vm3125, %v4167, 0
    %v4180 = vsel %vm340, %v4173, 0
    %4182 = vmatprep.subr.mxu0 0.0
    %4183 = vmatpush1.msra.mxu0 0.0
    %4184 = vmatprep.subr.mxu0 0.0
    %4185 = vmatpush1.msra.mxu0 0.0
    %4186 = vmatprep.subr.mxu0 0.0
    %4187 = vmatpush1.msra.mxu0 0.0
    %4188 = vmatprep.subr.mxu0 0.0
    %4189 = vmatpush1.msra.mxu0 0.0
    %4190 = vmatprep.subr.mxu0 0.0
    %4191 = vmatpush1.msra.mxu0 0.0
    %4192 = vmatprep.subr.mxu0 0.0
    %4193 = vmatpush1.msra.mxu0 0.0
    %4194 = vmatprep.subr.mxu0 0.0
    %4195 = vmatpush1.msra.mxu0 0.0
    %4196 = vmatprep.subr.mxu0 0.0
    %4197 = vmatpush1.msra.mxu0 0.0
    %4198 = vmatprep.subr.mxu0 0.0
    %4199 = vmatpush1.msra.mxu0 0.0
    %4200 = vmatprep.subr.mxu0 0.0
    %4201 = vmatpush1.msra.mxu0 0.0
    %4202 = vmatprep.subr.mxu0 0.0
    %4203 = vmatpush1.msra.mxu0 0.0
    %4204 = vmatprep.subr.mxu0 0.0
    %4205 = vmatpush1.msra.mxu0 0.0
    %4206 = vmatprep.subr.mxu0 0.0
    %4207 = vmatpush1.msra.mxu0 0.0
    %4208 = vmatprep.subr.mxu0 0.0
    %4209 = vmatpush1.msra.mxu0 0.0
    %4210 = vmatprep.subr.mxu0 0.0
    %4211 = vmatpush1.msra.mxu0 0.0
    %4212 = vmatprep.subr.mxu0 0.0
    %4213 = vmatpush1.msra.mxu0 %v4180
    %4214 = vmatprep.subr.mxu0 0.0
    %4215 = vmatpush2.msra.mxu0 0.0
    %4216 = vmatprep.subr.mxu0 0.0
    %4217 = vmatpush2.msra.mxu0 0.0
    %4218 = vmatprep.subr.mxu0 0.0
    %4219 = vmatpush2.msra.mxu0 0.0
    %4220 = vmatprep.subr.mxu0 0.0
    %4221 = vmatpush2.msra.mxu0 0.0
    %4222 = vmatprep.subr.mxu0 0.0
    %4223 = vmatpush2.msra.mxu0 0.0
    %4224 = vmatprep.subr.mxu0 0.0
    %4225 = vmatpush2.msra.mxu0 0.0
    %4226 = vmatprep.subr.mxu0 0.0
    %4227 = vmatpush2.msra.mxu0 0.0
    %4228 = vmatprep.subr.mxu0 0.0
    %4229 = vmatpush2.msra.mxu0 0.0
    %4230 = vmatprep.subr.mxu0 0.0
    %4231 = vmatpush2.msra.mxu0 0.0
    %4232 = vmatprep.subr.mxu0 0.0
    %4233 = vmatpush2.msra.mxu0 0.0
    %4234 = vmatprep.subr.mxu0 0.0
    %4235 = vmatpush2.msra.mxu0 0.0
    %4236 = vmatprep.subr.mxu0 0.0
    %4237 = vmatpush2.msra.mxu0 0.0
    %4238 = vmatprep.subr.mxu0 0.0
    %4239 = vmatpush2.msra.mxu0 0.0
    %4240 = vmatprep.subr.mxu0 0.0
    %4241 = vmatpush2.msra.mxu0 0.0
    %4242 = vmatprep.subr.mxu0 0.0
    %4243 = vmatpush2.msra.mxu0 0.0
    %4244 = vmatprep.subr.mxu0 0.0
    %4245 = vmatpush2.msra.mxu0 0.0
    %4246 = vmatprep.mubr.f32.mxu0 0.0
    %4247 = vmatmul.mubr.f32.gmra.mxu0 %v4175
    %v4248 = vpop.f32.mrf.mxu0
    %v4249 = vadd.f32 %v4171, %v4248
    %v4250 = vpop.f32.mrf.mxu0
    %4251 = vmatprep.mubr.f32.mxu0 0.0
    %4252 = vmatmul.mubr.f32.gmra.mxu0 %v4178
    %v4253 = vpop.f32.mrf.mxu0
    %v4254 = vadd.f32 %v4171, %v4253
    %v4255 = vpop.f32.mrf.mxu0
    %4256 = vdwg.mxu0
    %v4257 = vlaneseq
    %v4258 = vshrl.u32 %v4257, 7
    %v4259 = vsub.s32 5, %v4258
    %v4260 = vrot.slane %v3119, %v4259
    %4261 = vrot.lane.b32.xlu0 %v3114, 108
    %v4262 = vpop.permute.xlu0 %4261
    %v4264 = vsel %vm3125, %v3094, 0
    %v4267 = vsel %vm3125, %v3099, 0
    %v4270 = vsel %vm3125, %v3104, 0
    %v4273 = vsel %vm3125, %v3109, 0
    %v4275 = vsel %vm340, %v4262, 0
    %4277 = vmatprep.subr.mxu0 0.0
    %4278 = vmatpush1.msra.mxu0 0.0
    %4279 = vmatprep.subr.mxu0 0.0
    %4280 = vmatpush1.msra.mxu0 0.0
    %4281 = vmatprep.subr.mxu0 0.0
    %4282 = vmatpush1.msra.mxu0 0.0
    %4283 = vmatprep.subr.mxu0 0.0
    %4284 = vmatpush1.msra.mxu0 0.0
    %4285 = vmatprep.subr.mxu0 0.0
    %4286 = vmatpush1.msra.mxu0 0.0
    %4287 = vmatprep.subr.mxu0 0.0
    %4288 = vmatpush1.msra.mxu0 0.0
    %4289 = vmatprep.subr.mxu0 0.0
    %4290 = vmatpush1.msra.mxu0 0.0
    %4291 = vmatprep.subr.mxu0 0.0
    %4292 = vmatpush1.msra.mxu0 0.0
    %4293 = vmatprep.subr.mxu0 0.0
    %4294 = vmatpush1.msra.mxu0 0.0
    %4295 = vmatprep.subr.mxu0 0.0
    %4296 = vmatpush1.msra.mxu0 0.0
    %4297 = vmatprep.subr.mxu0 0.0
    %4298 = vmatpush1.msra.mxu0 0.0
    %4299 = vmatprep.subr.mxu0 0.0
    %4300 = vmatpush1.msra.mxu0 0.0
    %4301 = vmatprep.subr.mxu0 0.0
    %4302 = vmatpush1.msra.mxu0 0.0
    %4303 = vmatprep.subr.mxu0 0.0
    %4304 = vmatpush1.msra.mxu0 0.0
    %4305 = vmatprep.subr.mxu0 0.0
    %4306 = vmatpush1.msra.mxu0 0.0
    %4307 = vmatprep.subr.mxu0 0.0
    %4308 = vmatpush1.msra.mxu0 %v4275
    %4309 = vmatprep.subr.mxu0 0.0
    %4310 = vmatpush2.msra.mxu0 0.0
    %4311 = vmatprep.subr.mxu0 0.0
    %4312 = vmatpush2.msra.mxu0 0.0
    %4313 = vmatprep.subr.mxu0 0.0
    %4314 = vmatpush2.msra.mxu0 0.0
    %4315 = vmatprep.subr.mxu0 0.0
    %4316 = vmatpush2.msra.mxu0 0.0
    %4317 = vmatprep.subr.mxu0 0.0
    %4318 = vmatpush2.msra.mxu0 0.0
    %4319 = vmatprep.subr.mxu0 0.0
    %4320 = vmatpush2.msra.mxu0 0.0
    %4321 = vmatprep.subr.mxu0 0.0
    %4322 = vmatpush2.msra.mxu0 0.0
    %4323 = vmatprep.subr.mxu0 0.0
    %4324 = vmatpush2.msra.mxu0 0.0
    %4325 = vmatprep.subr.mxu0 0.0
    %4326 = vmatpush2.msra.mxu0 0.0
    %4327 = vmatprep.subr.mxu0 0.0
    %4328 = vmatpush2.msra.mxu0 0.0
    %4329 = vmatprep.subr.mxu0 0.0
    %4330 = vmatpush2.msra.mxu0 0.0
    %4331 = vmatprep.subr.mxu0 0.0
    %4332 = vmatpush2.msra.mxu0 0.0
    %4333 = vmatprep.subr.mxu0 0.0
    %4334 = vmatpush2.msra.mxu0 0.0
    %4335 = vmatprep.subr.mxu0 0.0
    %4336 = vmatpush2.msra.mxu0 0.0
    %4337 = vmatprep.subr.mxu0 0.0
    %4338 = vmatpush2.msra.mxu0 0.0
    %4339 = vmatprep.subr.mxu0 0.0
    %4340 = vmatpush2.msra.mxu0 0.0
    %4341 = vmatprep.mubr.f32.mxu0 0.0
    %4342 = vmatmul.mubr.f32.gmra.mxu0 %v4264
    %v4343 = vpop.f32.mrf.mxu0
    %v4344 = vadd.f32 %v4260, %v4343
    %v4345 = vpop.f32.mrf.mxu0
    %4346 = vmatprep.mubr.f32.mxu0 0.0
    %4347 = vmatmul.mubr.f32.gmra.mxu0 %v4267
    %v4348 = vpop.f32.mrf.mxu0
    %v4349 = vadd.f32 %v4260, %v4348
    %v4350 = vpop.f32.mrf.mxu0
    %4351 = vmatprep.mubr.f32.mxu0 0.0
    %4352 = vmatmul.mubr.f32.gmra.mxu0 %v4270
    %v4353 = vpop.f32.mrf.mxu0
    %v4354 = vadd.f32 %v4260, %v4353
    %v4355 = vpop.f32.mrf.mxu0
    %4356 = vmatprep.mubr.f32.mxu0 0.0
    %4357 = vmatmul.mubr.f32.gmra.mxu0 %v4273
    %v4358 = vpop.f32.mrf.mxu0
    %v4359 = vadd.f32 %v4260, %v4358
    %v4360 = vpop.f32.mrf.mxu0
    %4361 = vdwg.mxu0
    %v4362 = vlaneseq
    %v4363 = vshrl.u32 %v4362, 7
    %v4364 = vsub.s32 6, %v4363
    %v4365 = vrot.slane %v3119, %v4364
    %4366 = vrot.lane.b32.xlu0 %v3114, 104
    %v4367 = vpop.permute.xlu0 %4366
    %v4368 = vsel %vm340, %v4367, 0
    %4370 = vmatprep.subr.mxu0 0.0
    %4371 = vmatpush1.msra.mxu0 0.0
    %4372 = vmatprep.subr.mxu0 0.0
    %4373 = vmatpush1.msra.mxu0 0.0
    %4374 = vmatprep.subr.mxu0 0.0
    %4375 = vmatpush1.msra.mxu0 0.0
    %4376 = vmatprep.subr.mxu0 0.0
    %4377 = vmatpush1.msra.mxu0 0.0
    %4378 = vmatprep.subr.mxu0 0.0
    %4379 = vmatpush1.msra.mxu0 0.0
    %4380 = vmatprep.subr.mxu0 0.0
    %4381 = vmatpush1.msra.mxu0 0.0
    %4382 = vmatprep.subr.mxu0 0.0
    %4383 = vmatpush1.msra.mxu0 0.0
    %4384 = vmatprep.subr.mxu0 0.0
    %4385 = vmatpush1.msra.mxu0 0.0
    %4386 = vmatprep.subr.mxu0 0.0
    %4387 = vmatpush1.msra.mxu0 0.0
    %4388 = vmatprep.subr.mxu0 0.0
    %4389 = vmatpush1.msra.mxu0 0.0
    %4390 = vmatprep.subr.mxu0 0.0
    %4391 = vmatpush1.msra.mxu0 0.0
    %4392 = vmatprep.subr.mxu0 0.0
    %4393 = vmatpush1.msra.mxu0 0.0
    %4394 = vmatprep.subr.mxu0 0.0
    %4395 = vmatpush1.msra.mxu0 0.0
    %4396 = vmatprep.subr.mxu0 0.0
    %4397 = vmatpush1.msra.mxu0 0.0
    %4398 = vmatprep.subr.mxu0 0.0
    %4399 = vmatpush1.msra.mxu0 0.0
    %4400 = vmatprep.subr.mxu0 0.0
    %4401 = vmatpush1.msra.mxu0 %v4368
    %4402 = vmatprep.subr.mxu0 0.0
    %4403 = vmatpush2.msra.mxu0 0.0
    %4404 = vmatprep.subr.mxu0 0.0
    %4405 = vmatpush2.msra.mxu0 0.0
    %4406 = vmatprep.subr.mxu0 0.0
    %4407 = vmatpush2.msra.mxu0 0.0
    %4408 = vmatprep.subr.mxu0 0.0
    %4409 = vmatpush2.msra.mxu0 0.0
    %4410 = vmatprep.subr.mxu0 0.0
    %4411 = vmatpush2.msra.mxu0 0.0
    %4412 = vmatprep.subr.mxu0 0.0
    %4413 = vmatpush2.msra.mxu0 0.0
    %4414 = vmatprep.subr.mxu0 0.0
    %4415 = vmatpush2.msra.mxu0 0.0
    %4416 = vmatprep.subr.mxu0 0.0
    %4417 = vmatpush2.msra.mxu0 0.0
    %4418 = vmatprep.subr.mxu0 0.0
    %4419 = vmatpush2.msra.mxu0 0.0
    %4420 = vmatprep.subr.mxu0 0.0
    %4421 = vmatpush2.msra.mxu0 0.0
    %4422 = vmatprep.subr.mxu0 0.0
    %4423 = vmatpush2.msra.mxu0 0.0
    %4424 = vmatprep.subr.mxu0 0.0
    %4425 = vmatpush2.msra.mxu0 0.0
    %4426 = vmatprep.subr.mxu0 0.0
    %4427 = vmatpush2.msra.mxu0 0.0
    %4428 = vmatprep.subr.mxu0 0.0
    %4429 = vmatpush2.msra.mxu0 0.0
    %4430 = vmatprep.subr.mxu0 0.0
    %4431 = vmatpush2.msra.mxu0 0.0
    %4432 = vmatprep.subr.mxu0 0.0
    %4433 = vmatpush2.msra.mxu0 0.0
    %4434 = vmatprep.mubr.f32.mxu0 0.0
    %4435 = vmatmul.mubr.f32.gmra.mxu0 %v4264
    %v4436 = vpop.f32.mrf.mxu0
    %v4437 = vadd.f32 %v4365, %v4436
    %v4438 = vpop.f32.mrf.mxu0
    %4439 = vmatprep.mubr.f32.mxu0 0.0
    %4440 = vmatmul.mubr.f32.gmra.mxu0 %v4267
    %v4441 = vpop.f32.mrf.mxu0
    %v4442 = vadd.f32 %v4365, %v4441
    %v4443 = vpop.f32.mrf.mxu0
    %4444 = vmatprep.mubr.f32.mxu0 0.0
    %4445 = vmatmul.mubr.f32.gmra.mxu0 %v4270
    %v4446 = vpop.f32.mrf.mxu0
    %v4447 = vadd.f32 %v4365, %v4446
    %v4448 = vpop.f32.mrf.mxu0
    %4449 = vmatprep.mubr.f32.mxu0 0.0
    %4450 = vmatmul.mubr.f32.gmra.mxu0 %v4273
    %v4451 = vpop.f32.mrf.mxu0
    %v4452 = vadd.f32 %v4365, %v4451
    %v4453 = vpop.f32.mrf.mxu0
    %4454 = vdwg.mxu0
    %v4457 = vcombine.high %v4249, %v4249
    %v4459 = vunpack.c.l.s4 1966171168
    %v4460 = vunpack.c.0.s8 %v4459
    %v4461 = vlaneseq
    %v4462 = vshrl.u32 %v4461, 7
    %v4463 = vsub.s32 %v4460, %v4462
    %v4464 = vrot.slane %v4249, %v4463
    %v4466 = vunpack.c.l.s4 1966171168
    %v4467 = vunpack.c.0.s8 %v4466
    %v4468 = vlaneseq
    %v4469 = vshrl.u32 %v4468, 7
    %v4470 = vsub.s32 %v4467, %v4469
    %v4471 = vrot.slane %v4457, %v4470
    %v4472 = vcombine.high %v4464, %v4464
    %v4473 = vcombine.high %v4471, %v4471
    %v4475 = vunpack.c.l.s4 1966171168
    %v4476 = vunpack.c.0.s8 %v4475
    %v4477 = vlaneseq
    %v4478 = vshrl.u32 %v4477, 7
    %v4479 = vsub.s32 %v4476, %v4478
    %v4480 = vrot.slane %v4464, %v4479
    %v4482 = vunpack.c.l.s4 1966171168
    %v4483 = vunpack.c.0.s8 %v4482
    %v4484 = vlaneseq
    %v4485 = vshrl.u32 %v4484, 7
    %v4486 = vsub.s32 %v4483, %v4485
    %v4487 = vrot.slane %v4471, %v4486
    %v4489 = vunpack.c.l.s4 1966171168
    %v4490 = vunpack.c.0.s8 %v4489
    %v4491 = vlaneseq
    %v4492 = vshrl.u32 %v4491, 7
    %v4493 = vsub.s32 %v4490, %v4492
    %v4494 = vrot.slane %v4472, %v4493
    %v4496 = vunpack.c.l.s4 1966171168
    %v4497 = vunpack.c.0.s8 %v4496
    %v4498 = vlaneseq
    %v4499 = vshrl.u32 %v4498, 7
    %v4500 = vsub.s32 %v4497, %v4499
    %v4501 = vrot.slane %v4473, %v4500
    %v4502 = vcombine.high %v4480, %v4480
    %v4503 = vcombine.high %v4487, %v4487
    %v4504 = vcombine.high %v4494, %v4494
    %v4505 = vcombine.high %v4501, %v4501
    %v4506 = vcombine.high %v4254, %v4254
    %v4508 = vunpack.c.l.s4 1966171168
    %v4509 = vunpack.c.0.s8 %v4508
    %v4510 = vlaneseq
    %v4511 = vshrl.u32 %v4510, 7
    %v4512 = vsub.s32 %v4509, %v4511
    %v4513 = vrot.slane %v4254, %v4512
    %v4515 = vunpack.c.l.s4 1966171168
    %v4516 = vunpack.c.0.s8 %v4515
    %v4517 = vlaneseq
    %v4518 = vshrl.u32 %v4517, 7
    %v4519 = vsub.s32 %v4516, %v4518
    %v4520 = vrot.slane %v4506, %v4519
    %v4521 = vcombine.high %v4513, %v4513
    %v4522 = vcombine.high %v4520, %v4520
    %v4524 = vunpack.c.l.s4 1966171168
    %v4525 = vunpack.c.0.s8 %v4524
    %v4526 = vlaneseq
    %v4527 = vshrl.u32 %v4526, 7
    %v4528 = vsub.s32 %v4525, %v4527
    %v4529 = vrot.slane %v4513, %v4528
    %v4531 = vunpack.c.l.s4 1966171168
    %v4532 = vunpack.c.0.s8 %v4531
    %v4533 = vlaneseq
    %v4534 = vshrl.u32 %v4533, 7
    %v4535 = vsub.s32 %v4532, %v4534
    %v4536 = vrot.slane %v4520, %v4535
    %v4538 = vunpack.c.l.s4 1966171168
    %v4539 = vunpack.c.0.s8 %v4538
    %v4540 = vlaneseq
    %v4541 = vshrl.u32 %v4540, 7
    %v4542 = vsub.s32 %v4539, %v4541
    %v4543 = vrot.slane %v4521, %v4542
    %v4545 = vunpack.c.l.s4 1966171168
    %v4546 = vunpack.c.0.s8 %v4545
    %v4547 = vlaneseq
    %v4548 = vshrl.u32 %v4547, 7
    %v4549 = vsub.s32 %v4546, %v4548
    %v4550 = vrot.slane %v4522, %v4549
    %v4551 = vcombine.high %v4529, %v4529
    %v4552 = vcombine.high %v4536, %v4536
    %v4553 = vcombine.high %v4543, %v4543
    %v4554 = vcombine.high %v4550, %v4550
    %v4555 = vlaneseq
    %v4556 = vshrl.u32 %v4555, 7
    %v4557 = vsub.s32 0, %v4556
    %v4558 = vrot.slane %v4480, %v4557
    %v4559 = vlaneseq
    %v4560 = vshrl.u32 %v4559, 7
    %v4561 = vsub.s32 0, %v4560
    %v4562 = vrot.slane %v4494, %v4561
    %v4563 = vlaneseq
    %v4564 = vshrl.u32 %v4563, 7
    %v4565 = vsub.s32 0, %v4564
    %v4566 = vrot.slane %v4502, %v4565
    %v4567 = vlaneseq
    %v4568 = vshrl.u32 %v4567, 7
    %v4569 = vsub.s32 0, %v4568
    %v4570 = vrot.slane %v4504, %v4569
    %v4571 = vlaneseq
    %v4572 = vshrl.u32 %v4571, 7
    %v4573 = vsub.s32 0, %v4572
    %v4574 = vrot.slane %v4487, %v4573
    %v4575 = vlaneseq
    %v4576 = vshrl.u32 %v4575, 7
    %v4577 = vsub.s32 0, %v4576
    %v4578 = vrot.slane %v4501, %v4577
    %v4579 = vlaneseq
    %v4580 = vshrl.u32 %v4579, 7
    %v4581 = vsub.s32 0, %v4580
    %v4582 = vrot.slane %v4503, %v4581
    %v4583 = vlaneseq
    %v4584 = vshrl.u32 %v4583, 7
    %v4585 = vsub.s32 0, %v4584
    %v4586 = vrot.slane %v4505, %v4585
    %v4587 = vlaneseq
    %v4588 = vshrl.u32 %v4587, 7
    %v4589 = vsub.s32 0, %v4588
    %v4590 = vrot.slane %v4529, %v4589
    %v4591 = vlaneseq
    %v4592 = vshrl.u32 %v4591, 7
    %v4593 = vsub.s32 0, %v4592
    %v4594 = vrot.slane %v4543, %v4593
    %v4595 = vlaneseq
    %v4596 = vshrl.u32 %v4595, 7
    %v4597 = vsub.s32 0, %v4596
    %v4598 = vrot.slane %v4551, %v4597
    %v4599 = vlaneseq
    %v4600 = vshrl.u32 %v4599, 7
    %v4601 = vsub.s32 0, %v4600
    %v4602 = vrot.slane %v4553, %v4601
    %v4603 = vlaneseq
    %v4604 = vshrl.u32 %v4603, 7
    %v4605 = vsub.s32 0, %v4604
    %v4606 = vrot.slane %v4536, %v4605
    %v4607 = vlaneseq
    %v4608 = vshrl.u32 %v4607, 7
    %v4609 = vsub.s32 0, %v4608
    %v4610 = vrot.slane %v4550, %v4609
    %v4611 = vlaneseq
    %v4612 = vshrl.u32 %v4611, 7
    %v4613 = vsub.s32 0, %v4612
    %v4614 = vrot.slane %v4552, %v4613
    %v4615 = vlaneseq
    %v4616 = vshrl.u32 %v4615, 7
    %v4617 = vsub.s32 0, %v4616
    %v4618 = vrot.slane %v4554, %v4617
    %v4635 = vmul.f32 %v4558, %v4344
    %v4636 = vmul.f32 %v4558, %v4349
    %v4637 = vmul.f32 %v4562, %v4344
    %v4638 = vmul.f32 %v4562, %v4349
    %v4639 = vmul.f32 %v4566, %v4344
    %v4640 = vmul.f32 %v4566, %v4349
    %v4641 = vmul.f32 %v4570, %v4344
    %v4642 = vmul.f32 %v4570, %v4349
    %v4643 = vmul.f32 %v4574, %v4344
    %v4644 = vmul.f32 %v4574, %v4349
    %v4645 = vmul.f32 %v4578, %v4344
    %v4646 = vmul.f32 %v4578, %v4349
    %v4647 = vmul.f32 %v4582, %v4344
    %v4648 = vmul.f32 %v4582, %v4349
    %v4649 = vmul.f32 %v4586, %v4344
    %v4650 = vmul.f32 %v4586, %v4349
    %v4651 = vmul.f32 %v4590, %v4354
    %v4652 = vmul.f32 %v4590, %v4359
    %v4653 = vmul.f32 %v4594, %v4354
    %v4654 = vmul.f32 %v4594, %v4359
    %v4655 = vmul.f32 %v4598, %v4354
    %v4656 = vmul.f32 %v4598, %v4359
    %v4657 = vmul.f32 %v4602, %v4354
    %v4658 = vmul.f32 %v4602, %v4359
    %v4659 = vmul.f32 %v4606, %v4354
    %v4660 = vmul.f32 %v4606, %v4359
    %v4661 = vmul.f32 %v4610, %v4354
    %v4662 = vmul.f32 %v4610, %v4359
    %v4663 = vmul.f32 %v4614, %v4354
    %v4664 = vmul.f32 %v4614, %v4359
    %v4665 = vmul.f32 %v4618, %v4354
    %v4666 = vmul.f32 %v4618, %v4359
    %v4667 = vsel %vm3125, %v4635, -inf
    %v4668 = vsel %vm3125, %v4636, -inf
    %v4669 = vmax.f32 %v4667, %v4668
    %v4670 = vrot.slane %v4669, 4
    %v4671 = vmax.f32 %v4669, %v4670
    %v4672 = vrot.slane %v4671, 2
    %v4673 = vmax.f32 %v4671, %v4672
    %v4674 = vrot.slane %v4673, 1
    %v4675 = vmax.f32 %v4673, %v4674
    %v4676 = vsel %vm3125, %v4637, -inf
    %v4677 = vsel %vm3125, %v4638, -inf
    %v4678 = vmax.f32 %v4676, %v4677
    %v4679 = vrot.slane %v4678, 4
    %v4680 = vmax.f32 %v4678, %v4679
    %v4681 = vrot.slane %v4680, 2
    %v4682 = vmax.f32 %v4680, %v4681
    %v4683 = vrot.slane %v4682, 1
    %v4684 = vmax.f32 %v4682, %v4683
    %v4685 = vsel %vm3125, %v4639, -inf
    %v4686 = vsel %vm3125, %v4640, -inf
    %v4687 = vmax.f32 %v4685, %v4686
    %v4688 = vrot.slane %v4687, 4
    %v4689 = vmax.f32 %v4687, %v4688
    %v4690 = vrot.slane %v4689, 2
    %v4691 = vmax.f32 %v4689, %v4690
    %v4692 = vrot.slane %v4691, 1
    %v4693 = vmax.f32 %v4691, %v4692
    %v4694 = vsel %vm3125, %v4641, -inf
    %v4695 = vsel %vm3125, %v4642, -inf
    %v4696 = vmax.f32 %v4694, %v4695
    %v4697 = vrot.slane %v4696, 4
    %v4698 = vmax.f32 %v4696, %v4697
    %v4699 = vrot.slane %v4698, 2
    %v4700 = vmax.f32 %v4698, %v4699
    %v4701 = vrot.slane %v4700, 1
    %v4702 = vmax.f32 %v4700, %v4701
    %v4703 = vsel %vm3125, %v4643, -inf
    %v4704 = vsel %vm3125, %v4644, -inf
    %v4705 = vmax.f32 %v4703, %v4704
    %v4706 = vrot.slane %v4705, 4
    %v4707 = vmax.f32 %v4705, %v4706
    %v4708 = vrot.slane %v4707, 2
    %v4709 = vmax.f32 %v4707, %v4708
    %v4710 = vrot.slane %v4709, 1
    %v4711 = vmax.f32 %v4709, %v4710
    %v4712 = vsel %vm3125, %v4645, -inf
    %v4713 = vsel %vm3125, %v4646, -inf
    %v4714 = vmax.f32 %v4712, %v4713
    %v4715 = vrot.slane %v4714, 4
    %v4716 = vmax.f32 %v4714, %v4715
    %v4717 = vrot.slane %v4716, 2
    %v4718 = vmax.f32 %v4716, %v4717
    %v4719 = vrot.slane %v4718, 1
    %v4720 = vmax.f32 %v4718, %v4719
    %v4721 = vsel %vm3125, %v4647, -inf
    %v4722 = vsel %vm3125, %v4648, -inf
    %v4723 = vmax.f32 %v4721, %v4722
    %v4724 = vrot.slane %v4723, 4
    %v4725 = vmax.f32 %v4723, %v4724
    %v4726 = vrot.slane %v4725, 2
    %v4727 = vmax.f32 %v4725, %v4726
    %v4728 = vrot.slane %v4727, 1
    %v4729 = vmax.f32 %v4727, %v4728
    %v4730 = vsel %vm3125, %v4649, -inf
    %v4731 = vsel %vm3125, %v4650, -inf
    %v4732 = vmax.f32 %v4730, %v4731
    %v4733 = vrot.slane %v4732, 4
    %v4734 = vmax.f32 %v4732, %v4733
    %v4735 = vrot.slane %v4734, 2
    %v4736 = vmax.f32 %v4734, %v4735
    %v4737 = vrot.slane %v4736, 1
    %v4738 = vmax.f32 %v4736, %v4737
    %v4739 = vsel %vm3125, %v4651, -inf
    %v4740 = vsel %vm3125, %v4652, -inf
    %v4741 = vmax.f32 %v4739, %v4740
    %v4742 = vrot.slane %v4741, 4
    %v4743 = vmax.f32 %v4741, %v4742
    %v4744 = vrot.slane %v4743, 2
    %v4745 = vmax.f32 %v4743, %v4744
    %v4746 = vrot.slane %v4745, 1
    %v4747 = vmax.f32 %v4745, %v4746
    %v4748 = vsel %vm3125, %v4653, -inf
    %v4749 = vsel %vm3125, %v4654, -inf
    %v4750 = vmax.f32 %v4748, %v4749
    %v4751 = vrot.slane %v4750, 4
    %v4752 = vmax.f32 %v4750, %v4751
    %v4753 = vrot.slane %v4752, 2
    %v4754 = vmax.f32 %v4752, %v4753
    %v4755 = vrot.slane %v4754, 1
    %v4756 = vmax.f32 %v4754, %v4755
    %v4757 = vsel %vm3125, %v4655, -inf
    %v4758 = vsel %vm3125, %v4656, -inf
    %v4759 = vmax.f32 %v4757, %v4758
    %v4760 = vrot.slane %v4759, 4
    %v4761 = vmax.f32 %v4759, %v4760
    %v4762 = vrot.slane %v4761, 2
    %v4763 = vmax.f32 %v4761, %v4762
    %v4764 = vrot.slane %v4763, 1
    %v4765 = vmax.f32 %v4763, %v4764
    %v4766 = vsel %vm3125, %v4657, -inf
    %v4767 = vsel %vm3125, %v4658, -inf
    %v4768 = vmax.f32 %v4766, %v4767
    %v4769 = vrot.slane %v4768, 4
    %v4770 = vmax.f32 %v4768, %v4769
    %v4771 = vrot.slane %v4770, 2
    %v4772 = vmax.f32 %v4770, %v4771
    %v4773 = vrot.slane %v4772, 1
    %v4774 = vmax.f32 %v4772, %v4773
    %v4775 = vsel %vm3125, %v4659, -inf
    %v4776 = vsel %vm3125, %v4660, -inf
    %v4777 = vmax.f32 %v4775, %v4776
    %v4778 = vrot.slane %v4777, 4
    %v4779 = vmax.f32 %v4777, %v4778
    %v4780 = vrot.slane %v4779, 2
    %v4781 = vmax.f32 %v4779, %v4780
    %v4782 = vrot.slane %v4781, 1
    %v4783 = vmax.f32 %v4781, %v4782
    %v4784 = vsel %vm3125, %v4661, -inf
    %v4785 = vsel %vm3125, %v4662, -inf
    %v4786 = vmax.f32 %v4784, %v4785
    %v4787 = vrot.slane %v4786, 4
    %v4788 = vmax.f32 %v4786, %v4787
    %v4789 = vrot.slane %v4788, 2
    %v4790 = vmax.f32 %v4788, %v4789
    %v4791 = vrot.slane %v4790, 1
    %v4792 = vmax.f32 %v4790, %v4791
    %v4793 = vsel %vm3125, %v4663, -inf
    %v4794 = vsel %vm3125, %v4664, -inf
    %v4795 = vmax.f32 %v4793, %v4794
    %v4796 = vrot.slane %v4795, 4
    %v4797 = vmax.f32 %v4795, %v4796
    %v4798 = vrot.slane %v4797, 2
    %v4799 = vmax.f32 %v4797, %v4798
    %v4800 = vrot.slane %v4799, 1
    %v4801 = vmax.f32 %v4799, %v4800
    %v4802 = vsel %vm3125, %v4665, -inf
    %v4803 = vsel %vm3125, %v4666, -inf
    %v4804 = vmax.f32 %v4802, %v4803
    %v4805 = vrot.slane %v4804, 4
    %v4806 = vmax.f32 %v4804, %v4805
    %v4807 = vrot.slane %v4806, 2
    %v4808 = vmax.f32 %v4806, %v4807
    %v4809 = vrot.slane %v4808, 1
    %v4810 = vmax.f32 %v4808, %v4809
    %v4811 = vsub.f32 %v4635, %v4675
    %v4812 = vsub.f32 %v4636, %v4675
    %v4813 = vsub.f32 %v4637, %v4684
    %v4814 = vsub.f32 %v4638, %v4684
    %v4815 = vsub.f32 %v4639, %v4693
    %v4816 = vsub.f32 %v4640, %v4693
    %v4817 = vsub.f32 %v4641, %v4702
    %v4818 = vsub.f32 %v4642, %v4702
    %v4819 = vsub.f32 %v4643, %v4711
    %v4820 = vsub.f32 %v4644, %v4711
    %v4821 = vsub.f32 %v4645, %v4720
    %v4822 = vsub.f32 %v4646, %v4720
    %v4823 = vsub.f32 %v4647, %v4729
    %v4824 = vsub.f32 %v4648, %v4729
    %v4825 = vsub.f32 %v4649, %v4738
    %v4826 = vsub.f32 %v4650, %v4738
    %v4827 = vsub.f32 %v4651, %v4747
    %v4828 = vsub.f32 %v4652, %v4747
    %v4829 = vsub.f32 %v4653, %v4756
    %v4830 = vsub.f32 %v4654, %v4756
    %v4831 = vsub.f32 %v4655, %v4765
    %v4832 = vsub.f32 %v4656, %v4765
    %v4833 = vsub.f32 %v4657, %v4774
    %v4834 = vsub.f32 %v4658, %v4774
    %v4835 = vsub.f32 %v4659, %v4783
    %v4836 = vsub.f32 %v4660, %v4783
    %v4837 = vsub.f32 %v4661, %v4792
    %v4838 = vsub.f32 %v4662, %v4792
    %v4839 = vsub.f32 %v4663, %v4801
    %v4840 = vsub.f32 %v4664, %v4801
    %v4841 = vsub.f32 %v4665, %v4810
    %v4842 = vsub.f32 %v4666, %v4810
    %v4843 = vmul.f32 %v4811, 1.442695
    %v4844 = vpow.pop %v4843
    %v4845 = vmul.f32 %v4812, 1.442695
    %v4846 = vpow.pop %v4845
    %v4847 = vmul.f32 %v4813, 1.442695
    %v4848 = vpow.pop %v4847
    %v4849 = vmul.f32 %v4814, 1.442695
    %v4850 = vpow.pop %v4849
    %v4851 = vmul.f32 %v4815, 1.442695
    %v4852 = vpow.pop %v4851
    %v4853 = vmul.f32 %v4816, 1.442695
    %v4854 = vpow.pop %v4853
    %v4855 = vmul.f32 %v4817, 1.442695
    %v4856 = vpow.pop %v4855
    %v4857 = vmul.f32 %v4818, 1.442695
    %v4858 = vpow.pop %v4857
    %v4859 = vmul.f32 %v4819, 1.442695
    %v4860 = vpow.pop %v4859
    %v4861 = vmul.f32 %v4820, 1.442695
    %v4862 = vpow.pop %v4861
    %v4863 = vmul.f32 %v4821, 1.442695
    %v4864 = vpow.pop %v4863
    %v4865 = vmul.f32 %v4822, 1.442695
    %v4866 = vpow.pop %v4865
    %v4867 = vmul.f32 %v4823, 1.442695
    %v4868 = vpow.pop %v4867
    %v4869 = vmul.f32 %v4824, 1.442695
    %v4870 = vpow.pop %v4869
    %v4871 = vmul.f32 %v4825, 1.442695
    %v4872 = vpow.pop %v4871
    %v4873 = vmul.f32 %v4826, 1.442695
    %v4874 = vpow.pop %v4873
    %v4875 = vmul.f32 %v4827, 1.442695
    %v4876 = vpow.pop %v4875
    %v4877 = vmul.f32 %v4828, 1.442695
    %v4878 = vpow.pop %v4877
    %v4879 = vmul.f32 %v4829, 1.442695
    %v4880 = vpow.pop %v4879
    %v4881 = vmul.f32 %v4830, 1.442695
    %v4882 = vpow.pop %v4881
    %v4883 = vmul.f32 %v4831, 1.442695
    %v4884 = vpow.pop %v4883
    %v4885 = vmul.f32 %v4832, 1.442695
    %v4886 = vpow.pop %v4885
    %v4887 = vmul.f32 %v4833, 1.442695
    %v4888 = vpow.pop %v4887
    %v4889 = vmul.f32 %v4834, 1.442695
    %v4890 = vpow.pop %v4889
    %v4891 = vmul.f32 %v4835, 1.442695
    %v4892 = vpow.pop %v4891
    %v4893 = vmul.f32 %v4836, 1.442695
    %v4894 = vpow.pop %v4893
    %v4895 = vmul.f32 %v4837, 1.442695
    %v4896 = vpow.pop %v4895
    %v4897 = vmul.f32 %v4838, 1.442695
    %v4898 = vpow.pop %v4897
    %v4899 = vmul.f32 %v4839, 1.442695
    %v4900 = vpow.pop %v4899
    %v4901 = vmul.f32 %v4840, 1.442695
    %v4902 = vpow.pop %v4901
    %v4903 = vmul.f32 %v4841, 1.442695
    %v4904 = vpow.pop %v4903
    %v4905 = vmul.f32 %v4842, 1.442695
    %v4906 = vpow.pop %v4905
    %v4907 = vsel %vm3125, %v4844, 0.0
    %v4908 = vsel %vm3125, %v4846, 0.0
    %v4909 = vadd.f32 %v4907, %v4908
    %v4910 = vrot.slane %v4909, 4
    %v4911 = vadd.f32 %v4909, %v4910
    %v4912 = vrot.slane %v4911, 2
    %v4913 = vadd.f32 %v4911, %v4912
    %v4914 = vrot.slane %v4913, 1
    %v4915 = vadd.f32 %v4913, %v4914
    %v4916 = vsel %vm3125, %v4848, 0.0
    %v4917 = vsel %vm3125, %v4850, 0.0
    %v4918 = vadd.f32 %v4916, %v4917
    %v4919 = vrot.slane %v4918, 4
    %v4920 = vadd.f32 %v4918, %v4919
    %v4921 = vrot.slane %v4920, 2
    %v4922 = vadd.f32 %v4920, %v4921
    %v4923 = vrot.slane %v4922, 1
    %v4924 = vadd.f32 %v4922, %v4923
    %v4925 = vsel %vm3125, %v4852, 0.0
    %v4926 = vsel %vm3125, %v4854, 0.0
    %v4927 = vadd.f32 %v4925, %v4926
    %v4928 = vrot.slane %v4927, 4
    %v4929 = vadd.f32 %v4927, %v4928
    %v4930 = vrot.slane %v4929, 2
    %v4931 = vadd.f32 %v4929, %v4930
    %v4932 = vrot.slane %v4931, 1
    %v4933 = vadd.f32 %v4931, %v4932
    %v4934 = vsel %vm3125, %v4856, 0.0
    %v4935 = vsel %vm3125, %v4858, 0.0
    %v4936 = vadd.f32 %v4934, %v4935
    %v4937 = vrot.slane %v4936, 4
    %v4938 = vadd.f32 %v4936, %v4937
    %v4939 = vrot.slane %v4938, 2
    %v4940 = vadd.f32 %v4938, %v4939
    %v4941 = vrot.slane %v4940, 1
    %v4942 = vadd.f32 %v4940, %v4941
    %v4943 = vsel %vm3125, %v4860, 0.0
    %v4944 = vsel %vm3125, %v4862, 0.0
    %v4945 = vadd.f32 %v4943, %v4944
    %v4946 = vrot.slane %v4945, 4
    %v4947 = vadd.f32 %v4945, %v4946
    %v4948 = vrot.slane %v4947, 2
    %v4949 = vadd.f32 %v4947, %v4948
    %v4950 = vrot.slane %v4949, 1
    %v4951 = vadd.f32 %v4949, %v4950
    %v4952 = vsel %vm3125, %v4864, 0.0
    %v4953 = vsel %vm3125, %v4866, 0.0
    %v4954 = vadd.f32 %v4952, %v4953
    %v4955 = vrot.slane %v4954, 4
    %v4956 = vadd.f32 %v4954, %v4955
    %v4957 = vrot.slane %v4956, 2
    %v4958 = vadd.f32 %v4956, %v4957
    %v4959 = vrot.slane %v4958, 1
    %v4960 = vadd.f32 %v4958, %v4959
    %v4961 = vsel %vm3125, %v4868, 0.0
    %v4962 = vsel %vm3125, %v4870, 0.0
    %v4963 = vadd.f32 %v4961, %v4962
    %v4964 = vrot.slane %v4963, 4
    %v4965 = vadd.f32 %v4963, %v4964
    %v4966 = vrot.slane %v4965, 2
    %v4967 = vadd.f32 %v4965, %v4966
    %v4968 = vrot.slane %v4967, 1
    %v4969 = vadd.f32 %v4967, %v4968
    %v4970 = vsel %vm3125, %v4872, 0.0
    %v4971 = vsel %vm3125, %v4874, 0.0
    %v4972 = vadd.f32 %v4970, %v4971
    %v4973 = vrot.slane %v4972, 4
    %v4974 = vadd.f32 %v4972, %v4973
    %v4975 = vrot.slane %v4974, 2
    %v4976 = vadd.f32 %v4974, %v4975
    %v4977 = vrot.slane %v4976, 1
    %v4978 = vadd.f32 %v4976, %v4977
    %v4979 = vsel %vm3125, %v4876, 0.0
    %v4980 = vsel %vm3125, %v4878, 0.0
    %v4981 = vadd.f32 %v4979, %v4980
    %v4982 = vrot.slane %v4981, 4
    %v4983 = vadd.f32 %v4981, %v4982
    %v4984 = vrot.slane %v4983, 2
    %v4985 = vadd.f32 %v4983, %v4984
    %v4986 = vrot.slane %v4985, 1
    %v4987 = vadd.f32 %v4985, %v4986
    %v4988 = vsel %vm3125, %v4880, 0.0
    %v4989 = vsel %vm3125, %v4882, 0.0
    %v4990 = vadd.f32 %v4988, %v4989
    %v4991 = vrot.slane %v4990, 4
    %v4992 = vadd.f32 %v4990, %v4991
    %v4993 = vrot.slane %v4992, 2
    %v4994 = vadd.f32 %v4992, %v4993
    %v4995 = vrot.slane %v4994, 1
    %v4996 = vadd.f32 %v4994, %v4995
    %v4997 = vsel %vm3125, %v4884, 0.0
    %v4998 = vsel %vm3125, %v4886, 0.0
    %v4999 = vadd.f32 %v4997, %v4998
    %v5000 = vrot.slane %v4999, 4
    %v5001 = vadd.f32 %v4999, %v5000
    %v5002 = vrot.slane %v5001, 2
    %v5003 = vadd.f32 %v5001, %v5002
    %v5004 = vrot.slane %v5003, 1
    %v5005 = vadd.f32 %v5003, %v5004
    %v5006 = vsel %vm3125, %v4888, 0.0
    %v5007 = vsel %vm3125, %v4890, 0.0
    %v5008 = vadd.f32 %v5006, %v5007
    %v5009 = vrot.slane %v5008, 4
    %v5010 = vadd.f32 %v5008, %v5009
    %v5011 = vrot.slane %v5010, 2
    %v5012 = vadd.f32 %v5010, %v5011
    %v5013 = vrot.slane %v5012, 1
    %v5014 = vadd.f32 %v5012, %v5013
    %v5015 = vsel %vm3125, %v4892, 0.0
    %v5016 = vsel %vm3125, %v4894, 0.0
    %v5017 = vadd.f32 %v5015, %v5016
    %v5018 = vrot.slane %v5017, 4
    %v5019 = vadd.f32 %v5017, %v5018
    %v5020 = vrot.slane %v5019, 2
    %v5021 = vadd.f32 %v5019, %v5020
    %v5022 = vrot.slane %v5021, 1
    %v5023 = vadd.f32 %v5021, %v5022
    %v5024 = vsel %vm3125, %v4896, 0.0
    %v5025 = vsel %vm3125, %v4898, 0.0
    %v5026 = vadd.f32 %v5024, %v5025
    %v5027 = vrot.slane %v5026, 4
    %v5028 = vadd.f32 %v5026, %v5027
    %v5029 = vrot.slane %v5028, 2
    %v5030 = vadd.f32 %v5028, %v5029
    %v5031 = vrot.slane %v5030, 1
    %v5032 = vadd.f32 %v5030, %v5031
    %v5033 = vsel %vm3125, %v4900, 0.0
    %v5034 = vsel %vm3125, %v4902, 0.0
    %v5035 = vadd.f32 %v5033, %v5034
    %v5036 = vrot.slane %v5035, 4
    %v5037 = vadd.f32 %v5035, %v5036
    %v5038 = vrot.slane %v5037, 2
    %v5039 = vadd.f32 %v5037, %v5038
    %v5040 = vrot.slane %v5039, 1
    %v5041 = vadd.f32 %v5039, %v5040
    %v5042 = vsel %vm3125, %v4904, 0.0
    %v5043 = vsel %vm3125, %v4906, 0.0
    %v5044 = vadd.f32 %v5042, %v5043
    %v5045 = vrot.slane %v5044, 4
    %v5046 = vadd.f32 %v5044, %v5045
    %v5047 = vrot.slane %v5046, 2
    %v5048 = vadd.f32 %v5046, %v5047
    %v5049 = vrot.slane %v5048, 1
    %v5050 = vadd.f32 %v5048, %v5049
    %v5051 = vrcp.pop %v4915
    %v5052 = vrcp.pop %v4924
    %v5053 = vrcp.pop %v4933
    %v5054 = vrcp.pop %v4942
    %v5055 = vrcp.pop %v4951
    %v5056 = vrcp.pop %v4960
    %v5057 = vrcp.pop %v4969
    %v5058 = vrcp.pop %v4978
    %v5059 = vrcp.pop %v4987
    %v5060 = vrcp.pop %v4996
    %v5061 = vrcp.pop %v5005
    %v5062 = vrcp.pop %v5014
    %v5063 = vrcp.pop %v5023
    %v5064 = vrcp.pop %v5032
    %v5065 = vrcp.pop %v5041
    %v5066 = vrcp.pop %v5050
    %v5067 = vmul.f32 %v4844, %v5051
    %v5068 = vmul.f32 %v4846, %v5051
    %v5069 = vmul.f32 %v4848, %v5052
    %v5070 = vmul.f32 %v4850, %v5052
    %v5071 = vmul.f32 %v4852, %v5053
    %v5072 = vmul.f32 %v4854, %v5053
    %v5073 = vmul.f32 %v4856, %v5054
    %v5074 = vmul.f32 %v4858, %v5054
    %v5075 = vmul.f32 %v4860, %v5055
    %v5076 = vmul.f32 %v4862, %v5055
    %v5077 = vmul.f32 %v4864, %v5056
    %v5078 = vmul.f32 %v4866, %v5056
    %v5079 = vmul.f32 %v4868, %v5057
    %v5080 = vmul.f32 %v4870, %v5057
    %v5081 = vmul.f32 %v4872, %v5058
    %v5082 = vmul.f32 %v4874, %v5058
    %v5083 = vmul.f32 %v4876, %v5059
    %v5084 = vmul.f32 %v4878, %v5059
    %v5085 = vmul.f32 %v4880, %v5060
    %v5086 = vmul.f32 %v4882, %v5060
    %v5087 = vmul.f32 %v4884, %v5061
    %v5088 = vmul.f32 %v4886, %v5061
    %v5089 = vmul.f32 %v4888, %v5062
    %v5090 = vmul.f32 %v4890, %v5062
    %v5091 = vmul.f32 %v4892, %v5063
    %v5092 = vmul.f32 %v4894, %v5063
    %v5093 = vmul.f32 %v4896, %v5064
    %v5094 = vmul.f32 %v4898, %v5064
    %v5095 = vmul.f32 %v4900, %v5065
    %v5096 = vmul.f32 %v4902, %v5065
    %v5097 = vmul.f32 %v4904, %v5066
    %v5098 = vmul.f32 %v4906, %v5066
    %v5099 = vmul.f32 %v5067, %v4437
    %v5100 = vmul.f32 %v5068, %v4442
    %v5101 = vmul.f32 %v5069, %v4437
    %v5102 = vmul.f32 %v5070, %v4442
    %v5103 = vmul.f32 %v5071, %v4437
    %v5104 = vmul.f32 %v5072, %v4442
    %v5105 = vmul.f32 %v5073, %v4437
    %v5106 = vmul.f32 %v5074, %v4442
    %v5107 = vmul.f32 %v5075, %v4437
    %v5108 = vmul.f32 %v5076, %v4442
    %v5109 = vmul.f32 %v5077, %v4437
    %v5110 = vmul.f32 %v5078, %v4442
    %v5111 = vmul.f32 %v5079, %v4437
    %v5112 = vmul.f32 %v5080, %v4442
    %v5113 = vmul.f32 %v5081, %v4437
    %v5114 = vmul.f32 %v5082, %v4442
    %v5115 = vmul.f32 %v5083, %v4447
    %v5116 = vmul.f32 %v5084, %v4452
    %v5117 = vmul.f32 %v5085, %v4447
    %v5118 = vmul.f32 %v5086, %v4452
    %v5119 = vmul.f32 %v5087, %v4447
    %v5120 = vmul.f32 %v5088, %v4452
    %v5121 = vmul.f32 %v5089, %v4447
    %v5122 = vmul.f32 %v5090, %v4452
    %v5123 = vmul.f32 %v5091, %v4447
    %v5124 = vmul.f32 %v5092, %v4452
    %v5125 = vmul.f32 %v5093, %v4447
    %v5126 = vmul.f32 %v5094, %v4452
    %v5127 = vmul.f32 %v5095, %v4447
    %v5128 = vmul.f32 %v5096, %v4452
    %v5129 = vmul.f32 %v5097, %v4447
    %v5130 = vmul.f32 %v5098, %v4452
    %v5131 = vsel %vm3125, %v5099, 0.0
    %v5132 = vsel %vm3125, %v5100, 0.0
    %v5133 = vadd.f32 %v5131, %v5132
    %v5134 = vrot.slane %v5133, 4
    %v5135 = vadd.f32 %v5133, %v5134
    %v5136 = vrot.slane %v5135, 2
    %v5137 = vadd.f32 %v5135, %v5136
    %v5138 = vrot.slane %v5137, 1
    %v5139 = vadd.f32 %v5137, %v5138
    %v5140 = vsel %vm3125, %v5101, 0.0
    %v5141 = vsel %vm3125, %v5102, 0.0
    %v5142 = vadd.f32 %v5140, %v5141
    %v5143 = vrot.slane %v5142, 4
    %v5144 = vadd.f32 %v5142, %v5143
    %v5145 = vrot.slane %v5144, 2
    %v5146 = vadd.f32 %v5144, %v5145
    %v5147 = vrot.slane %v5146, 1
    %v5148 = vadd.f32 %v5146, %v5147
    %v5149 = vsel %vm3125, %v5103, 0.0
    %v5150 = vsel %vm3125, %v5104, 0.0
    %v5151 = vadd.f32 %v5149, %v5150
    %v5152 = vrot.slane %v5151, 4
    %v5153 = vadd.f32 %v5151, %v5152
    %v5154 = vrot.slane %v5153, 2
    %v5155 = vadd.f32 %v5153, %v5154
    %v5156 = vrot.slane %v5155, 1
    %v5157 = vadd.f32 %v5155, %v5156
    %v5158 = vsel %vm3125, %v5105, 0.0
    %v5159 = vsel %vm3125, %v5106, 0.0
    %v5160 = vadd.f32 %v5158, %v5159
    %v5161 = vrot.slane %v5160, 4
    %v5162 = vadd.f32 %v5160, %v5161
    %v5163 = vrot.slane %v5162, 2
    %v5164 = vadd.f32 %v5162, %v5163
    %v5165 = vrot.slane %v5164, 1
    %v5166 = vadd.f32 %v5164, %v5165
    %v5167 = vsel %vm3125, %v5107, 0.0
    %v5168 = vsel %vm3125, %v5108, 0.0
    %v5169 = vadd.f32 %v5167, %v5168
    %v5170 = vrot.slane %v5169, 4
    %v5171 = vadd.f32 %v5169, %v5170
    %v5172 = vrot.slane %v5171, 2
    %v5173 = vadd.f32 %v5171, %v5172
    %v5174 = vrot.slane %v5173, 1
    %v5175 = vadd.f32 %v5173, %v5174
    %v5176 = vsel %vm3125, %v5109, 0.0
    %v5177 = vsel %vm3125, %v5110, 0.0
    %v5178 = vadd.f32 %v5176, %v5177
    %v5179 = vrot.slane %v5178, 4
    %v5180 = vadd.f32 %v5178, %v5179
    %v5181 = vrot.slane %v5180, 2
    %v5182 = vadd.f32 %v5180, %v5181
    %v5183 = vrot.slane %v5182, 1
    %v5184 = vadd.f32 %v5182, %v5183
    %v5185 = vsel %vm3125, %v5111, 0.0
    %v5186 = vsel %vm3125, %v5112, 0.0
    %v5187 = vadd.f32 %v5185, %v5186
    %v5188 = vrot.slane %v5187, 4
    %v5189 = vadd.f32 %v5187, %v5188
    %v5190 = vrot.slane %v5189, 2
    %v5191 = vadd.f32 %v5189, %v5190
    %v5192 = vrot.slane %v5191, 1
    %v5193 = vadd.f32 %v5191, %v5192
    %v5194 = vsel %vm3125, %v5113, 0.0
    %v5195 = vsel %vm3125, %v5114, 0.0
    %v5196 = vadd.f32 %v5194, %v5195
    %v5197 = vrot.slane %v5196, 4
    %v5198 = vadd.f32 %v5196, %v5197
    %v5199 = vrot.slane %v5198, 2
    %v5200 = vadd.f32 %v5198, %v5199
    %v5201 = vrot.slane %v5200, 1
    %v5202 = vadd.f32 %v5200, %v5201
    %v5203 = vsel %vm3125, %v5115, 0.0
    %v5204 = vsel %vm3125, %v5116, 0.0
    %v5205 = vadd.f32 %v5203, %v5204
    %v5206 = vrot.slane %v5205, 4
    %v5207 = vadd.f32 %v5205, %v5206
    %v5208 = vrot.slane %v5207, 2
    %v5209 = vadd.f32 %v5207, %v5208
    %v5210 = vrot.slane %v5209, 1
    %v5211 = vadd.f32 %v5209, %v5210
    %v5212 = vsel %vm3125, %v5117, 0.0
    %v5213 = vsel %vm3125, %v5118, 0.0
    %v5214 = vadd.f32 %v5212, %v5213
    %v5215 = vrot.slane %v5214, 4
    %v5216 = vadd.f32 %v5214, %v5215
    %v5217 = vrot.slane %v5216, 2
    %v5218 = vadd.f32 %v5216, %v5217
    %v5219 = vrot.slane %v5218, 1
    %v5220 = vadd.f32 %v5218, %v5219
    %v5221 = vsel %vm3125, %v5119, 0.0
    %v5222 = vsel %vm3125, %v5120, 0.0
    %v5223 = vadd.f32 %v5221, %v5222
    %v5224 = vrot.slane %v5223, 4
    %v5225 = vadd.f32 %v5223, %v5224
    %v5226 = vrot.slane %v5225, 2
    %v5227 = vadd.f32 %v5225, %v5226
    %v5228 = vrot.slane %v5227, 1
    %v5229 = vadd.f32 %v5227, %v5228
    %v5230 = vsel %vm3125, %v5121, 0.0
    %v5231 = vsel %vm3125, %v5122, 0.0
    %v5232 = vadd.f32 %v5230, %v5231
    %v5233 = vrot.slane %v5232, 4
    %v5234 = vadd.f32 %v5232, %v5233
    %v5235 = vrot.slane %v5234, 2
    %v5236 = vadd.f32 %v5234, %v5235
    %v5237 = vrot.slane %v5236, 1
    %v5238 = vadd.f32 %v5236, %v5237
    %v5239 = vsel %vm3125, %v5123, 0.0
    %v5240 = vsel %vm3125, %v5124, 0.0
    %v5241 = vadd.f32 %v5239, %v5240
    %v5242 = vrot.slane %v5241, 4
    %v5243 = vadd.f32 %v5241, %v5242
    %v5244 = vrot.slane %v5243, 2
    %v5245 = vadd.f32 %v5243, %v5244
    %v5246 = vrot.slane %v5245, 1
    %v5247 = vadd.f32 %v5245, %v5246
    %v5248 = vsel %vm3125, %v5125, 0.0
    %v5249 = vsel %vm3125, %v5126, 0.0
    %v5250 = vadd.f32 %v5248, %v5249
    %v5251 = vrot.slane %v5250, 4
    %v5252 = vadd.f32 %v5250, %v5251
    %v5253 = vrot.slane %v5252, 2
    %v5254 = vadd.f32 %v5252, %v5253
    %v5255 = vrot.slane %v5254, 1
    %v5256 = vadd.f32 %v5254, %v5255
    %v5257 = vsel %vm3125, %v5127, 0.0
    %v5258 = vsel %vm3125, %v5128, 0.0
    %v5259 = vadd.f32 %v5257, %v5258
    %v5260 = vrot.slane %v5259, 4
    %v5261 = vadd.f32 %v5259, %v5260
    %v5262 = vrot.slane %v5261, 2
    %v5263 = vadd.f32 %v5261, %v5262
    %v5264 = vrot.slane %v5263, 1
    %v5265 = vadd.f32 %v5263, %v5264
    %v5266 = vsel %vm3125, %v5129, 0.0
    %v5267 = vsel %vm3125, %v5130, 0.0
    %v5268 = vadd.f32 %v5266, %v5267
    %v5269 = vrot.slane %v5268, 4
    %v5270 = vadd.f32 %v5268, %v5269
    %v5271 = vrot.slane %v5270, 2
    %v5272 = vadd.f32 %v5270, %v5271
    %v5273 = vrot.slane %v5272, 1
    %v5274 = vadd.f32 %v5272, %v5273
    %v5275 = vlaneseq
    %v5276 = vshrl.u32 %v5275, 7
    %v5277 = vsub.s32 7, %v5276
    %v5278 = vrot.slane %v3119, %v5277
    %v5295 = vsel %vm2903, %v5148, %v5139
    %v5296 = vsel %vm4025, %v5157, %v5295
    %v5297 = vsel %vm4027, %v5166, %v5296
    %v5298 = vsel %vm4029, %v5175, %v5297
    %v5299 = vsel %vm4031, %v5184, %v5298
    %v5300 = vsel %vm4033, %v5193, %v5299
    %v5301 = vsel %vm4035, %v5202, %v5300
    %v5302 = vsel %vm2903, %v5220, %v5211
    %v5303 = vsel %vm4025, %v5229, %v5302
    %v5304 = vsel %vm4027, %v5238, %v5303
    %v5305 = vsel %vm4029, %v5247, %v5304
    %v5306 = vsel %vm4031, %v5256, %v5305
    %v5307 = vsel %vm4033, %v5265, %v5306
    %v5308 = vsel %vm4035, %v5274, %v5307
    %5309 = vrot.lane.b32.xlu0 %v3114, 100
    %v5310 = vpop.permute.xlu0 %5309
    %v5311 = vsel %vm3125, %v5301, 0
    %v5313 = vsel %vm3125, %v5308, 0
    %v5315 = vsel %vm340, %v5310, 0
    %5317 = vmatprep.subr.mxu0 0.0
    %5318 = vmatpush1.msra.mxu0 0.0
    %5319 = vmatprep.subr.mxu0 0.0
    %5320 = vmatpush1.msra.mxu0 0.0
    %5321 = vmatprep.subr.mxu0 0.0
    %5322 = vmatpush1.msra.mxu0 0.0
    %5323 = vmatprep.subr.mxu0 0.0
    %5324 = vmatpush1.msra.mxu0 0.0
    %5325 = vmatprep.subr.mxu0 0.0
    %5326 = vmatpush1.msra.mxu0 0.0
    %5327 = vmatprep.subr.mxu0 0.0
    %5328 = vmatpush1.msra.mxu0 0.0
    %5329 = vmatprep.subr.mxu0 0.0
    %5330 = vmatpush1.msra.mxu0 0.0
    %5331 = vmatprep.subr.mxu0 0.0
    %5332 = vmatpush1.msra.mxu0 0.0
    %5333 = vmatprep.subr.mxu0 0.0
    %5334 = vmatpush1.msra.mxu0 0.0
    %5335 = vmatprep.subr.mxu0 0.0
    %5336 = vmatpush1.msra.mxu0 0.0
    %5337 = vmatprep.subr.mxu0 0.0
    %5338 = vmatpush1.msra.mxu0 0.0
    %5339 = vmatprep.subr.mxu0 0.0
    %5340 = vmatpush1.msra.mxu0 0.0
    %5341 = vmatprep.subr.mxu0 0.0
    %5342 = vmatpush1.msra.mxu0 0.0
    %5343 = vmatprep.subr.mxu0 0.0
    %5344 = vmatpush1.msra.mxu0 0.0
    %5345 = vmatprep.subr.mxu0 0.0
    %5346 = vmatpush1.msra.mxu0 0.0
    %5347 = vmatprep.subr.mxu0 0.0
    %5348 = vmatpush1.msra.mxu0 %v5315
    %5349 = vmatprep.subr.mxu0 0.0
    %5350 = vmatpush2.msra.mxu0 0.0
    %5351 = vmatprep.subr.mxu0 0.0
    %5352 = vmatpush2.msra.mxu0 0.0
    %5353 = vmatprep.subr.mxu0 0.0
    %5354 = vmatpush2.msra.mxu0 0.0
    %5355 = vmatprep.subr.mxu0 0.0
    %5356 = vmatpush2.msra.mxu0 0.0
    %5357 = vmatprep.subr.mxu0 0.0
    %5358 = vmatpush2.msra.mxu0 0.0
    %5359 = vmatprep.subr.mxu0 0.0
    %5360 = vmatpush2.msra.mxu0 0.0
    %5361 = vmatprep.subr.mxu0 0.0
    %5362 = vmatpush2.msra.mxu0 0.0
    %5363 = vmatprep.subr.mxu0 0.0
    %5364 = vmatpush2.msra.mxu0 0.0
    %5365 = vmatprep.subr.mxu0 0.0
    %5366 = vmatpush2.msra.mxu0 0.0
    %5367 = vmatprep.subr.mxu0 0.0
    %5368 = vmatpush2.msra.mxu0 0.0
    %5369 = vmatprep.subr.mxu0 0.0
    %5370 = vmatpush2.msra.mxu0 0.0
    %5371 = vmatprep.subr.mxu0 0.0
    %5372 = vmatpush2.msra.mxu0 0.0
    %5373 = vmatprep.subr.mxu0 0.0
    %5374 = vmatpush2.msra.mxu0 0.0
    %5375 = vmatprep.subr.mxu0 0.0
    %5376 = vmatpush2.msra.mxu0 0.0
    %5377 = vmatprep.subr.mxu0 0.0
    %5378 = vmatpush2.msra.mxu0 0.0
    %5379 = vmatprep.subr.mxu0 0.0
    %5380 = vmatpush2.msra.mxu0 0.0
    %5381 = vmatprep.mubr.f32.mxu0 0.0
    %5382 = vmatmul.mubr.f32.gmra.mxu0 %v5311
    %v5383 = vpop.f32.mrf.mxu0
    %v5384 = vadd.f32 %v5278, %v5383
    %v5385 = vpop.f32.mrf.mxu0
    %5386 = vmatprep.mubr.f32.mxu0 0.0
    %5387 = vmatmul.mubr.f32.gmra.mxu0 %v5313
    %v5388 = vpop.f32.mrf.mxu0
    %v5389 = vadd.f32 %v5278, %v5388
    %v5390 = vpop.f32.mrf.mxu0
    %5391 = vdwg.mxu0
    %v5392 = vadd.f32 %v4166, %v5384
    %v5393 = vadd.f32 %v4167, %v5389
    %v5394 = vsel %vm3125, %v5392, 0.0
    %5395 = vadd.xlane.f32.xlu0 %v5394
    %v5396 = vpop.xlane.xlu0 %5395
    %v5397 = vsel %vm3125, %v5393, 0.0
    %5398 = vadd.xlane.f32.xlu0 %v5397
    %v5399 = vpop.xlane.xlu0 %5398
    %v5400 = vmul.f32 %v5396, %v4135
    %v5401 = vmul.f32 %v5399, %v4135
    %v5402 = vsub.f32 %v5392, %v5400
    %v5403 = vsub.f32 %v5393, %v5401
    %v5404 = vmul.f32 %v5402, %v5402
    %v5405 = vmul.f32 %v5403, %v5403
    %v5406 = vsel %vm3125, %v5404, 0.0
    %5407 = vadd.xlane.f32.xlu0 %v5406
    %v5408 = vpop.xlane.xlu0 %5407
    %v5409 = vsel %vm3125, %v5405, 0.0
    %5410 = vadd.xlane.f32.xlu0 %v5409
    %v5411 = vpop.xlane.xlu0 %5410
    %v5412 = vmul.f32 %v5408, %v4135
    %v5413 = vmul.f32 %v5411, %v4135
    %v5414 = vadd.f32 %v5412, 1e-05
    %v5415 = vadd.f32 %v5413, 1e-05
    %v5416 = vrsqrt.pop %v5414
    %v5417 = vrsqrt.pop %v5415
    %v5418 = vmul.f32 %v5402, %v5416
    %v5419 = vmul.f32 %v5403, %v5417
    %v5420 = vlaneseq
    %v5421 = vshrl.u32 %v5420, 7
    %v5422 = vsub.s32 4, %v5421
    %v5423 = vrot.slane %v3120, %v5422
    %v5424 = vmul.f32 %v5418, %v5423
    %v5425 = vmul.f32 %v5419, %v5423
    %v5426 = vlaneseq
    %v5427 = vshrl.u32 %v5426, 7
    %v5428 = vsub.s32 5, %v5427
    %v5429 = vrot.slane %v3120, %v5428
    %v5430 = vadd.f32 %v5424, %v5429
    %v5431 = vadd.f32 %v5425, %v5429
    %v5432 = vlaneseq
    %v5433 = vshrl.u32 %v5432, 7
    %v5434 = vsub.s32 0, %v5433
    %v5435 = vrot.slane %v3120, %v5434
    %5436 = vrot.lane.b32.xlu0 %v3114, 96
    %v5437 = vpop.permute.xlu0 %5436
    %v5439 = vsel %vm3125, %v5430, 0
    %v5442 = vsel %vm3125, %v5431, 0
    %v5444 = vsel %vm340, %v5437, 0
    %5446 = vmatprep.subr.mxu0 0.0
    %5447 = vmatpush1.msra.mxu0 0.0
    %5448 = vmatprep.subr.mxu0 0.0
    %5449 = vmatpush1.msra.mxu0 0.0
    %5450 = vmatprep.subr.mxu0 0.0
    %5451 = vmatpush1.msra.mxu0 0.0
    %5452 = vmatprep.subr.mxu0 0.0
    %5453 = vmatpush1.msra.mxu0 0.0
    %5454 = vmatprep.subr.mxu0 0.0
    %5455 = vmatpush1.msra.mxu0 0.0
    %5456 = vmatprep.subr.mxu0 0.0
    %5457 = vmatpush1.msra.mxu0 0.0
    %5458 = vmatprep.subr.mxu0 0.0
    %5459 = vmatpush1.msra.mxu0 0.0
    %5460 = vmatprep.subr.mxu0 0.0
    %5461 = vmatpush1.msra.mxu0 0.0
    %5462 = vmatprep.subr.mxu0 0.0
    %5463 = vmatpush1.msra.mxu0 0.0
    %5464 = vmatprep.subr.mxu0 0.0
    %5465 = vmatpush1.msra.mxu0 0.0
    %5466 = vmatprep.subr.mxu0 0.0
    %5467 = vmatpush1.msra.mxu0 0.0
    %5468 = vmatprep.subr.mxu0 0.0
    %5469 = vmatpush1.msra.mxu0 0.0
    %5470 = vmatprep.subr.mxu0 0.0
    %5471 = vmatpush1.msra.mxu0 0.0
    %5472 = vmatprep.subr.mxu0 0.0
    %5473 = vmatpush1.msra.mxu0 0.0
    %5474 = vmatprep.subr.mxu0 0.0
    %5475 = vmatpush1.msra.mxu0 0.0
    %5476 = vmatprep.subr.mxu0 0.0
    %5477 = vmatpush1.msra.mxu0 %v5444
    %5478 = vmatprep.subr.mxu0 0.0
    %5479 = vmatpush2.msra.mxu0 0.0
    %5480 = vmatprep.subr.mxu0 0.0
    %5481 = vmatpush2.msra.mxu0 0.0
    %5482 = vmatprep.subr.mxu0 0.0
    %5483 = vmatpush2.msra.mxu0 0.0
    %5484 = vmatprep.subr.mxu0 0.0
    %5485 = vmatpush2.msra.mxu0 0.0
    %5486 = vmatprep.subr.mxu0 0.0
    %5487 = vmatpush2.msra.mxu0 0.0
    %5488 = vmatprep.subr.mxu0 0.0
    %5489 = vmatpush2.msra.mxu0 0.0
    %5490 = vmatprep.subr.mxu0 0.0
    %5491 = vmatpush2.msra.mxu0 0.0
    %5492 = vmatprep.subr.mxu0 0.0
    %5493 = vmatpush2.msra.mxu0 0.0
    %5494 = vmatprep.subr.mxu0 0.0
    %5495 = vmatpush2.msra.mxu0 0.0
    %5496 = vmatprep.subr.mxu0 0.0
    %5497 = vmatpush2.msra.mxu0 0.0
    %5498 = vmatprep.subr.mxu0 0.0
    %5499 = vmatpush2.msra.mxu0 0.0
    %5500 = vmatprep.subr.mxu0 0.0
    %5501 = vmatpush2.msra.mxu0 0.0
    %5502 = vmatprep.subr.mxu0 0.0
    %5503 = vmatpush2.msra.mxu0 0.0
    %5504 = vmatprep.subr.mxu0 0.0
    %5505 = vmatpush2.msra.mxu0 0.0
    %5506 = vmatprep.subr.mxu0 0.0
    %5507 = vmatpush2.msra.mxu0 0.0
    %5508 = vmatprep.subr.mxu0 0.0
    %5509 = vmatpush2.msra.mxu0 0.0
    %5510 = vmatprep.mubr.f32.mxu0 0.0
    %5511 = vmatmul.mubr.f32.gmra.mxu0 %v5439
    %v5512 = vpop.f32.mrf.mxu0
    %v5513 = vadd.f32 %v5435, %v5512
    %v5514 = vpop.f32.mrf.mxu0
    %5515 = vmatprep.mubr.f32.mxu0 0.0
    %5516 = vmatmul.mubr.f32.gmra.mxu0 %v5442
    %v5517 = vpop.f32.mrf.mxu0
    %v5518 = vadd.f32 %v5435, %v5517
    %v5519 = vpop.f32.mrf.mxu0
    %5520 = vdwg.mxu0
    %v5521 = vmax.f32 %v5513, 0.0
    %v5522 = vmax.f32 %v5518, 0.0
    %v5523 = vlaneseq
    %v5524 = vshrl.u32 %v5523, 7
    %v5525 = vsub.s32 1, %v5524
    %v5526 = vrot.slane %v3120, %v5525
    %v5528 = vsel %vm36, %v5521, 0
    %v5531 = vsel %vm36, %v5522, 0
    %5533 = vmatprep.subr.mxu0 0.0
    %5534 = vmatpush1.msra.mxu0 0.0
    %5535 = vmatprep.subr.mxu0 0.0
    %5536 = vmatpush1.msra.mxu0 0.0
    %5537 = vmatprep.subr.mxu0 0.0
    %5538 = vmatpush1.msra.mxu0 0.0
    %5539 = vmatprep.subr.mxu0 0.0
    %5540 = vmatpush1.msra.mxu0 0.0
    %5541 = vmatprep.subr.mxu0 0.0
    %5542 = vmatpush1.msra.mxu0 0.0
    %5543 = vmatprep.subr.mxu0 0.0
    %5544 = vmatpush1.msra.mxu0 0.0
    %5545 = vmatprep.subr.mxu0 0.0
    %5546 = vmatpush1.msra.mxu0 0.0
    %5547 = vmatprep.subr.mxu0 0.0
    %5548 = vmatpush1.msra.mxu0 0.0
    %5549 = vmatprep.subr.mxu0 0.0
    %5550 = vmatpush1.msra.mxu0 0.0
    %5551 = vmatprep.subr.mxu0 0.0
    %5552 = vmatpush1.msra.mxu0 0.0
    %5553 = vmatprep.subr.mxu0 0.0
    %5554 = vmatpush1.msra.mxu0 0.0
    %5555 = vmatprep.subr.mxu0 0.0
    %5556 = vmatpush1.msra.mxu0 0.0
    %5557 = vmatprep.subr.mxu0 0.0
    %5558 = vmatpush1.msra.mxu0 %v3118
    %5559 = vmatprep.subr.mxu0 0.0
    %5560 = vmatpush1.msra.mxu0 %v3117
    %5561 = vmatprep.subr.mxu0 0.0
    %5562 = vmatpush1.msra.mxu0 %v3116
    %5563 = vmatprep.subr.mxu0 0.0
    %5564 = vmatpush1.msra.mxu0 %v3115
    %5565 = vmatprep.subr.mxu0 0.0
    %5566 = vmatpush2.msra.mxu0 0.0
    %5567 = vmatprep.subr.mxu0 0.0
    %5568 = vmatpush2.msra.mxu0 0.0
    %5569 = vmatprep.subr.mxu0 0.0
    %5570 = vmatpush2.msra.mxu0 0.0
    %5571 = vmatprep.subr.mxu0 0.0
    %5572 = vmatpush2.msra.mxu0 0.0
    %5573 = vmatprep.subr.mxu0 0.0
    %5574 = vmatpush2.msra.mxu0 0.0
    %5575 = vmatprep.subr.mxu0 0.0
    %5576 = vmatpush2.msra.mxu0 0.0
    %5577 = vmatprep.subr.mxu0 0.0
    %5578 = vmatpush2.msra.mxu0 0.0
    %5579 = vmatprep.subr.mxu0 0.0
    %5580 = vmatpush2.msra.mxu0 0.0
    %5581 = vmatprep.subr.mxu0 0.0
    %5582 = vmatpush2.msra.mxu0 0.0
    %5583 = vmatprep.subr.mxu0 0.0
    %5584 = vmatpush2.msra.mxu0 0.0
    %5585 = vmatprep.subr.mxu0 0.0
    %5586 = vmatpush2.msra.mxu0 0.0
    %5587 = vmatprep.subr.mxu0 0.0
    %5588 = vmatpush2.msra.mxu0 0.0
    %5589 = vmatprep.subr.mxu0 0.0
    %5590 = vmatpush2.msra.mxu0 0.0
    %5591 = vmatprep.subr.mxu0 0.0
    %5592 = vmatpush2.msra.mxu0 0.0
    %5593 = vmatprep.subr.mxu0 0.0
    %5594 = vmatpush2.msra.mxu0 0.0
    %5595 = vmatprep.subr.mxu0 0.0
    %5596 = vmatpush2.msra.mxu0 0.0
    %5597 = vmatprep.mubr.f32.mxu0 0.0
    %5598 = vmatmul.mubr.f32.gmra.mxu0 %v5528
    %v5599 = vpop.f32.mrf.mxu0
    %v5600 = vadd.f32 %v5526, %v5599
    %v5601 = vpop.f32.mrf.mxu0
    %5602 = vmatprep.mubr.f32.mxu0 0.0
    %5603 = vmatmul.mubr.f32.gmra.mxu0 %v5531
    %v5604 = vpop.f32.mrf.mxu0
    %v5605 = vadd.f32 %v5526, %v5604
    %v5606 = vpop.f32.mrf.mxu0
    %5607 = vdwg.mxu0
    %v5608 = vadd.f32 %v5430, %v5600
    %v5609 = vadd.f32 %v5431, %v5605
    %v5610 = vsel %vm3125, %v5608, 0.0
    %5611 = vadd.xlane.f32.xlu0 %v5610
    %v5612 = vpop.xlane.xlu0 %5611
    %v5613 = vsel %vm3125, %v5609, 0.0
    %5614 = vadd.xlane.f32.xlu0 %v5613
    %v5615 = vpop.xlane.xlu0 %5614
    %v5616 = vmul.f32 %v5612, %v4135
    %v5617 = vmul.f32 %v5615, %v4135
    %v5618 = vsub.f32 %v5608, %v5616
    %v5619 = vsub.f32 %v5609, %v5617
    %v5620 = vmul.f32 %v5618, %v5618
    %v5621 = vmul.f32 %v5619, %v5619
    %v5622 = vsel %vm3125, %v5620, 0.0
    %5623 = vadd.xlane.f32.xlu0 %v5622
    %v5624 = vpop.xlane.xlu0 %5623
    %v5625 = vsel %vm3125, %v5621, 0.0
    %5626 = vadd.xlane.f32.xlu0 %v5625
    %v5627 = vpop.xlane.xlu0 %5626
    %v5628 = vmul.f32 %v5624, %v4135
    %v5629 = vmul.f32 %v5627, %v4135
    %v5630 = vadd.f32 %v5628, 1e-05
    %v5631 = vadd.f32 %v5629, 1e-05
    %v5632 = vrsqrt.pop %v5630
    %v5633 = vrsqrt.pop %v5631
    %v5634 = vmul.f32 %v5618, %v5632
    %v5635 = vmul.f32 %v5619, %v5633
    %v5636 = vlaneseq
    %v5637 = vshrl.u32 %v5636, 7
    %v5638 = vsub.s32 6, %v5637
    %v5639 = vrot.slane %v3120, %v5638
    %v5640 = vmul.f32 %v5634, %v5639
    %v5641 = vmul.f32 %v5635, %v5639
    %v5642 = vlaneseq
    %v5643 = vshrl.u32 %v5642, 7
    %v5644 = vsub.s32 7, %v5643
    %v5645 = vrot.slane %v3120, %v5644
    %v5646 = vadd.f32 %v5640, %v5645
    %v5647 = vadd.f32 %v5641, %v5645
    %5648 = vst.msk [vmem:[%s6] sm:$0xff] %vm3125, %v5646
    %5649 = vst.msk [vmem:[%s6 + $0x8] sm:$0xff] %vm3125, %v5647
    // Predicated region
    $region22: #{pnd_model_forward.1} parent=1 // pred_check
      _
    $region23: #{pnd_model_forward.1} parent=1 // pred_check_branch
      %5651 = sbr.rel (0) target = $region25
    $region24: #{pnd_model_forward.1} parent=1 // pred_region
      %s5653 = ssub.s32 32, 32
      %5654 = vsyncadd [#allocation3], %s5653
      %s5655 = sshll.u32 [#allocation2], 4
      %s5656 = int_to_ptr.vmem [resolvable:$true] %s5655
      %5661 = dma.vmem_to_hbm [thread:$0]  %s5656, 32, %s5, [#allocation3], 16, 16, 1
    $region25: #{pnd_model_forward.1} parent=1 // pred_fallthru
      _
    // Predicated region
    $region26: #{pnd_model_forward.1} parent=1 // pred_check
      _
    $region27: #{pnd_model_forward.1} parent=1 // pred_check_branch
      %5663 = sbr.rel (0) target = $region29
    $region28: #{pnd_model_forward.1} parent=1 // pred_region
      _
    $region29: #{pnd_model_forward.1} parent=1 // pred_fallthru
      _
    // Predicated region
    $region30: #{pnd_model_forward.1} parent=1 // pred_check
      _
    $region31: #{pnd_model_forward.1} parent=1 // pred_check_branch
      %5665 = sbr.rel (0) target = $region33
    $region32: #{pnd_model_forward.1} parent=1 // pred_region
      %5666 = dma.done [#allocation3], 32
    $region33: #{pnd_model_forward.1} parent=1 // pred_fallthru
      _
    // Predicated region
    $region34: #{pnd_model_forward.1} parent=1 // pred_check
      _
    $region35: #{pnd_model_forward.1} parent=1 // pred_check_branch
      %5668 = sbr.rel (0) target = $region37
    $region36: #{pnd_model_forward.1} parent=1 // pred_region
      _
    $region37: #{pnd_model_forward.1} parent=1 // pred_fallthru
      _
    %5669 = vsyncpa [#allocation3], 1

</llo_original>
